<compile_context>
chip_gen: v7x
topology: tpu7x:2x2x1
jax: 0.10.0
libtpu: 0.0.40
codegen_flags: <defaults>
</compile_context>

<pallas_src>
import jax
import jax.numpy as jnp
from jax import lax
from jax.experimental import pallas as pl
from jax.experimental.pallas import tpu as pltpu

LOOK_BACK = 24
LOOK_FORWARD = 6


# --------------------------------------------------------------------------
# Fused kernel: LSTM recurrence + final Linear, one invocation.
# --------------------------------------------------------------------------
def lstm_linear_kernel(x_ref, wih_ref, whh_ref, b_ref, wlin_ref, blin_ref,
                       out_ref, gx_scr, hflat_scr):
    B, T, D = x_ref.shape
    H = whh_ref.shape[0]

    # ---- Hoisted input projection (off the serial path, done once) ----
    # gx[b, t, :] = x[b, t, :] @ W_ih + (b_ih + b_hh)
    xb = x_ref[...].reshape(B * T, D)              # lanes (D) unchanged
    gx = jnp.dot(xb, wih_ref[...],
                 preferred_element_type=jnp.float32) + b_ref[...]
    gx_scr[...] = gx.reshape(B, T, 4 * H)

    # ---- Sequential recurrence: only h @ W_hh per timestep ----
    whh = whh_ref[...]
    h = jnp.zeros((B, H), jnp.float32)
    c = jnp.zeros((B, H), jnp.float32)
    for t in range(T):                             # static, fully unrolled
        gates = gx_scr[:, t, :] + jnp.dot(h, whh,
                                          preferred_element_type=jnp.float32)
        # PyTorch gate order: i, f, g, o
        i = jax.nn.sigmoid(gates[:, 0 * H:1 * H])
        f = jax.nn.sigmoid(gates[:, 1 * H:2 * H])
        g = jnp.tanh(gates[:, 2 * H:3 * H])
        o = jax.nn.sigmoid(gates[:, 3 * H:4 * H])
        c = f * c + i * g
        h = o * jnp.tanh(c)
        # Lane-dense resident (B, T*H) buffer; layout matches
        # torch `output.reshape(B, -1)` (element [b, t*H + k] = h_t[b, k]).
        hflat_scr[:, t * H:(t + 1) * H] = h

    # ---- Fused final Linear: (B, T*H) @ (T*H, F*O) + bias ----
    out_ref[...] = (jnp.dot(hflat_scr[...], wlin_ref[...],
                            preferred_element_type=jnp.float32)
                    + blin_ref[...])


@jax.jit
def lstm_model_forward(x, params):
    """x: (B, T=LOOK_BACK, D) batch-first float32.
    Returns (B, LOOK_FORWARD, output_dim)."""
    B, T, D = x.shape
    H = params["w_hh_t"].shape[0]
    FO = params["w_lin_t"].shape[1]
    output_dim = FO // LOOK_FORWARD

    x = x.astype(jnp.float32)

    out_flat = pl.pallas_call(
        lstm_linear_kernel,
        out_shape=jax.ShapeDtypeStruct((B, FO), jnp.float32),
        grid_spec=pltpu.PrefetchScalarGridSpec(
            num_scalar_prefetch=0,
            grid=(1,),
            in_specs=[
                pl.BlockSpec((B, T, D), lambda i: (0, 0, 0)),     # x (batch-first)
                pl.BlockSpec((D, 4 * H), lambda i: (0, 0)),       # W_ih^T
                pl.BlockSpec((H, 4 * H), lambda i: (0, 0)),       # W_hh^T
                pl.BlockSpec((1, 4 * H), lambda i: (0, 0)),       # b_ih + b_hh
                pl.BlockSpec((T * H, FO), lambda i: (0, 0)),      # W_lin^T
                pl.BlockSpec((1, FO), lambda i: (0, 0)),          # b_lin
            ],
            out_specs=pl.BlockSpec((B, FO), lambda i: (0, 0)),
            scratch_shapes=[
                pltpu.VMEM((B, T, 4 * H), jnp.float32),   # hoisted x@W_ih + b
                pltpu.VMEM((B, T * H), jnp.float32),      # flattened h_t's
            ],
        ),
        compiler_params=pltpu.CompilerParams(
            dimension_semantics=("arbitrary",)),
    )(x, params["w_ih_t"], params["w_hh_t"], params["b"],
      params["w_lin_t"], params["b_lin"])

    return out_flat.reshape(B, LOOK_FORWARD, output_dim)


# --------------------------------------------------------------------------
# Pure-JAX reference (for correctness check).
# --------------------------------------------------------------------------
def reference_forward(x, params):
    B = x.shape[0]
    H = params["w_hh_t"].shape[0]

    def step(carry, x_t):
        h, c = carry
        gates = x_t @ params["w_ih_t"] + h @ params["w_hh_t"] + params["b"][0]
        i, f, g, o = jnp.split(gates, 4, axis=-1)
        i = jax.nn.sigmoid(i)
        f = jax.nn.sigmoid(f)
        g = jnp.tanh(g)
        o = jax.nn.sigmoid(o)
        c = f * c + i * g
        h = o * jnp.tanh(c)
        return (h, c), h

    x_tm = jnp.transpose(x, (1, 0, 2))
    (_, _), hs = lax.scan(step,
                          (jnp.zeros((B, H), jnp.float32),
                           jnp.zeros((B, H), jnp.float32)),
                          x_tm)
    h_flat = jnp.transpose(hs, (1, 0, 2)).reshape(B, -1)
    out = h_flat @ params["w_lin_t"] + params["b_lin"][0]
    return out.reshape(B, LOOK_FORWARD, -1)


# --------------------------------------------------------------------------
# Deterministic parameter init (shapes follow nn.LSTM / nn.Linear).
# --------------------------------------------------------------------------
def init_params(key, input_dim, hidden_dim, output_dim):
    ks = jax.random.split(key, 6)
    k_lstm = 1.0 / jnp.sqrt(hidden_dim)
    k_lin = 1.0 / jnp.sqrt(LOOK_BACK * hidden_dim)

    # PyTorch stores weight_ih as (4H, D); we keep the transposed (D, 4H).
    w_ih_t = jax.random.uniform(ks[0], (input_dim, 4 * hidden_dim),
                                jnp.float32, -k_lstm, k_lstm)
    w_hh_t = jax.random.uniform(ks[1], (hidden_dim, 4 * hidden_dim),
                                jnp.float32, -k_lstm, k_lstm)
    b_ih = jax.random.uniform(ks[2], (4 * hidden_dim,), jnp.float32,
                              -k_lstm, k_lstm)
    b_hh = jax.random.uniform(ks[3], (4 * hidden_dim,), jnp.float32,
                              -k_lstm, k_lstm)
    # Linear: torch (F*O, T*H); we keep the transposed (T*H, F*O).
    w_lin_t = jax.random.uniform(
        ks[4], (LOOK_BACK * hidden_dim, LOOK_FORWARD * output_dim),
        jnp.float32, -k_lin, k_lin)
    b_lin = jax.random.uniform(ks[5], (LOOK_FORWARD * output_dim,),
                               jnp.float32, -k_lin, k_lin)

    return {
        "w_ih_t": w_ih_t,
        "w_hh_t": w_hh_t,
        "b": (b_ih + b_hh).reshape(1, 4 * hidden_dim),
        "w_lin_t": w_lin_t,
        "b_lin": b_lin.reshape(1, LOOK_FORWARD * output_dim),
    }


if __name__ == "__main__":
    batch = 2
    input_dim = 4
    hidden_dim = 32
    output_dim = 3

    key = jax.random.PRNGKey(0)
    k_x, k_p = jax.random.split(key)
    x = jax.random.normal(k_x, (batch, LOOK_BACK, input_dim), jnp.float32)
    params = init_params(k_p, input_dim, hidden_dim, output_dim)

    out = jax.block_until_ready(lstm_model_forward(x, params))
    ref = jax.block_until_ready(reference_forward(x, params))

    assert out.shape == (batch, LOOK_FORWARD, output_dim), out.shape
    assert jnp.allclose(out, ref, atol=1e-5, rtol=1e-5), (
        float(jnp.max(jnp.abs(out - ref))))
    print("KERNEL_OK")
</pallas_src>

<mosaic_0001>
module attributes {stable_mosaic.version = 11 : i64} {
  func.func @lstm_linear_kernel(%arg0: i32, %arg1: memref<2x24x4xf32, #tpu.memory_space<vmem>>, %arg2: memref<4x128xf32, #tpu.memory_space<vmem>>, %arg3: memref<32x128xf32, #tpu.memory_space<vmem>>, %arg4: memref<1x128xf32, #tpu.memory_space<vmem>>, %arg5: memref<768x18xf32, #tpu.memory_space<vmem>>, %arg6: memref<1x18xf32, #tpu.memory_space<vmem>>, %arg7: memref<2x18xf32, #tpu.memory_space<vmem>>, %arg8: memref<2x24x128xf32, #tpu.memory_space<vmem>>, %arg9: memref<2x768xf32, #tpu.memory_space<vmem>>) attributes {dimension_semantics = [#tpu.dimension_semantics<arbitrary>], iteration_bounds = array<i64: 1>, scalar_prefetch = 0 : i64, scratch_operands = 2 : i64, tpu.core_type = #tpu.core_type<tc>, window_params = [{pipeline_mode = #tpu.pipeline_mode<synchronous>, transform_indices = @transform_0, window_bounds = array<i64: 2, 24, 4>}, {pipeline_mode = #tpu.pipeline_mode<synchronous>, transform_indices = @transform_1, window_bounds = array<i64: 4, 128>}, {pipeline_mode = #tpu.pipeline_mode<synchronous>, transform_indices = @transform_2, window_bounds = array<i64: 32, 128>}, {pipeline_mode = #tpu.pipeline_mode<synchronous>, transform_indices = @transform_3, window_bounds = array<i64: 1, 128>}, {pipeline_mode = #tpu.pipeline_mode<synchronous>, transform_indices = @transform_4, window_bounds = array<i64: 768, 18>}, {pipeline_mode = #tpu.pipeline_mode<synchronous>, transform_indices = @transform_5, window_bounds = array<i64: 1, 18>}, {pipeline_mode = #tpu.pipeline_mode<synchronous>, transform_indices = @transform_6, window_bounds = array<i64: 2, 18>}]} {
    %c0 = arith.constant 0 : index
    %c0_0 = arith.constant 0 : index
    %c0_1 = arith.constant 0 : index
    %0 = vector.load %arg1[%c0, %c0_0, %c0_1] : memref<2x24x4xf32, #tpu.memory_space<vmem>>, vector<2x24x4xf32>
    %1 = vector.shape_cast %0 : vector<2x24x4xf32> to vector<48x4xf32>
    %c0_2 = arith.constant 0 : index
    %c0_3 = arith.constant 0 : index
    %2 = vector.load %arg2[%c0_2, %c0_3] : memref<4x128xf32, #tpu.memory_space<vmem>>, vector<4x128xf32>
    %cst = arith.constant dense<0.000000e+00> : vector<48x128xf32>
    %3 = tpu.matmul %1, %2, %cst {dimension_numbers = #tpu.dot_dimension_numbers<[1], [0], [0], [1], [0, 0, 1, 1], [], []>} : vector<48x4xf32>, vector<4x128xf32>, vector<48x128xf32> -> vector<48x128xf32>
    %c0_4 = arith.constant 0 : index
    %c0_5 = arith.constant 0 : index
    %4 = vector.load %arg4[%c0_4, %c0_5] : memref<1x128xf32, #tpu.memory_space<vmem>>, vector<1x128xf32>
    %5 = vector.broadcast %4 : vector<1x128xf32> to vector<48x128xf32>
    %6 = arith.addf %3, %5 : vector<48x128xf32>
    %7 = vector.shape_cast %6 : vector<48x128xf32> to vector<2x24x128xf32>
    %c0_6 = arith.constant 0 : index
    %c0_7 = arith.constant 0 : index
    %c0_8 = arith.constant 0 : index
    %8 = vector.load %arg8[%c0_6, %c0_7, %c0_8] : memref<2x24x128xf32, #tpu.memory_space<vmem>>, vector<2x24x128xf32>
    tpu.vector_store %arg8[%c0_6, %c0_7, %c0_8], %7 {strides = array<i32>} : memref<2x24x128xf32, #tpu.memory_space<vmem>>, vector<2x24x128xf32>,
    %c0_9 = arith.constant 0 : index
    %c0_10 = arith.constant 0 : index
    %9 = vector.load %arg3[%c0_9, %c0_10] : memref<32x128xf32, #tpu.memory_space<vmem>>, vector<32x128xf32>
    %cst_11 = arith.constant 0.000000e+00 : f32
    %10 = vector.broadcast %cst_11 : f32 to vector<2x32xf32>
    %cst_12 = arith.constant 0.000000e+00 : f32
    %11 = vector.broadcast %cst_12 : f32 to vector<2x32xf32>
    %c0_13 = arith.constant 0 : index
    %c0_14 = arith.constant 0 : index
    %c0_15 = arith.constant 0 : index
    %12 = vector.load %arg8[%c0_13, %c0_14, %c0_15] : memref<2x24x128xf32, #tpu.memory_space<vmem>>, vector<2x1x128xf32>
    %13 = vector.shape_cast %12 : vector<2x1x128xf32> to vector<2x128xf32>
    %cst_16 = arith.constant dense<0.000000e+00> : vector<2x128xf32>
    %14 = tpu.matmul %10, %9, %cst_16 {dimension_numbers = #tpu.dot_dimension_numbers<[1], [0], [0], [1], [0, 0, 1, 1], [], []>} : vector<2x32xf32>, vector<32x128xf32>, vector<2x128xf32> -> vector<2x128xf32>
    %15 = arith.addf %13, %14 : vector<2x128xf32>
    %16 = vector.extract_strided_slice %15 {offsets = [0, 0], sizes = [2, 32], strides = [1, 1]} : vector<2x128xf32> to vector<2x32xf32>
    %17 = arith.negf %16 : vector<2x32xf32>
    %18 = math.exp %17 : vector<2x32xf32>
    %cst_17 = arith.constant 1.000000e+00 : f32
    %19 = vector.broadcast %cst_17 : f32 to vector<2x32xf32>
    %20 = arith.addf %19, %18 : vector<2x32xf32>
    %21 = arith.divf %19, %20 : vector<2x32xf32>
    %22 = vector.extract_strided_slice %15 {offsets = [0, 32], sizes = [2, 32], strides = [1, 1]} : vector<2x128xf32> to vector<2x32xf32>
    %23 = arith.negf %22 : vector<2x32xf32>
    %24 = math.exp %23 : vector<2x32xf32>
    %cst_18 = arith.constant 1.000000e+00 : f32
    %25 = vector.broadcast %cst_18 : f32 to vector<2x32xf32>
    %26 = arith.addf %25, %24 : vector<2x32xf32>
    %27 = arith.divf %25, %26 : vector<2x32xf32>
    %28 = vector.extract_strided_slice %15 {offsets = [0, 64], sizes = [2, 32], strides = [1, 1]} : vector<2x128xf32> to vector<2x32xf32>
    %29 = math.tanh %28 : vector<2x32xf32>
    %30 = vector.extract_strided_slice %15 {offsets = [0, 96], sizes = [2, 32], strides = [1, 1]} : vector<2x128xf32> to vector<2x32xf32>
    %31 = arith.negf %30 : vector<2x32xf32>
    %32 = math.exp %31 : vector<2x32xf32>
    %cst_19 = arith.constant 1.000000e+00 : f32
    %33 = vector.broadcast %cst_19 : f32 to vector<2x32xf32>
    %34 = arith.addf %33, %32 : vector<2x32xf32>
    %35 = arith.divf %33, %34 : vector<2x32xf32>
    %36 = arith.mulf %27, %11 : vector<2x32xf32>
    %37 = arith.mulf %21, %29 : vector<2x32xf32>
    %38 = arith.addf %36, %37 : vector<2x32xf32>
    %39 = math.tanh %38 : vector<2x32xf32>
    %40 = arith.mulf %35, %39 : vector<2x32xf32>
    %c0_20 = arith.constant 0 : index
    %c0_21 = arith.constant 0 : index
    %41 = vector.load %arg9[%c0_20, %c0_21] : memref<2x768xf32, #tpu.memory_space<vmem>>, vector<2x32xf32>
    tpu.vector_store %arg9[%c0_20, %c0_21], %40 {strides = array<i32>} : memref<2x768xf32, #tpu.memory_space<vmem>>, vector<2x32xf32>,
    %c0_22 = arith.constant 0 : index
    %c1 = arith.constant 1 : index
    %c0_23 = arith.constant 0 : index
    %42 = vector.load %arg8[%c0_22, %c1, %c0_23] : memref<2x24x128xf32, #tpu.memory_space<vmem>>, vector<2x1x128xf32>
    %43 = vector.shape_cast %42 : vector<2x1x128xf32> to vector<2x128xf32>
    %cst_24 = arith.constant dense<0.000000e+00> : vector<2x128xf32>
    %44 = tpu.matmul %40, %9, %cst_24 {dimension_numbers = #tpu.dot_dimension_numbers<[1], [0], [0], [1], [0, 0, 1, 1], [], []>} : vector<2x32xf32>, vector<32x128xf32>, vector<2x128xf32> -> vector<2x128xf32>
    %45 = arith.addf %43, %44 : vector<2x128xf32>
    %46 = vector.extract_strided_slice %45 {offsets = [0, 0], sizes = [2, 32], strides = [1, 1]} : vector<2x128xf32> to vector<2x32xf32>
    %47 = arith.negf %46 : vector<2x32xf32>
    %48 = math.exp %47 : vector<2x32xf32>
    %cst_25 = arith.constant 1.000000e+00 : f32
    %49 = vector.broadcast %cst_25 : f32 to vector<2x32xf32>
    %50 = arith.addf %49, %48 : vector<2x32xf32>
    %51 = arith.divf %49, %50 : vector<2x32xf32>
    %52 = vector.extract_strided_slice %45 {offsets = [0, 32], sizes = [2, 32], strides = [1, 1]} : vector<2x128xf32> to vector<2x32xf32>
    %53 = arith.negf %52 : vector<2x32xf32>
    %54 = math.exp %53 : vector<2x32xf32>
    %cst_26 = arith.constant 1.000000e+00 : f32
    %55 = vector.broadcast %cst_26 : f32 to vector<2x32xf32>
    %56 = arith.addf %55, %54 : vector<2x32xf32>
    %57 = arith.divf %55, %56 : vector<2x32xf32>
    %58 = vector.extract_strided_slice %45 {offsets = [0, 64], sizes = [2, 32], strides = [1, 1]} : vector<2x128xf32> to vector<2x32xf32>
    %59 = math.tanh %58 : vector<2x32xf32>
    %60 = vector.extract_strided_slice %45 {offsets = [0, 96], sizes = [2, 32], strides = [1, 1]} : vector<2x128xf32> to vector<2x32xf32>
    %61 = arith.negf %60 : vector<2x32xf32>
    %62 = math.exp %61 : vector<2x32xf32>
    %cst_27 = arith.constant 1.000000e+00 : f32
    %63 = vector.broadcast %cst_27 : f32 to vector<2x32xf32>
    %64 = arith.addf %63, %62 : vector<2x32xf32>
    %65 = arith.divf %63, %64 : vector<2x32xf32>
    %66 = arith.mulf %57, %38 : vector<2x32xf32>
    %67 = arith.mulf %51, %59 : vector<2x32xf32>
    %68 = arith.addf %66, %67 : vector<2x32xf32>
    %69 = math.tanh %68 : vector<2x32xf32>
    %70 = arith.mulf %65, %69 : vector<2x32xf32>
    %c0_28 = arith.constant 0 : index
    %c32 = arith.constant 32 : index
    %71 = vector.load %arg9[%c0_28, %c32] : memref<2x768xf32, #tpu.memory_space<vmem>>, vector<2x32xf32>
    tpu.vector_store %arg9[%c0_28, %c32], %70 {strides = array<i32>} : memref<2x768xf32, #tpu.memory_space<vmem>>, vector<2x32xf32>,
    %c0_29 = arith.constant 0 : index
    %c2 = arith.constant 2 : index
    %c0_30 = arith.constant 0 : index
    %72 = vector.load %arg8[%c0_29, %c2, %c0_30] : memref<2x24x128xf32, #tpu.memory_space<vmem>>, vector<2x1x128xf32>
    %73 = vector.shape_cast %72 : vector<2x1x128xf32> to vector<2x128xf32>
    %cst_31 = arith.constant dense<0.000000e+00> : vector<2x128xf32>
    %74 = tpu.matmul %70, %9, %cst_31 {dimension_numbers = #tpu.dot_dimension_numbers<[1], [0], [0], [1], [0, 0, 1, 1], [], []>} : vector<2x32xf32>, vector<32x128xf32>, vector<2x128xf32> -> vector<2x128xf32>
    %75 = arith.addf %73, %74 : vector<2x128xf32>
    %76 = vector.extract_strided_slice %75 {offsets = [0, 0], sizes = [2, 32], strides = [1, 1]} : vector<2x128xf32> to vector<2x32xf32>
    %77 = arith.negf %76 : vector<2x32xf32>
    %78 = math.exp %77 : vector<2x32xf32>
    %cst_32 = arith.constant 1.000000e+00 : f32
    %79 = vector.broadcast %cst_32 : f32 to vector<2x32xf32>
    %80 = arith.addf %79, %78 : vector<2x32xf32>
    %81 = arith.divf %79, %80 : vector<2x32xf32>
    %82 = vector.extract_strided_slice %75 {offsets = [0, 32], sizes = [2, 32], strides = [1, 1]} : vector<2x128xf32> to vector<2x32xf32>
    %83 = arith.negf %82 : vector<2x32xf32>
    %84 = math.exp %83 : vector<2x32xf32>
    %cst_33 = arith.constant 1.000000e+00 : f32
    %85 = vector.broadcast %cst_33 : f32 to vector<2x32xf32>
    %86 = arith.addf %85, %84 : vector<2x32xf32>
    %87 = arith.divf %85, %86 : vector<2x32xf32>
    %88 = vector.extract_strided_slice %75 {offsets = [0, 64], sizes = [2, 32], strides = [1, 1]} : vector<2x128xf32> to vector<2x32xf32>
    %89 = math.tanh %88 : vector<2x32xf32>
    %90 = vector.extract_strided_slice %75 {offsets = [0, 96], sizes = [2, 32], strides = [1, 1]} : vector<2x128xf32> to vector<2x32xf32>
    %91 = arith.negf %90 : vector<2x32xf32>
    %92 = math.exp %91 : vector<2x32xf32>
    %cst_34 = arith.constant 1.000000e+00 : f32
    %93 = vector.broadcast %cst_34 : f32 to vector<2x32xf32>
    %94 = arith.addf %93, %92 : vector<2x32xf32>
    %95 = arith.divf %93, %94 : vector<2x32xf32>
    %96 = arith.mulf %87, %68 : vector<2x32xf32>
    %97 = arith.mulf %81, %89 : vector<2x32xf32>
    %98 = arith.addf %96, %97 : vector<2x32xf32>
    %99 = math.tanh %98 : vector<2x32xf32>
    %100 = arith.mulf %95, %99 : vector<2x32xf32>
    %c0_35 = arith.constant 0 : index
    %c64 = arith.constant 64 : index
    %101 = vector.load %arg9[%c0_35, %c64] : memref<2x768xf32, #tpu.memory_space<vmem>>, vector<2x32xf32>
    tpu.vector_store %arg9[%c0_35, %c64], %100 {strides = array<i32>} : memref<2x768xf32, #tpu.memory_space<vmem>>, vector<2x32xf32>,
    %c0_36 = arith.constant 0 : index
    %c3 = arith.constant 3 : index
    %c0_37 = arith.constant 0 : index
    %102 = vector.load %arg8[%c0_36, %c3, %c0_37] : memref<2x24x128xf32, #tpu.memory_space<vmem>>, vector<2x1x128xf32>
    %103 = vector.shape_cast %102 : vector<2x1x128xf32> to vector<2x128xf32>
    %cst_38 = arith.constant dense<0.000000e+00> : vector<2x128xf32>
    %104 = tpu.matmul %100, %9, %cst_38 {dimension_numbers = #tpu.dot_dimension_numbers<[1], [0], [0], [1], [0, 0, 1, 1], [], []>} : vector<2x32xf32>, vector<32x128xf32>, vector<2x128xf32> -> vector<2x128xf32>
    %105 = arith.addf %103, %104 : vector<2x128xf32>
    %106 = vector.extract_strided_slice %105 {offsets = [0, 0], sizes = [2, 32], strides = [1, 1]} : vector<2x128xf32> to vector<2x32xf32>
    %107 = arith.negf %106 : vector<2x32xf32>
    %108 = math.exp %107 : vector<2x32xf32>
    %cst_39 = arith.constant 1.000000e+00 : f32
    %109 = vector.broadcast %cst_39 : f32 to vector<2x32xf32>
    %110 = arith.addf %109, %108 : vector<2x32xf32>
    %111 = arith.divf %109, %110 : vector<2x32xf32>
    %112 = vector.extract_strided_slice %105 {offsets = [0, 32], sizes = [2, 32], strides = [1, 1]} : vector<2x128xf32> to vector<2x32xf32>
    %113 = arith.negf %112 : vector<2x32xf32>
    %114 = math.exp %113 : vector<2x32xf32>
    %cst_40 = arith.constant 1.000000e+00 : f32
    %115 = vector.broadcast %cst_40 : f32 to vector<2x32xf32>
    %116 = arith.addf %115, %114 : vector<2x32xf32>
    %117 = arith.divf %115, %116 : vector<2x32xf32>
    %118 = vector.extract_strided_slice %105 {offsets = [0, 64], sizes = [2, 32], strides = [1, 1]} : vector<2x128xf32> to vector<2x32xf32>
    %119 = math.tanh %118 : vector<2x32xf32>
    %120 = vector.extract_strided_slice %105 {offsets = [0, 96], sizes = [2, 32], strides = [1, 1]} : vector<2x128xf32> to vector<2x32xf32>
    %121 = arith.negf %120 : vector<2x32xf32>
    %122 = math.exp %121 : vector<2x32xf32>
    %cst_41 = arith.constant 1.000000e+00 : f32
    %123 = vector.broadcast %cst_41 : f32 to vector<2x32xf32>
    %124 = arith.addf %123, %122 : vector<2x32xf32>
    %125 = arith.divf %123, %124 : vector<2x32xf32>
    %126 = arith.mulf %117, %98 : vector<2x32xf32>
    %127 = arith.mulf %111, %119 : vector<2x32xf32>
    %128 = arith.addf %126, %127 : vector<2x32xf32>
    %129 = math.tanh %128 : vector<2x32xf32>
    %130 = arith.mulf %125, %129 : vector<2x32xf32>
    %c0_42 = arith.constant 0 : index
    %c96 = arith.constant 96 : index
    %131 = vector.load %arg9[%c0_42, %c96] : memref<2x768xf32, #tpu.memory_space<vmem>>, vector<2x32xf32>
    tpu.vector_store %arg9[%c0_42, %c96], %130 {strides = array<i32>} : memref<2x768xf32, #tpu.memory_space<vmem>>, vector<2x32xf32>,
    %c0_43 = arith.constant 0 : index
    %c4 = arith.constant 4 : index
    %c0_44 = arith.constant 0 : index
    %132 = vector.load %arg8[%c0_43, %c4, %c0_44] : memref<2x24x128xf32, #tpu.memory_space<vmem>>, vector<2x1x128xf32>
    %133 = vector.shape_cast %132 : vector<2x1x128xf32> to vector<2x128xf32>
    %cst_45 = arith.constant dense<0.000000e+00> : vector<2x128xf32>
    %134 = tpu.matmul %130, %9, %cst_45 {dimension_numbers = #tpu.dot_dimension_numbers<[1], [0], [0], [1], [0, 0, 1, 1], [], []>} : vector<2x32xf32>, vector<32x128xf32>, vector<2x128xf32> -> vector<2x128xf32>
    %135 = arith.addf %133, %134 : vector<2x128xf32>
    %136 = vector.extract_strided_slice %135 {offsets = [0, 0], sizes = [2, 32], strides = [1, 1]} : vector<2x128xf32> to vector<2x32xf32>
    %137 = arith.negf %136 : vector<2x32xf32>
    %138 = math.exp %137 : vector<2x32xf32>
    %cst_46 = arith.constant 1.000000e+00 : f32
    %139 = vector.broadcast %cst_46 : f32 to vector<2x32xf32>
    %140 = arith.addf %139, %138 : vector<2x32xf32>
    %141 = arith.divf %139, %140 : vector<2x32xf32>
    %142 = vector.extract_strided_slice %135 {offsets = [0, 32], sizes = [2, 32], strides = [1, 1]} : vector<2x128xf32> to vector<2x32xf32>
    %143 = arith.negf %142 : vector<2x32xf32>
    %144 = math.exp %143 : vector<2x32xf32>
    %cst_47 = arith.constant 1.000000e+00 : f32
    %145 = vector.broadcast %cst_47 : f32 to vector<2x32xf32>
    %146 = arith.addf %145, %144 : vector<2x32xf32>
    %147 = arith.divf %145, %146 : vector<2x32xf32>
    %148 = vector.extract_strided_slice %135 {offsets = [0, 64], sizes = [2, 32], strides = [1, 1]} : vector<2x128xf32> to vector<2x32xf32>
    %149 = math.tanh %148 : vector<2x32xf32>
    %150 = vector.extract_strided_slice %135 {offsets = [0, 96], sizes = [2, 32], strides = [1, 1]} : vector<2x128xf32> to vector<2x32xf32>
    %151 = arith.negf %150 : vector<2x32xf32>
    %152 = math.exp %151 : vector<2x32xf32>
    %cst_48 = arith.constant 1.000000e+00 : f32
    %153 = vector.broadcast %cst_48 : f32 to vector<2x32xf32>
    %154 = arith.addf %153, %152 : vector<2x32xf32>
    %155 = arith.divf %153, %154 : vector<2x32xf32>
    %156 = arith.mulf %147, %128 : vector<2x32xf32>
    %157 = arith.mulf %141, %149 : vector<2x32xf32>
    %158 = arith.addf %156, %157 : vector<2x32xf32>
    %159 = math.tanh %158 : vector<2x32xf32>
    %160 = arith.mulf %155, %159 : vector<2x32xf32>
    %c0_49 = arith.constant 0 : index
    %c128 = arith.constant 128 : index
    %161 = vector.load %arg9[%c0_49, %c128] : memref<2x768xf32, #tpu.memory_space<vmem>>, vector<2x32xf32>
    tpu.vector_store %arg9[%c0_49, %c128], %160 {strides = array<i32>} : memref<2x768xf32, #tpu.memory_space<vmem>>, vector<2x32xf32>,
    %c0_50 = arith.constant 0 : index
    %c5 = arith.constant 5 : index
    %c0_51 = arith.constant 0 : index
    %162 = vector.load %arg8[%c0_50, %c5, %c0_51] : memref<2x24x128xf32, #tpu.memory_space<vmem>>, vector<2x1x128xf32>
    %163 = vector.shape_cast %162 : vector<2x1x128xf32> to vector<2x128xf32>
    %cst_52 = arith.constant dense<0.000000e+00> : vector<2x128xf32>
    %164 = tpu.matmul %160, %9, %cst_52 {dimension_numbers = #tpu.dot_dimension_numbers<[1], [0], [0], [1], [0, 0, 1, 1], [], []>} : vector<2x32xf32>, vector<32x128xf32>, vector<2x128xf32> -> vector<2x128xf32>
    %165 = arith.addf %163, %164 : vector<2x128xf32>
    %166 = vector.extract_strided_slice %165 {offsets = [0, 0], sizes = [2, 32], strides = [1, 1]} : vector<2x128xf32> to vector<2x32xf32>
    %167 = arith.negf %166 : vector<2x32xf32>
    %168 = math.exp %167 : vector<2x32xf32>
    %cst_53 = arith.constant 1.000000e+00 : f32
    %169 = vector.broadcast %cst_53 : f32 to vector<2x32xf32>
    %170 = arith.addf %169, %168 : vector<2x32xf32>
    %171 = arith.divf %169, %170 : vector<2x32xf32>
    %172 = vector.extract_strided_slice %165 {offsets = [0, 32], sizes = [2, 32], strides = [1, 1]} : vector<2x128xf32> to vector<2x32xf32>
    %173 = arith.negf %172 : vector<2x32xf32>
    %174 = math.exp %173 : vector<2x32xf32>
    %cst_54 = arith.constant 1.000000e+00 : f32
    %175 = vector.broadcast %cst_54 : f32 to vector<2x32xf32>
    %176 = arith.addf %175, %174 : vector<2x32xf32>
    %177 = arith.divf %175, %176 : vector<2x32xf32>
    %178 = vector.extract_strided_slice %165 {offsets = [0, 64], sizes = [2, 32], strides = [1, 1]} : vector<2x128xf32> to vector<2x32xf32>
    %179 = math.tanh %178 : vector<2x32xf32>
    %180 = vector.extract_strided_slice %165 {offsets = [0, 96], sizes = [2, 32], strides = [1, 1]} : vector<2x128xf32> to vector<2x32xf32>
    %181 = arith.negf %180 : vector<2x32xf32>
    %182 = math.exp %181 : vector<2x32xf32>
    %cst_55 = arith.constant 1.000000e+00 : f32
    %183 = vector.broadcast %cst_55 : f32 to vector<2x32xf32>
    %184 = arith.addf %183, %182 : vector<2x32xf32>
    %185 = arith.divf %183, %184 : vector<2x32xf32>
    %186 = arith.mulf %177, %158 : vector<2x32xf32>
    %187 = arith.mulf %171, %179 : vector<2x32xf32>
    %188 = arith.addf %186, %187 : vector<2x32xf32>
    %189 = math.tanh %188 : vector<2x32xf32>
    %190 = arith.mulf %185, %189 : vector<2x32xf32>
    %c0_56 = arith.constant 0 : index
    %c160 = arith.constant 160 : index
    %191 = vector.load %arg9[%c0_56, %c160] : memref<2x768xf32, #tpu.memory_space<vmem>>, vector<2x32xf32>
    tpu.vector_store %arg9[%c0_56, %c160], %190 {strides = array<i32>} : memref<2x768xf32, #tpu.memory_space<vmem>>, vector<2x32xf32>,
    %c0_57 = arith.constant 0 : index
    %c6 = arith.constant 6 : index
    %c0_58 = arith.constant 0 : index
    %192 = vector.load %arg8[%c0_57, %c6, %c0_58] : memref<2x24x128xf32, #tpu.memory_space<vmem>>, vector<2x1x128xf32>
    %193 = vector.shape_cast %192 : vector<2x1x128xf32> to vector<2x128xf32>
    %cst_59 = arith.constant dense<0.000000e+00> : vector<2x128xf32>
    %194 = tpu.matmul %190, %9, %cst_59 {dimension_numbers = #tpu.dot_dimension_numbers<[1], [0], [0], [1], [0, 0, 1, 1], [], []>} : vector<2x32xf32>, vector<32x128xf32>, vector<2x128xf32> -> vector<2x128xf32>
    %195 = arith.addf %193, %194 : vector<2x128xf32>
    %196 = vector.extract_strided_slice %195 {offsets = [0, 0], sizes = [2, 32], strides = [1, 1]} : vector<2x128xf32> to vector<2x32xf32>
    %197 = arith.negf %196 : vector<2x32xf32>
    %198 = math.exp %197 : vector<2x32xf32>
    %cst_60 = arith.constant 1.000000e+00 : f32
    %199 = vector.broadcast %cst_60 : f32 to vector<2x32xf32>
    %200 = arith.addf %199, %198 : vector<2x32xf32>
    %201 = arith.divf %199, %200 : vector<2x32xf32>
    %202 = vector.extract_strided_slice %195 {offsets = [0, 32], sizes = [2, 32], strides = [1, 1]} : vector<2x128xf32> to vector<2x32xf32>
    %203 = arith.negf %202 : vector<2x32xf32>
    %204 = math.exp %203 : vector<2x32xf32>
    %cst_61 = arith.constant 1.000000e+00 : f32
    %205 = vector.broadcast %cst_61 : f32 to vector<2x32xf32>
    %206 = arith.addf %205, %204 : vector<2x32xf32>
    %207 = arith.divf %205, %206 : vector<2x32xf32>
    %208 = vector.extract_strided_slice %195 {offsets = [0, 64], sizes = [2, 32], strides = [1, 1]} : vector<2x128xf32> to vector<2x32xf32>
    %209 = math.tanh %208 : vector<2x32xf32>
    %210 = vector.extract_strided_slice %195 {offsets = [0, 96], sizes = [2, 32], strides = [1, 1]} : vector<2x128xf32> to vector<2x32xf32>
    %211 = arith.negf %210 : vector<2x32xf32>
    %212 = math.exp %211 : vector<2x32xf32>
    %cst_62 = arith.constant 1.000000e+00 : f32
    %213 = vector.broadcast %cst_62 : f32 to vector<2x32xf32>
    %214 = arith.addf %213, %212 : vector<2x32xf32>
    %215 = arith.divf %213, %214 : vector<2x32xf32>
    %216 = arith.mulf %207, %188 : vector<2x32xf32>
    %217 = arith.mulf %201, %209 : vector<2x32xf32>
    %218 = arith.addf %216, %217 : vector<2x32xf32>
    %219 = math.tanh %218 : vector<2x32xf32>
    %220 = arith.mulf %215, %219 : vector<2x32xf32>
    %c0_63 = arith.constant 0 : index
    %c192 = arith.constant 192 : index
    %221 = vector.load %arg9[%c0_63, %c192] : memref<2x768xf32, #tpu.memory_space<vmem>>, vector<2x32xf32>
    tpu.vector_store %arg9[%c0_63, %c192], %220 {strides = array<i32>} : memref<2x768xf32, #tpu.memory_space<vmem>>, vector<2x32xf32>,
    %c0_64 = arith.constant 0 : index
    %c7 = arith.constant 7 : index
    %c0_65 = arith.constant 0 : index
    %222 = vector.load %arg8[%c0_64, %c7, %c0_65] : memref<2x24x128xf32, #tpu.memory_space<vmem>>, vector<2x1x128xf32>
    %223 = vector.shape_cast %222 : vector<2x1x128xf32> to vector<2x128xf32>
    %cst_66 = arith.constant dense<0.000000e+00> : vector<2x128xf32>
    %224 = tpu.matmul %220, %9, %cst_66 {dimension_numbers = #tpu.dot_dimension_numbers<[1], [0], [0], [1], [0, 0, 1, 1], [], []>} : vector<2x32xf32>, vector<32x128xf32>, vector<2x128xf32> -> vector<2x128xf32>
    %225 = arith.addf %223, %224 : vector<2x128xf32>
    %226 = vector.extract_strided_slice %225 {offsets = [0, 0], sizes = [2, 32], strides = [1, 1]} : vector<2x128xf32> to vector<2x32xf32>
    %227 = arith.negf %226 : vector<2x32xf32>
    %228 = math.exp %227 : vector<2x32xf32>
    %cst_67 = arith.constant 1.000000e+00 : f32
    %229 = vector.broadcast %cst_67 : f32 to vector<2x32xf32>
    %230 = arith.addf %229, %228 : vector<2x32xf32>
    %231 = arith.divf %229, %230 : vector<2x32xf32>
    %232 = vector.extract_strided_slice %225 {offsets = [0, 32], sizes = [2, 32], strides = [1, 1]} : vector<2x128xf32> to vector<2x32xf32>
    %233 = arith.negf %232 : vector<2x32xf32>
    %234 = math.exp %233 : vector<2x32xf32>
    %cst_68 = arith.constant 1.000000e+00 : f32
    %235 = vector.broadcast %cst_68 : f32 to vector<2x32xf32>
    %236 = arith.addf %235, %234 : vector<2x32xf32>
    %237 = arith.divf %235, %236 : vector<2x32xf32>
    %238 = vector.extract_strided_slice %225 {offsets = [0, 64], sizes = [2, 32], strides = [1, 1]} : vector<2x128xf32> to vector<2x32xf32>
    %239 = math.tanh %238 : vector<2x32xf32>
    %240 = vector.extract_strided_slice %225 {offsets = [0, 96], sizes = [2, 32], strides = [1, 1]} : vector<2x128xf32> to vector<2x32xf32>
    %241 = arith.negf %240 : vector<2x32xf32>
    %242 = math.exp %241 : vector<2x32xf32>
    %cst_69 = arith.constant 1.000000e+00 : f32
    %243 = vector.broadcast %cst_69 : f32 to vector<2x32xf32>
    %244 = arith.addf %243, %242 : vector<2x32xf32>
    %245 = arith.divf %243, %244 : vector<2x32xf32>
    %246 = arith.mulf %237, %218 : vector<2x32xf32>
    %247 = arith.mulf %231, %239 : vector<2x32xf32>
    %248 = arith.addf %246, %247 : vector<2x32xf32>
    %249 = math.tanh %248 : vector<2x32xf32>
    %250 = arith.mulf %245, %249 : vector<2x32xf32>
    %c0_70 = arith.constant 0 : index
    %c224 = arith.constant 224 : index
    %251 = vector.load %arg9[%c0_70, %c224] : memref<2x768xf32, #tpu.memory_space<vmem>>, vector<2x32xf32>
    tpu.vector_store %arg9[%c0_70, %c224], %250 {strides = array<i32>} : memref<2x768xf32, #tpu.memory_space<vmem>>, vector<2x32xf32>,
    %c0_71 = arith.constant 0 : index
    %c8 = arith.constant 8 : index
    %c0_72 = arith.constant 0 : index
    %252 = vector.load %arg8[%c0_71, %c8, %c0_72] : memref<2x24x128xf32, #tpu.memory_space<vmem>>, vector<2x1x128xf32>
    %253 = vector.shape_cast %252 : vector<2x1x128xf32> to vector<2x128xf32>
    %cst_73 = arith.constant dense<0.000000e+00> : vector<2x128xf32>
    %254 = tpu.matmul %250, %9, %cst_73 {dimension_numbers = #tpu.dot_dimension_numbers<[1], [0], [0], [1], [0, 0, 1, 1], [], []>} : vector<2x32xf32>, vector<32x128xf32>, vector<2x128xf32> -> vector<2x128xf32>
    %255 = arith.addf %253, %254 : vector<2x128xf32>
    %256 = vector.extract_strided_slice %255 {offsets = [0, 0], sizes = [2, 32], strides = [1, 1]} : vector<2x128xf32> to vector<2x32xf32>
    %257 = arith.negf %256 : vector<2x32xf32>
    %258 = math.exp %257 : vector<2x32xf32>
    %cst_74 = arith.constant 1.000000e+00 : f32
    %259 = vector.broadcast %cst_74 : f32 to vector<2x32xf32>
    %260 = arith.addf %259, %258 : vector<2x32xf32>
    %261 = arith.divf %259, %260 : vector<2x32xf32>
    %262 = vector.extract_strided_slice %255 {offsets = [0, 32], sizes = [2, 32], strides = [1, 1]} : vector<2x128xf32> to vector<2x32xf32>
    %263 = arith.negf %262 : vector<2x32xf32>
    %264 = math.exp %263 : vector<2x32xf32>
    %cst_75 = arith.constant 1.000000e+00 : f32
    %265 = vector.broadcast %cst_75 : f32 to vector<2x32xf32>
    %266 = arith.addf %265, %264 : vector<2x32xf32>
    %267 = arith.divf %265, %266 : vector<2x32xf32>
    %268 = vector.extract_strided_slice %255 {offsets = [0, 64], sizes = [2, 32], strides = [1, 1]} : vector<2x128xf32> to vector<2x32xf32>
    %269 = math.tanh %268 : vector<2x32xf32>
    %270 = vector.extract_strided_slice %255 {offsets = [0, 96], sizes = [2, 32], strides = [1, 1]} : vector<2x128xf32> to vector<2x32xf32>
    %271 = arith.negf %270 : vector<2x32xf32>
    %272 = math.exp %271 : vector<2x32xf32>
    %cst_76 = arith.constant 1.000000e+00 : f32
    %273 = vector.broadcast %cst_76 : f32 to vector<2x32xf32>
    %274 = arith.addf %273, %272 : vector<2x32xf32>
    %275 = arith.divf %273, %274 : vector<2x32xf32>
    %276 = arith.mulf %267, %248 : vector<2x32xf32>
    %277 = arith.mulf %261, %269 : vector<2x32xf32>
    %278 = arith.addf %276, %277 : vector<2x32xf32>
    %279 = math.tanh %278 : vector<2x32xf32>
    %280 = arith.mulf %275, %279 : vector<2x32xf32>
    %c0_77 = arith.constant 0 : index
    %c256 = arith.constant 256 : index
    %281 = vector.load %arg9[%c0_77, %c256] : memref<2x768xf32, #tpu.memory_space<vmem>>, vector<2x32xf32>
    tpu.vector_store %arg9[%c0_77, %c256], %280 {strides = array<i32>} : memref<2x768xf32, #tpu.memory_space<vmem>>, vector<2x32xf32>,
    %c0_78 = arith.constant 0 : index
    %c9 = arith.constant 9 : index
    %c0_79 = arith.constant 0 : index
    %282 = vector.load %arg8[%c0_78, %c9, %c0_79] : memref<2x24x128xf32, #tpu.memory_space<vmem>>, vector<2x1x128xf32>
    %283 = vector.shape_cast %282 : vector<2x1x128xf32> to vector<2x128xf32>
    %cst_80 = arith.constant dense<0.000000e+00> : vector<2x128xf32>
    %284 = tpu.matmul %280, %9, %cst_80 {dimension_numbers = #tpu.dot_dimension_numbers<[1], [0], [0], [1], [0, 0, 1, 1], [], []>} : vector<2x32xf32>, vector<32x128xf32>, vector<2x128xf32> -> vector<2x128xf32>
    %285 = arith.addf %283, %284 : vector<2x128xf32>
    %286 = vector.extract_strided_slice %285 {offsets = [0, 0], sizes = [2, 32], strides = [1, 1]} : vector<2x128xf32> to vector<2x32xf32>
    %287 = arith.negf %286 : vector<2x32xf32>
    %288 = math.exp %287 : vector<2x32xf32>
    %cst_81 = arith.constant 1.000000e+00 : f32
    %289 = vector.broadcast %cst_81 : f32 to vector<2x32xf32>
    %290 = arith.addf %289, %288 : vector<2x32xf32>
    %291 = arith.divf %289, %290 : vector<2x32xf32>
    %292 = vector.extract_strided_slice %285 {offsets = [0, 32], sizes = [2, 32], strides = [1, 1]} : vector<2x128xf32> to vector<2x32xf32>
    %293 = arith.negf %292 : vector<2x32xf32>
    %294 = math.exp %293 : vector<2x32xf32>
    %cst_82 = arith.constant 1.000000e+00 : f32
    %295 = vector.broadcast %cst_82 : f32 to vector<2x32xf32>
    %296 = arith.addf %295, %294 : vector<2x32xf32>
    %297 = arith.divf %295, %296 : vector<2x32xf32>
    %298 = vector.extract_strided_slice %285 {offsets = [0, 64], sizes = [2, 32], strides = [1, 1]} : vector<2x128xf32> to vector<2x32xf32>
    %299 = math.tanh %298 : vector<2x32xf32>
    %300 = vector.extract_strided_slice %285 {offsets = [0, 96], sizes = [2, 32], strides = [1, 1]} : vector<2x128xf32> to vector<2x32xf32>
    %301 = arith.negf %300 : vector<2x32xf32>
    %302 = math.exp %301 : vector<2x32xf32>
    %cst_83 = arith.constant 1.000000e+00 : f32
    %303 = vector.broadcast %cst_83 : f32 to vector<2x32xf32>
    %304 = arith.addf %303, %302 : vector<2x32xf32>
    %305 = arith.divf %303, %304 : vector<2x32xf32>
    %306 = arith.mulf %297, %278 : vector<2x32xf32>
    %307 = arith.mulf %291, %299 : vector<2x32xf32>
    %308 = arith.addf %306, %307 : vector<2x32xf32>
    %309 = math.tanh %308 : vector<2x32xf32>
    %310 = arith.mulf %305, %309 : vector<2x32xf32>
    %c0_84 = arith.constant 0 : index
    %c288 = arith.constant 288 : index
    %311 = vector.load %arg9[%c0_84, %c288] : memref<2x768xf32, #tpu.memory_space<vmem>>, vector<2x32xf32>
    tpu.vector_store %arg9[%c0_84, %c288], %310 {strides = array<i32>} : memref<2x768xf32, #tpu.memory_space<vmem>>, vector<2x32xf32>,
    %c0_85 = arith.constant 0 : index
    %c10 = arith.constant 10 : index
    %c0_86 = arith.constant 0 : index
    %312 = vector.load %arg8[%c0_85, %c10, %c0_86] : memref<2x24x128xf32, #tpu.memory_space<vmem>>, vector<2x1x128xf32>
    %313 = vector.shape_cast %312 : vector<2x1x128xf32> to vector<2x128xf32>
    %cst_87 = arith.constant dense<0.000000e+00> : vector<2x128xf32>
    %314 = tpu.matmul %310, %9, %cst_87 {dimension_numbers = #tpu.dot_dimension_numbers<[1], [0], [0], [1], [0, 0, 1, 1], [], []>} : vector<2x32xf32>, vector<32x128xf32>, vector<2x128xf32> -> vector<2x128xf32>
    %315 = arith.addf %313, %314 : vector<2x128xf32>
    %316 = vector.extract_strided_slice %315 {offsets = [0, 0], sizes = [2, 32], strides = [1, 1]} : vector<2x128xf32> to vector<2x32xf32>
    %317 = arith.negf %316 : vector<2x32xf32>
    %318 = math.exp %317 : vector<2x32xf32>
    %cst_88 = arith.constant 1.000000e+00 : f32
    %319 = vector.broadcast %cst_88 : f32 to vector<2x32xf32>
    %320 = arith.addf %319, %318 : vector<2x32xf32>
    %321 = arith.divf %319, %320 : vector<2x32xf32>
    %322 = vector.extract_strided_slice %315 {offsets = [0, 32], sizes = [2, 32], strides = [1, 1]} : vector<2x128xf32> to vector<2x32xf32>
    %323 = arith.negf %322 : vector<2x32xf32>
    %324 = math.exp %323 : vector<2x32xf32>
    %cst_89 = arith.constant 1.000000e+00 : f32
    %325 = vector.broadcast %cst_89 : f32 to vector<2x32xf32>
    %326 = arith.addf %325, %324 : vector<2x32xf32>
    %327 = arith.divf %325, %326 : vector<2x32xf32>
    %328 = vector.extract_strided_slice %315 {offsets = [0, 64], sizes = [2, 32], strides = [1, 1]} : vector<2x128xf32> to vector<2x32xf32>
    %329 = math.tanh %328 : vector<2x32xf32>
    %330 = vector.extract_strided_slice %315 {offsets = [0, 96], sizes = [2, 32], strides = [1, 1]} : vector<2x128xf32> to vector<2x32xf32>
    %331 = arith.negf %330 : vector<2x32xf32>
    %332 = math.exp %331 : vector<2x32xf32>
    %cst_90 = arith.constant 1.000000e+00 : f32
    %333 = vector.broadcast %cst_90 : f32 to vector<2x32xf32>
    %334 = arith.addf %333, %332 : vector<2x32xf32>
    %335 = arith.divf %333, %334 : vector<2x32xf32>
    %336 = arith.mulf %327, %308 : vector<2x32xf32>
    %337 = arith.mulf %321, %329 : vector<2x32xf32>
    %338 = arith.addf %336, %337 : vector<2x32xf32>
    %339 = math.tanh %338 : vector<2x32xf32>
    %340 = arith.mulf %335, %339 : vector<2x32xf32>
    %c0_91 = arith.constant 0 : index
    %c320 = arith.constant 320 : index
    %341 = vector.load %arg9[%c0_91, %c320] : memref<2x768xf32, #tpu.memory_space<vmem>>, vector<2x32xf32>
    tpu.vector_store %arg9[%c0_91, %c320], %340 {strides = array<i32>} : memref<2x768xf32, #tpu.memory_space<vmem>>, vector<2x32xf32>,
    %c0_92 = arith.constant 0 : index
    %c11 = arith.constant 11 : index
    %c0_93 = arith.constant 0 : index
    %342 = vector.load %arg8[%c0_92, %c11, %c0_93] : memref<2x24x128xf32, #tpu.memory_space<vmem>>, vector<2x1x128xf32>
    %343 = vector.shape_cast %342 : vector<2x1x128xf32> to vector<2x128xf32>
    %cst_94 = arith.constant dense<0.000000e+00> : vector<2x128xf32>
    %344 = tpu.matmul %340, %9, %cst_94 {dimension_numbers = #tpu.dot_dimension_numbers<[1], [0], [0], [1], [0, 0, 1, 1], [], []>} : vector<2x32xf32>, vector<32x128xf32>, vector<2x128xf32> -> vector<2x128xf32>
    %345 = arith.addf %343, %344 : vector<2x128xf32>
    %346 = vector.extract_strided_slice %345 {offsets = [0, 0], sizes = [2, 32], strides = [1, 1]} : vector<2x128xf32> to vector<2x32xf32>
    %347 = arith.negf %346 : vector<2x32xf32>
    %348 = math.exp %347 : vector<2x32xf32>
    %cst_95 = arith.constant 1.000000e+00 : f32
    %349 = vector.broadcast %cst_95 : f32 to vector<2x32xf32>
    %350 = arith.addf %349, %348 : vector<2x32xf32>
    %351 = arith.divf %349, %350 : vector<2x32xf32>
    %352 = vector.extract_strided_slice %345 {offsets = [0, 32], sizes = [2, 32], strides = [1, 1]} : vector<2x128xf32> to vector<2x32xf32>
    %353 = arith.negf %352 : vector<2x32xf32>
    %354 = math.exp %353 : vector<2x32xf32>
    %cst_96 = arith.constant 1.000000e+00 : f32
    %355 = vector.broadcast %cst_96 : f32 to vector<2x32xf32>
    %356 = arith.addf %355, %354 : vector<2x32xf32>
    %357 = arith.divf %355, %356 : vector<2x32xf32>
    %358 = vector.extract_strided_slice %345 {offsets = [0, 64], sizes = [2, 32], strides = [1, 1]} : vector<2x128xf32> to vector<2x32xf32>
    %359 = math.tanh %358 : vector<2x32xf32>
    %360 = vector.extract_strided_slice %345 {offsets = [0, 96], sizes = [2, 32], strides = [1, 1]} : vector<2x128xf32> to vector<2x32xf32>
    %361 = arith.negf %360 : vector<2x32xf32>
    %362 = math.exp %361 : vector<2x32xf32>
    %cst_97 = arith.constant 1.000000e+00 : f32
    %363 = vector.broadcast %cst_97 : f32 to vector<2x32xf32>
    %364 = arith.addf %363, %362 : vector<2x32xf32>
    %365 = arith.divf %363, %364 : vector<2x32xf32>
    %366 = arith.mulf %357, %338 : vector<2x32xf32>
    %367 = arith.mulf %351, %359 : vector<2x32xf32>
    %368 = arith.addf %366, %367 : vector<2x32xf32>
    %369 = math.tanh %368 : vector<2x32xf32>
    %370 = arith.mulf %365, %369 : vector<2x32xf32>
    %c0_98 = arith.constant 0 : index
    %c352 = arith.constant 352 : index
    %371 = vector.load %arg9[%c0_98, %c352] : memref<2x768xf32, #tpu.memory_space<vmem>>, vector<2x32xf32>
    tpu.vector_store %arg9[%c0_98, %c352], %370 {strides = array<i32>} : memref<2x768xf32, #tpu.memory_space<vmem>>, vector<2x32xf32>,
    %c0_99 = arith.constant 0 : index
    %c12 = arith.constant 12 : index
    %c0_100 = arith.constant 0 : index
    %372 = vector.load %arg8[%c0_99, %c12, %c0_100] : memref<2x24x128xf32, #tpu.memory_space<vmem>>, vector<2x1x128xf32>
    %373 = vector.shape_cast %372 : vector<2x1x128xf32> to vector<2x128xf32>
    %cst_101 = arith.constant dense<0.000000e+00> : vector<2x128xf32>
    %374 = tpu.matmul %370, %9, %cst_101 {dimension_numbers = #tpu.dot_dimension_numbers<[1], [0], [0], [1], [0, 0, 1, 1], [], []>} : vector<2x32xf32>, vector<32x128xf32>, vector<2x128xf32> -> vector<2x128xf32>
    %375 = arith.addf %373, %374 : vector<2x128xf32>
    %376 = vector.extract_strided_slice %375 {offsets = [0, 0], sizes = [2, 32], strides = [1, 1]} : vector<2x128xf32> to vector<2x32xf32>
    %377 = arith.negf %376 : vector<2x32xf32>
    %378 = math.exp %377 : vector<2x32xf32>
    %cst_102 = arith.constant 1.000000e+00 : f32
    %379 = vector.broadcast %cst_102 : f32 to vector<2x32xf32>
    %380 = arith.addf %379, %378 : vector<2x32xf32>
    %381 = arith.divf %379, %380 : vector<2x32xf32>
    %382 = vector.extract_strided_slice %375 {offsets = [0, 32], sizes = [2, 32], strides = [1, 1]} : vector<2x128xf32> to vector<2x32xf32>
    %383 = arith.negf %382 : vector<2x32xf32>
    %384 = math.exp %383 : vector<2x32xf32>
    %cst_103 = arith.constant 1.000000e+00 : f32
    %385 = vector.broadcast %cst_103 : f32 to vector<2x32xf32>
    %386 = arith.addf %385, %384 : vector<2x32xf32>
    %387 = arith.divf %385, %386 : vector<2x32xf32>
    %388 = vector.extract_strided_slice %375 {offsets = [0, 64], sizes = [2, 32], strides = [1, 1]} : vector<2x128xf32> to vector<2x32xf32>
    %389 = math.tanh %388 : vector<2x32xf32>
    %390 = vector.extract_strided_slice %375 {offsets = [0, 96], sizes = [2, 32], strides = [1, 1]} : vector<2x128xf32> to vector<2x32xf32>
    %391 = arith.negf %390 : vector<2x32xf32>
    %392 = math.exp %391 : vector<2x32xf32>
    %cst_104 = arith.constant 1.000000e+00 : f32
    %393 = vector.broadcast %cst_104 : f32 to vector<2x32xf32>
    %394 = arith.addf %393, %392 : vector<2x32xf32>
    %395 = arith.divf %393, %394 : vector<2x32xf32>
    %396 = arith.mulf %387, %368 : vector<2x32xf32>
    %397 = arith.mulf %381, %389 : vector<2x32xf32>
    %398 = arith.addf %396, %397 : vector<2x32xf32>
    %399 = math.tanh %398 : vector<2x32xf32>
    %400 = arith.mulf %395, %399 : vector<2x32xf32>
    %c0_105 = arith.constant 0 : index
    %c384 = arith.constant 384 : index
    %401 = vector.load %arg9[%c0_105, %c384] : memref<2x768xf32, #tpu.memory_space<vmem>>, vector<2x32xf32>
    tpu.vector_store %arg9[%c0_105, %c384], %400 {strides = array<i32>} : memref<2x768xf32, #tpu.memory_space<vmem>>, vector<2x32xf32>,
    %c0_106 = arith.constant 0 : index
    %c13 = arith.constant 13 : index
    %c0_107 = arith.constant 0 : index
    %402 = vector.load %arg8[%c0_106, %c13, %c0_107] : memref<2x24x128xf32, #tpu.memory_space<vmem>>, vector<2x1x128xf32>
    %403 = vector.shape_cast %402 : vector<2x1x128xf32> to vector<2x128xf32>
    %cst_108 = arith.constant dense<0.000000e+00> : vector<2x128xf32>
    %404 = tpu.matmul %400, %9, %cst_108 {dimension_numbers = #tpu.dot_dimension_numbers<[1], [0], [0], [1], [0, 0, 1, 1], [], []>} : vector<2x32xf32>, vector<32x128xf32>, vector<2x128xf32> -> vector<2x128xf32>
    %405 = arith.addf %403, %404 : vector<2x128xf32>
    %406 = vector.extract_strided_slice %405 {offsets = [0, 0], sizes = [2, 32], strides = [1, 1]} : vector<2x128xf32> to vector<2x32xf32>
    %407 = arith.negf %406 : vector<2x32xf32>
    %408 = math.exp %407 : vector<2x32xf32>
    %cst_109 = arith.constant 1.000000e+00 : f32
    %409 = vector.broadcast %cst_109 : f32 to vector<2x32xf32>
    %410 = arith.addf %409, %408 : vector<2x32xf32>
    %411 = arith.divf %409, %410 : vector<2x32xf32>
    %412 = vector.extract_strided_slice %405 {offsets = [0, 32], sizes = [2, 32], strides = [1, 1]} : vector<2x128xf32> to vector<2x32xf32>
    %413 = arith.negf %412 : vector<2x32xf32>
    %414 = math.exp %413 : vector<2x32xf32>
    %cst_110 = arith.constant 1.000000e+00 : f32
    %415 = vector.broadcast %cst_110 : f32 to vector<2x32xf32>
    %416 = arith.addf %415, %414 : vector<2x32xf32>
    %417 = arith.divf %415, %416 : vector<2x32xf32>
    %418 = vector.extract_strided_slice %405 {offsets = [0, 64], sizes = [2, 32], strides = [1, 1]} : vector<2x128xf32> to vector<2x32xf32>
    %419 = math.tanh %418 : vector<2x32xf32>
    %420 = vector.extract_strided_slice %405 {offsets = [0, 96], sizes = [2, 32], strides = [1, 1]} : vector<2x128xf32> to vector<2x32xf32>
    %421 = arith.negf %420 : vector<2x32xf32>
    %422 = math.exp %421 : vector<2x32xf32>
    %cst_111 = arith.constant 1.000000e+00 : f32
    %423 = vector.broadcast %cst_111 : f32 to vector<2x32xf32>
    %424 = arith.addf %423, %422 : vector<2x32xf32>
    %425 = arith.divf %423, %424 : vector<2x32xf32>
    %426 = arith.mulf %417, %398 : vector<2x32xf32>
    %427 = arith.mulf %411, %419 : vector<2x32xf32>
    %428 = arith.addf %426, %427 : vector<2x32xf32>
    %429 = math.tanh %428 : vector<2x32xf32>
    %430 = arith.mulf %425, %429 : vector<2x32xf32>
    %c0_112 = arith.constant 0 : index
    %c416 = arith.constant 416 : index
    %431 = vector.load %arg9[%c0_112, %c416] : memref<2x768xf32, #tpu.memory_space<vmem>>, vector<2x32xf32>
    tpu.vector_store %arg9[%c0_112, %c416], %430 {strides = array<i32>} : memref<2x768xf32, #tpu.memory_space<vmem>>, vector<2x32xf32>,
    %c0_113 = arith.constant 0 : index
    %c14 = arith.constant 14 : index
    %c0_114 = arith.constant 0 : index
    %432 = vector.load %arg8[%c0_113, %c14, %c0_114] : memref<2x24x128xf32, #tpu.memory_space<vmem>>, vector<2x1x128xf32>
    %433 = vector.shape_cast %432 : vector<2x1x128xf32> to vector<2x128xf32>
    %cst_115 = arith.constant dense<0.000000e+00> : vector<2x128xf32>
    %434 = tpu.matmul %430, %9, %cst_115 {dimension_numbers = #tpu.dot_dimension_numbers<[1], [0], [0], [1], [0, 0, 1, 1], [], []>} : vector<2x32xf32>, vector<32x128xf32>, vector<2x128xf32> -> vector<2x128xf32>
    %435 = arith.addf %433, %434 : vector<2x128xf32>
    %436 = vector.extract_strided_slice %435 {offsets = [0, 0], sizes = [2, 32], strides = [1, 1]} : vector<2x128xf32> to vector<2x32xf32>
    %437 = arith.negf %436 : vector<2x32xf32>
    %438 = math.exp %437 : vector<2x32xf32>
    %cst_116 = arith.constant 1.000000e+00 : f32
    %439 = vector.broadcast %cst_116 : f32 to vector<2x32xf32>
    %440 = arith.addf %439, %438 : vector<2x32xf32>
    %441 = arith.divf %439, %440 : vector<2x32xf32>
    %442 = vector.extract_strided_slice %435 {offsets = [0, 32], sizes = [2, 32], strides = [1, 1]} : vector<2x128xf32> to vector<2x32xf32>
    %443 = arith.negf %442 : vector<2x32xf32>
    %444 = math.exp %443 : vector<2x32xf32>
    %cst_117 = arith.constant 1.000000e+00 : f32
    %445 = vector.broadcast %cst_117 : f32 to vector<2x32xf32>
    %446 = arith.addf %445, %444 : vector<2x32xf32>
    %447 = arith.divf %445, %446 : vector<2x32xf32>
    %448 = vector.extract_strided_slice %435 {offsets = [0, 64], sizes = [2, 32], strides = [1, 1]} : vector<2x128xf32> to vector<2x32xf32>
    %449 = math.tanh %448 : vector<2x32xf32>
    %450 = vector.extract_strided_slice %435 {offsets = [0, 96], sizes = [2, 32], strides = [1, 1]} : vector<2x128xf32> to vector<2x32xf32>
    %451 = arith.negf %450 : vector<2x32xf32>
    %452 = math.exp %451 : vector<2x32xf32>
    %cst_118 = arith.constant 1.000000e+00 : f32
    %453 = vector.broadcast %cst_118 : f32 to vector<2x32xf32>
    %454 = arith.addf %453, %452 : vector<2x32xf32>
    %455 = arith.divf %453, %454 : vector<2x32xf32>
    %456 = arith.mulf %447, %428 : vector<2x32xf32>
    %457 = arith.mulf %441, %449 : vector<2x32xf32>
    %458 = arith.addf %456, %457 : vector<2x32xf32>
    %459 = math.tanh %458 : vector<2x32xf32>
    %460 = arith.mulf %455, %459 : vector<2x32xf32>
    %c0_119 = arith.constant 0 : index
    %c448 = arith.constant 448 : index
    %461 = vector.load %arg9[%c0_119, %c448] : memref<2x768xf32, #tpu.memory_space<vmem>>, vector<2x32xf32>
    tpu.vector_store %arg9[%c0_119, %c448], %460 {strides = array<i32>} : memref<2x768xf32, #tpu.memory_space<vmem>>, vector<2x32xf32>,
    %c0_120 = arith.constant 0 : index
    %c15 = arith.constant 15 : index
    %c0_121 = arith.constant 0 : index
    %462 = vector.load %arg8[%c0_120, %c15, %c0_121] : memref<2x24x128xf32, #tpu.memory_space<vmem>>, vector<2x1x128xf32>
    %463 = vector.shape_cast %462 : vector<2x1x128xf32> to vector<2x128xf32>
    %cst_122 = arith.constant dense<0.000000e+00> : vector<2x128xf32>
    %464 = tpu.matmul %460, %9, %cst_122 {dimension_numbers = #tpu.dot_dimension_numbers<[1], [0], [0], [1], [0, 0, 1, 1], [], []>} : vector<2x32xf32>, vector<32x128xf32>, vector<2x128xf32> -> vector<2x128xf32>
    %465 = arith.addf %463, %464 : vector<2x128xf32>
    %466 = vector.extract_strided_slice %465 {offsets = [0, 0], sizes = [2, 32], strides = [1, 1]} : vector<2x128xf32> to vector<2x32xf32>
    %467 = arith.negf %466 : vector<2x32xf32>
    %468 = math.exp %467 : vector<2x32xf32>
    %cst_123 = arith.constant 1.000000e+00 : f32
    %469 = vector.broadcast %cst_123 : f32 to vector<2x32xf32>
    %470 = arith.addf %469, %468 : vector<2x32xf32>
    %471 = arith.divf %469, %470 : vector<2x32xf32>
    %472 = vector.extract_strided_slice %465 {offsets = [0, 32], sizes = [2, 32], strides = [1, 1]} : vector<2x128xf32> to vector<2x32xf32>
    %473 = arith.negf %472 : vector<2x32xf32>
    %474 = math.exp %473 : vector<2x32xf32>
    %cst_124 = arith.constant 1.000000e+00 : f32
    %475 = vector.broadcast %cst_124 : f32 to vector<2x32xf32>
    %476 = arith.addf %475, %474 : vector<2x32xf32>
    %477 = arith.divf %475, %476 : vector<2x32xf32>
    %478 = vector.extract_strided_slice %465 {offsets = [0, 64], sizes = [2, 32], strides = [1, 1]} : vector<2x128xf32> to vector<2x32xf32>
    %479 = math.tanh %478 : vector<2x32xf32>
    %480 = vector.extract_strided_slice %465 {offsets = [0, 96], sizes = [2, 32], strides = [1, 1]} : vector<2x128xf32> to vector<2x32xf32>
    %481 = arith.negf %480 : vector<2x32xf32>
    %482 = math.exp %481 : vector<2x32xf32>
    %cst_125 = arith.constant 1.000000e+00 : f32
    %483 = vector.broadcast %cst_125 : f32 to vector<2x32xf32>
    %484 = arith.addf %483, %482 : vector<2x32xf32>
    %485 = arith.divf %483, %484 : vector<2x32xf32>
    %486 = arith.mulf %477, %458 : vector<2x32xf32>
    %487 = arith.mulf %471, %479 : vector<2x32xf32>
    %488 = arith.addf %486, %487 : vector<2x32xf32>
    %489 = math.tanh %488 : vector<2x32xf32>
    %490 = arith.mulf %485, %489 : vector<2x32xf32>
    %c0_126 = arith.constant 0 : index
    %c480 = arith.constant 480 : index
    %491 = vector.load %arg9[%c0_126, %c480] : memref<2x768xf32, #tpu.memory_space<vmem>>, vector<2x32xf32>
    tpu.vector_store %arg9[%c0_126, %c480], %490 {strides = array<i32>} : memref<2x768xf32, #tpu.memory_space<vmem>>, vector<2x32xf32>,
    %c0_127 = arith.constant 0 : index
    %c16 = arith.constant 16 : index
    %c0_128 = arith.constant 0 : index
    %492 = vector.load %arg8[%c0_127, %c16, %c0_128] : memref<2x24x128xf32, #tpu.memory_space<vmem>>, vector<2x1x128xf32>
    %493 = vector.shape_cast %492 : vector<2x1x128xf32> to vector<2x128xf32>
    %cst_129 = arith.constant dense<0.000000e+00> : vector<2x128xf32>
    %494 = tpu.matmul %490, %9, %cst_129 {dimension_numbers = #tpu.dot_dimension_numbers<[1], [0], [0], [1], [0, 0, 1, 1], [], []>} : vector<2x32xf32>, vector<32x128xf32>, vector<2x128xf32> -> vector<2x128xf32>
    %495 = arith.addf %493, %494 : vector<2x128xf32>
    %496 = vector.extract_strided_slice %495 {offsets = [0, 0], sizes = [2, 32], strides = [1, 1]} : vector<2x128xf32> to vector<2x32xf32>
    %497 = arith.negf %496 : vector<2x32xf32>
    %498 = math.exp %497 : vector<2x32xf32>
    %cst_130 = arith.constant 1.000000e+00 : f32
    %499 = vector.broadcast %cst_130 : f32 to vector<2x32xf32>
    %500 = arith.addf %499, %498 : vector<2x32xf32>
    %501 = arith.divf %499, %500 : vector<2x32xf32>
    %502 = vector.extract_strided_slice %495 {offsets = [0, 32], sizes = [2, 32], strides = [1, 1]} : vector<2x128xf32> to vector<2x32xf32>
    %503 = arith.negf %502 : vector<2x32xf32>
    %504 = math.exp %503 : vector<2x32xf32>
    %cst_131 = arith.constant 1.000000e+00 : f32
    %505 = vector.broadcast %cst_131 : f32 to vector<2x32xf32>
    %506 = arith.addf %505, %504 : vector<2x32xf32>
    %507 = arith.divf %505, %506 : vector<2x32xf32>
    %508 = vector.extract_strided_slice %495 {offsets = [0, 64], sizes = [2, 32], strides = [1, 1]} : vector<2x128xf32> to vector<2x32xf32>
    %509 = math.tanh %508 : vector<2x32xf32>
    %510 = vector.extract_strided_slice %495 {offsets = [0, 96], sizes = [2, 32], strides = [1, 1]} : vector<2x128xf32> to vector<2x32xf32>
    %511 = arith.negf %510 : vector<2x32xf32>
    %512 = math.exp %511 : vector<2x32xf32>
    %cst_132 = arith.constant 1.000000e+00 : f32
    %513 = vector.broadcast %cst_132 : f32 to vector<2x32xf32>
    %514 = arith.addf %513, %512 : vector<2x32xf32>
    %515 = arith.divf %513, %514 : vector<2x32xf32>
    %516 = arith.mulf %507, %488 : vector<2x32xf32>
    %517 = arith.mulf %501, %509 : vector<2x32xf32>
    %518 = arith.addf %516, %517 : vector<2x32xf32>
    %519 = math.tanh %518 : vector<2x32xf32>
    %520 = arith.mulf %515, %519 : vector<2x32xf32>
    %c0_133 = arith.constant 0 : index
    %c512 = arith.constant 512 : index
    %521 = vector.load %arg9[%c0_133, %c512] : memref<2x768xf32, #tpu.memory_space<vmem>>, vector<2x32xf32>
    tpu.vector_store %arg9[%c0_133, %c512], %520 {strides = array<i32>} : memref<2x768xf32, #tpu.memory_space<vmem>>, vector<2x32xf32>,
    %c0_134 = arith.constant 0 : index
    %c17 = arith.constant 17 : index
    %c0_135 = arith.constant 0 : index
    %522 = vector.load %arg8[%c0_134, %c17, %c0_135] : memref<2x24x128xf32, #tpu.memory_space<vmem>>, vector<2x1x128xf32>
    %523 = vector.shape_cast %522 : vector<2x1x128xf32> to vector<2x128xf32>
    %cst_136 = arith.constant dense<0.000000e+00> : vector<2x128xf32>
    %524 = tpu.matmul %520, %9, %cst_136 {dimension_numbers = #tpu.dot_dimension_numbers<[1], [0], [0], [1], [0, 0, 1, 1], [], []>} : vector<2x32xf32>, vector<32x128xf32>, vector<2x128xf32> -> vector<2x128xf32>
    %525 = arith.addf %523, %524 : vector<2x128xf32>
    %526 = vector.extract_strided_slice %525 {offsets = [0, 0], sizes = [2, 32], strides = [1, 1]} : vector<2x128xf32> to vector<2x32xf32>
    %527 = arith.negf %526 : vector<2x32xf32>
    %528 = math.exp %527 : vector<2x32xf32>
    %cst_137 = arith.constant 1.000000e+00 : f32
    %529 = vector.broadcast %cst_137 : f32 to vector<2x32xf32>
    %530 = arith.addf %529, %528 : vector<2x32xf32>
    %531 = arith.divf %529, %530 : vector<2x32xf32>
    %532 = vector.extract_strided_slice %525 {offsets = [0, 32], sizes = [2, 32], strides = [1, 1]} : vector<2x128xf32> to vector<2x32xf32>
    %533 = arith.negf %532 : vector<2x32xf32>
    %534 = math.exp %533 : vector<2x32xf32>
    %cst_138 = arith.constant 1.000000e+00 : f32
    %535 = vector.broadcast %cst_138 : f32 to vector<2x32xf32>
    %536 = arith.addf %535, %534 : vector<2x32xf32>
    %537 = arith.divf %535, %536 : vector<2x32xf32>
    %538 = vector.extract_strided_slice %525 {offsets = [0, 64], sizes = [2, 32], strides = [1, 1]} : vector<2x128xf32> to vector<2x32xf32>
    %539 = math.tanh %538 : vector<2x32xf32>
    %540 = vector.extract_strided_slice %525 {offsets = [0, 96], sizes = [2, 32], strides = [1, 1]} : vector<2x128xf32> to vector<2x32xf32>
    %541 = arith.negf %540 : vector<2x32xf32>
    %542 = math.exp %541 : vector<2x32xf32>
    %cst_139 = arith.constant 1.000000e+00 : f32
    %543 = vector.broadcast %cst_139 : f32 to vector<2x32xf32>
    %544 = arith.addf %543, %542 : vector<2x32xf32>
    %545 = arith.divf %543, %544 : vector<2x32xf32>
    %546 = arith.mulf %537, %518 : vector<2x32xf32>
    %547 = arith.mulf %531, %539 : vector<2x32xf32>
    %548 = arith.addf %546, %547 : vector<2x32xf32>
    %549 = math.tanh %548 : vector<2x32xf32>
    %550 = arith.mulf %545, %549 : vector<2x32xf32>
    %c0_140 = arith.constant 0 : index
    %c544 = arith.constant 544 : index
    %551 = vector.load %arg9[%c0_140, %c544] : memref<2x768xf32, #tpu.memory_space<vmem>>, vector<2x32xf32>
    tpu.vector_store %arg9[%c0_140, %c544], %550 {strides = array<i32>} : memref<2x768xf32, #tpu.memory_space<vmem>>, vector<2x32xf32>,
    %c0_141 = arith.constant 0 : index
    %c18 = arith.constant 18 : index
    %c0_142 = arith.constant 0 : index
    %552 = vector.load %arg8[%c0_141, %c18, %c0_142] : memref<2x24x128xf32, #tpu.memory_space<vmem>>, vector<2x1x128xf32>
    %553 = vector.shape_cast %552 : vector<2x1x128xf32> to vector<2x128xf32>
    %cst_143 = arith.constant dense<0.000000e+00> : vector<2x128xf32>
    %554 = tpu.matmul %550, %9, %cst_143 {dimension_numbers = #tpu.dot_dimension_numbers<[1], [0], [0], [1], [0, 0, 1, 1], [], []>} : vector<2x32xf32>, vector<32x128xf32>, vector<2x128xf32> -> vector<2x128xf32>
    %555 = arith.addf %553, %554 : vector<2x128xf32>
    %556 = vector.extract_strided_slice %555 {offsets = [0, 0], sizes = [2, 32], strides = [1, 1]} : vector<2x128xf32> to vector<2x32xf32>
    %557 = arith.negf %556 : vector<2x32xf32>
    %558 = math.exp %557 : vector<2x32xf32>
    %cst_144 = arith.constant 1.000000e+00 : f32
    %559 = vector.broadcast %cst_144 : f32 to vector<2x32xf32>
    %560 = arith.addf %559, %558 : vector<2x32xf32>
    %561 = arith.divf %559, %560 : vector<2x32xf32>
    %562 = vector.extract_strided_slice %555 {offsets = [0, 32], sizes = [2, 32], strides = [1, 1]} : vector<2x128xf32> to vector<2x32xf32>
    %563 = arith.negf %562 : vector<2x32xf32>
    %564 = math.exp %563 : vector<2x32xf32>
    %cst_145 = arith.constant 1.000000e+00 : f32
    %565 = vector.broadcast %cst_145 : f32 to vector<2x32xf32>
    %566 = arith.addf %565, %564 : vector<2x32xf32>
    %567 = arith.divf %565, %566 : vector<2x32xf32>
    %568 = vector.extract_strided_slice %555 {offsets = [0, 64], sizes = [2, 32], strides = [1, 1]} : vector<2x128xf32> to vector<2x32xf32>
    %569 = math.tanh %568 : vector<2x32xf32>
    %570 = vector.extract_strided_slice %555 {offsets = [0, 96], sizes = [2, 32], strides = [1, 1]} : vector<2x128xf32> to vector<2x32xf32>
    %571 = arith.negf %570 : vector<2x32xf32>
    %572 = math.exp %571 : vector<2x32xf32>
    %cst_146 = arith.constant 1.000000e+00 : f32
    %573 = vector.broadcast %cst_146 : f32 to vector<2x32xf32>
    %574 = arith.addf %573, %572 : vector<2x32xf32>
    %575 = arith.divf %573, %574 : vector<2x32xf32>
    %576 = arith.mulf %567, %548 : vector<2x32xf32>
    %577 = arith.mulf %561, %569 : vector<2x32xf32>
    %578 = arith.addf %576, %577 : vector<2x32xf32>
    %579 = math.tanh %578 : vector<2x32xf32>
    %580 = arith.mulf %575, %579 : vector<2x32xf32>
    %c0_147 = arith.constant 0 : index
    %c576 = arith.constant 576 : index
    %581 = vector.load %arg9[%c0_147, %c576] : memref<2x768xf32, #tpu.memory_space<vmem>>, vector<2x32xf32>
    tpu.vector_store %arg9[%c0_147, %c576], %580 {strides = array<i32>} : memref<2x768xf32, #tpu.memory_space<vmem>>, vector<2x32xf32>,
    %c0_148 = arith.constant 0 : index
    %c19 = arith.constant 19 : index
    %c0_149 = arith.constant 0 : index
    %582 = vector.load %arg8[%c0_148, %c19, %c0_149] : memref<2x24x128xf32, #tpu.memory_space<vmem>>, vector<2x1x128xf32>
    %583 = vector.shape_cast %582 : vector<2x1x128xf32> to vector<2x128xf32>
    %cst_150 = arith.constant dense<0.000000e+00> : vector<2x128xf32>
    %584 = tpu.matmul %580, %9, %cst_150 {dimension_numbers = #tpu.dot_dimension_numbers<[1], [0], [0], [1], [0, 0, 1, 1], [], []>} : vector<2x32xf32>, vector<32x128xf32>, vector<2x128xf32> -> vector<2x128xf32>
    %585 = arith.addf %583, %584 : vector<2x128xf32>
    %586 = vector.extract_strided_slice %585 {offsets = [0, 0], sizes = [2, 32], strides = [1, 1]} : vector<2x128xf32> to vector<2x32xf32>
    %587 = arith.negf %586 : vector<2x32xf32>
    %588 = math.exp %587 : vector<2x32xf32>
    %cst_151 = arith.constant 1.000000e+00 : f32
    %589 = vector.broadcast %cst_151 : f32 to vector<2x32xf32>
    %590 = arith.addf %589, %588 : vector<2x32xf32>
    %591 = arith.divf %589, %590 : vector<2x32xf32>
    %592 = vector.extract_strided_slice %585 {offsets = [0, 32], sizes = [2, 32], strides = [1, 1]} : vector<2x128xf32> to vector<2x32xf32>
    %593 = arith.negf %592 : vector<2x32xf32>
    %594 = math.exp %593 : vector<2x32xf32>
    %cst_152 = arith.constant 1.000000e+00 : f32
    %595 = vector.broadcast %cst_152 : f32 to vector<2x32xf32>
    %596 = arith.addf %595, %594 : vector<2x32xf32>
    %597 = arith.divf %595, %596 : vector<2x32xf32>
    %598 = vector.extract_strided_slice %585 {offsets = [0, 64], sizes = [2, 32], strides = [1, 1]} : vector<2x128xf32> to vector<2x32xf32>
    %599 = math.tanh %598 : vector<2x32xf32>
    %600 = vector.extract_strided_slice %585 {offsets = [0, 96], sizes = [2, 32], strides = [1, 1]} : vector<2x128xf32> to vector<2x32xf32>
    %601 = arith.negf %600 : vector<2x32xf32>
    %602 = math.exp %601 : vector<2x32xf32>
    %cst_153 = arith.constant 1.000000e+00 : f32
    %603 = vector.broadcast %cst_153 : f32 to vector<2x32xf32>
    %604 = arith.addf %603, %602 : vector<2x32xf32>
    %605 = arith.divf %603, %604 : vector<2x32xf32>
    %606 = arith.mulf %597, %578 : vector<2x32xf32>
    %607 = arith.mulf %591, %599 : vector<2x32xf32>
    %608 = arith.addf %606, %607 : vector<2x32xf32>
    %609 = math.tanh %608 : vector<2x32xf32>
    %610 = arith.mulf %605, %609 : vector<2x32xf32>
    %c0_154 = arith.constant 0 : index
    %c608 = arith.constant 608 : index
    %611 = vector.load %arg9[%c0_154, %c608] : memref<2x768xf32, #tpu.memory_space<vmem>>, vector<2x32xf32>
    tpu.vector_store %arg9[%c0_154, %c608], %610 {strides = array<i32>} : memref<2x768xf32, #tpu.memory_space<vmem>>, vector<2x32xf32>,
    %c0_155 = arith.constant 0 : index
    %c20 = arith.constant 20 : index
    %c0_156 = arith.constant 0 : index
    %612 = vector.load %arg8[%c0_155, %c20, %c0_156] : memref<2x24x128xf32, #tpu.memory_space<vmem>>, vector<2x1x128xf32>
    %613 = vector.shape_cast %612 : vector<2x1x128xf32> to vector<2x128xf32>
    %cst_157 = arith.constant dense<0.000000e+00> : vector<2x128xf32>
    %614 = tpu.matmul %610, %9, %cst_157 {dimension_numbers = #tpu.dot_dimension_numbers<[1], [0], [0], [1], [0, 0, 1, 1], [], []>} : vector<2x32xf32>, vector<32x128xf32>, vector<2x128xf32> -> vector<2x128xf32>
    %615 = arith.addf %613, %614 : vector<2x128xf32>
    %616 = vector.extract_strided_slice %615 {offsets = [0, 0], sizes = [2, 32], strides = [1, 1]} : vector<2x128xf32> to vector<2x32xf32>
    %617 = arith.negf %616 : vector<2x32xf32>
    %618 = math.exp %617 : vector<2x32xf32>
    %cst_158 = arith.constant 1.000000e+00 : f32
    %619 = vector.broadcast %cst_158 : f32 to vector<2x32xf32>
    %620 = arith.addf %619, %618 : vector<2x32xf32>
    %621 = arith.divf %619, %620 : vector<2x32xf32>
    %622 = vector.extract_strided_slice %615 {offsets = [0, 32], sizes = [2, 32], strides = [1, 1]} : vector<2x128xf32> to vector<2x32xf32>
    %623 = arith.negf %622 : vector<2x32xf32>
    %624 = math.exp %623 : vector<2x32xf32>
    %cst_159 = arith.constant 1.000000e+00 : f32
    %625 = vector.broadcast %cst_159 : f32 to vector<2x32xf32>
    %626 = arith.addf %625, %624 : vector<2x32xf32>
    %627 = arith.divf %625, %626 : vector<2x32xf32>
    %628 = vector.extract_strided_slice %615 {offsets = [0, 64], sizes = [2, 32], strides = [1, 1]} : vector<2x128xf32> to vector<2x32xf32>
    %629 = math.tanh %628 : vector<2x32xf32>
    %630 = vector.extract_strided_slice %615 {offsets = [0, 96], sizes = [2, 32], strides = [1, 1]} : vector<2x128xf32> to vector<2x32xf32>
    %631 = arith.negf %630 : vector<2x32xf32>
    %632 = math.exp %631 : vector<2x32xf32>
    %cst_160 = arith.constant 1.000000e+00 : f32
    %633 = vector.broadcast %cst_160 : f32 to vector<2x32xf32>
    %634 = arith.addf %633, %632 : vector<2x32xf32>
    %635 = arith.divf %633, %634 : vector<2x32xf32>
    %636 = arith.mulf %627, %608 : vector<2x32xf32>
    %637 = arith.mulf %621, %629 : vector<2x32xf32>
    %638 = arith.addf %636, %637 : vector<2x32xf32>
    %639 = math.tanh %638 : vector<2x32xf32>
    %640 = arith.mulf %635, %639 : vector<2x32xf32>
    %c0_161 = arith.constant 0 : index
    %c640 = arith.constant 640 : index
    %641 = vector.load %arg9[%c0_161, %c640] : memref<2x768xf32, #tpu.memory_space<vmem>>, vector<2x32xf32>
    tpu.vector_store %arg9[%c0_161, %c640], %640 {strides = array<i32>} : memref<2x768xf32, #tpu.memory_space<vmem>>, vector<2x32xf32>,
    %c0_162 = arith.constant 0 : index
    %c21 = arith.constant 21 : index
    %c0_163 = arith.constant 0 : index
    %642 = vector.load %arg8[%c0_162, %c21, %c0_163] : memref<2x24x128xf32, #tpu.memory_space<vmem>>, vector<2x1x128xf32>
    %643 = vector.shape_cast %642 : vector<2x1x128xf32> to vector<2x128xf32>
    %cst_164 = arith.constant dense<0.000000e+00> : vector<2x128xf32>
    %644 = tpu.matmul %640, %9, %cst_164 {dimension_numbers = #tpu.dot_dimension_numbers<[1], [0], [0], [1], [0, 0, 1, 1], [], []>} : vector<2x32xf32>, vector<32x128xf32>, vector<2x128xf32> -> vector<2x128xf32>
    %645 = arith.addf %643, %644 : vector<2x128xf32>
    %646 = vector.extract_strided_slice %645 {offsets = [0, 0], sizes = [2, 32], strides = [1, 1]} : vector<2x128xf32> to vector<2x32xf32>
    %647 = arith.negf %646 : vector<2x32xf32>
    %648 = math.exp %647 : vector<2x32xf32>
    %cst_165 = arith.constant 1.000000e+00 : f32
    %649 = vector.broadcast %cst_165 : f32 to vector<2x32xf32>
    %650 = arith.addf %649, %648 : vector<2x32xf32>
    %651 = arith.divf %649, %650 : vector<2x32xf32>
    %652 = vector.extract_strided_slice %645 {offsets = [0, 32], sizes = [2, 32], strides = [1, 1]} : vector<2x128xf32> to vector<2x32xf32>
    %653 = arith.negf %652 : vector<2x32xf32>
    %654 = math.exp %653 : vector<2x32xf32>
    %cst_166 = arith.constant 1.000000e+00 : f32
    %655 = vector.broadcast %cst_166 : f32 to vector<2x32xf32>
    %656 = arith.addf %655, %654 : vector<2x32xf32>
    %657 = arith.divf %655, %656 : vector<2x32xf32>
    %658 = vector.extract_strided_slice %645 {offsets = [0, 64], sizes = [2, 32], strides = [1, 1]} : vector<2x128xf32> to vector<2x32xf32>
    %659 = math.tanh %658 : vector<2x32xf32>
    %660 = vector.extract_strided_slice %645 {offsets = [0, 96], sizes = [2, 32], strides = [1, 1]} : vector<2x128xf32> to vector<2x32xf32>
    %661 = arith.negf %660 : vector<2x32xf32>
    %662 = math.exp %661 : vector<2x32xf32>
    %cst_167 = arith.constant 1.000000e+00 : f32
    %663 = vector.broadcast %cst_167 : f32 to vector<2x32xf32>
    %664 = arith.addf %663, %662 : vector<2x32xf32>
    %665 = arith.divf %663, %664 : vector<2x32xf32>
    %666 = arith.mulf %657, %638 : vector<2x32xf32>
    %667 = arith.mulf %651, %659 : vector<2x32xf32>
    %668 = arith.addf %666, %667 : vector<2x32xf32>
    %669 = math.tanh %668 : vector<2x32xf32>
    %670 = arith.mulf %665, %669 : vector<2x32xf32>
    %c0_168 = arith.constant 0 : index
    %c672 = arith.constant 672 : index
    %671 = vector.load %arg9[%c0_168, %c672] : memref<2x768xf32, #tpu.memory_space<vmem>>, vector<2x32xf32>
    tpu.vector_store %arg9[%c0_168, %c672], %670 {strides = array<i32>} : memref<2x768xf32, #tpu.memory_space<vmem>>, vector<2x32xf32>,
    %c0_169 = arith.constant 0 : index
    %c22 = arith.constant 22 : index
    %c0_170 = arith.constant 0 : index
    %672 = vector.load %arg8[%c0_169, %c22, %c0_170] : memref<2x24x128xf32, #tpu.memory_space<vmem>>, vector<2x1x128xf32>
    %673 = vector.shape_cast %672 : vector<2x1x128xf32> to vector<2x128xf32>
    %cst_171 = arith.constant dense<0.000000e+00> : vector<2x128xf32>
    %674 = tpu.matmul %670, %9, %cst_171 {dimension_numbers = #tpu.dot_dimension_numbers<[1], [0], [0], [1], [0, 0, 1, 1], [], []>} : vector<2x32xf32>, vector<32x128xf32>, vector<2x128xf32> -> vector<2x128xf32>
    %675 = arith.addf %673, %674 : vector<2x128xf32>
    %676 = vector.extract_strided_slice %675 {offsets = [0, 0], sizes = [2, 32], strides = [1, 1]} : vector<2x128xf32> to vector<2x32xf32>
    %677 = arith.negf %676 : vector<2x32xf32>
    %678 = math.exp %677 : vector<2x32xf32>
    %cst_172 = arith.constant 1.000000e+00 : f32
    %679 = vector.broadcast %cst_172 : f32 to vector<2x32xf32>
    %680 = arith.addf %679, %678 : vector<2x32xf32>
    %681 = arith.divf %679, %680 : vector<2x32xf32>
    %682 = vector.extract_strided_slice %675 {offsets = [0, 32], sizes = [2, 32], strides = [1, 1]} : vector<2x128xf32> to vector<2x32xf32>
    %683 = arith.negf %682 : vector<2x32xf32>
    %684 = math.exp %683 : vector<2x32xf32>
    %cst_173 = arith.constant 1.000000e+00 : f32
    %685 = vector.broadcast %cst_173 : f32 to vector<2x32xf32>
    %686 = arith.addf %685, %684 : vector<2x32xf32>
    %687 = arith.divf %685, %686 : vector<2x32xf32>
    %688 = vector.extract_strided_slice %675 {offsets = [0, 64], sizes = [2, 32], strides = [1, 1]} : vector<2x128xf32> to vector<2x32xf32>
    %689 = math.tanh %688 : vector<2x32xf32>
    %690 = vector.extract_strided_slice %675 {offsets = [0, 96], sizes = [2, 32], strides = [1, 1]} : vector<2x128xf32> to vector<2x32xf32>
    %691 = arith.negf %690 : vector<2x32xf32>
    %692 = math.exp %691 : vector<2x32xf32>
    %cst_174 = arith.constant 1.000000e+00 : f32
    %693 = vector.broadcast %cst_174 : f32 to vector<2x32xf32>
    %694 = arith.addf %693, %692 : vector<2x32xf32>
    %695 = arith.divf %693, %694 : vector<2x32xf32>
    %696 = arith.mulf %687, %668 : vector<2x32xf32>
    %697 = arith.mulf %681, %689 : vector<2x32xf32>
    %698 = arith.addf %696, %697 : vector<2x32xf32>
    %699 = math.tanh %698 : vector<2x32xf32>
    %700 = arith.mulf %695, %699 : vector<2x32xf32>
    %c0_175 = arith.constant 0 : index
    %c704 = arith.constant 704 : index
    %701 = vector.load %arg9[%c0_175, %c704] : memref<2x768xf32, #tpu.memory_space<vmem>>, vector<2x32xf32>
    tpu.vector_store %arg9[%c0_175, %c704], %700 {strides = array<i32>} : memref<2x768xf32, #tpu.memory_space<vmem>>, vector<2x32xf32>,
    %c0_176 = arith.constant 0 : index
    %c23 = arith.constant 23 : index
    %c0_177 = arith.constant 0 : index
    %702 = vector.load %arg8[%c0_176, %c23, %c0_177] : memref<2x24x128xf32, #tpu.memory_space<vmem>>, vector<2x1x128xf32>
    %703 = vector.shape_cast %702 : vector<2x1x128xf32> to vector<2x128xf32>
    %cst_178 = arith.constant dense<0.000000e+00> : vector<2x128xf32>
    %704 = tpu.matmul %700, %9, %cst_178 {dimension_numbers = #tpu.dot_dimension_numbers<[1], [0], [0], [1], [0, 0, 1, 1], [], []>} : vector<2x32xf32>, vector<32x128xf32>, vector<2x128xf32> -> vector<2x128xf32>
    %705 = arith.addf %703, %704 : vector<2x128xf32>
    %706 = vector.extract_strided_slice %705 {offsets = [0, 0], sizes = [2, 32], strides = [1, 1]} : vector<2x128xf32> to vector<2x32xf32>
    %707 = arith.negf %706 : vector<2x32xf32>
    %708 = math.exp %707 : vector<2x32xf32>
    %cst_179 = arith.constant 1.000000e+00 : f32
    %709 = vector.broadcast %cst_179 : f32 to vector<2x32xf32>
    %710 = arith.addf %709, %708 : vector<2x32xf32>
    %711 = arith.divf %709, %710 : vector<2x32xf32>
    %712 = vector.extract_strided_slice %705 {offsets = [0, 32], sizes = [2, 32], strides = [1, 1]} : vector<2x128xf32> to vector<2x32xf32>
    %713 = arith.negf %712 : vector<2x32xf32>
    %714 = math.exp %713 : vector<2x32xf32>
    %cst_180 = arith.constant 1.000000e+00 : f32
    %715 = vector.broadcast %cst_180 : f32 to vector<2x32xf32>
    %716 = arith.addf %715, %714 : vector<2x32xf32>
    %717 = arith.divf %715, %716 : vector<2x32xf32>
    %718 = vector.extract_strided_slice %705 {offsets = [0, 64], sizes = [2, 32], strides = [1, 1]} : vector<2x128xf32> to vector<2x32xf32>
    %719 = math.tanh %718 : vector<2x32xf32>
    %720 = vector.extract_strided_slice %705 {offsets = [0, 96], sizes = [2, 32], strides = [1, 1]} : vector<2x128xf32> to vector<2x32xf32>
    %721 = arith.negf %720 : vector<2x32xf32>
    %722 = math.exp %721 : vector<2x32xf32>
    %cst_181 = arith.constant 1.000000e+00 : f32
    %723 = vector.broadcast %cst_181 : f32 to vector<2x32xf32>
    %724 = arith.addf %723, %722 : vector<2x32xf32>
    %725 = arith.divf %723, %724 : vector<2x32xf32>
    %726 = arith.mulf %717, %698 : vector<2x32xf32>
    %727 = arith.mulf %711, %719 : vector<2x32xf32>
    %728 = arith.addf %726, %727 : vector<2x32xf32>
    %729 = math.tanh %728 : vector<2x32xf32>
    %730 = arith.mulf %725, %729 : vector<2x32xf32>
    %c0_182 = arith.constant 0 : index
    %c736 = arith.constant 736 : index
    %731 = vector.load %arg9[%c0_182, %c736] : memref<2x768xf32, #tpu.memory_space<vmem>>, vector<2x32xf32>
    tpu.vector_store %arg9[%c0_182, %c736], %730 {strides = array<i32>} : memref<2x768xf32, #tpu.memory_space<vmem>>, vector<2x32xf32>,
    %c0_183 = arith.constant 0 : index
    %c0_184 = arith.constant 0 : index
    %732 = vector.load %arg9[%c0_183, %c0_184] : memref<2x768xf32, #tpu.memory_space<vmem>>, vector<2x768xf32>
    %c0_185 = arith.constant 0 : index
    %c0_186 = arith.constant 0 : index
    %733 = vector.load %arg5[%c0_185, %c0_186] : memref<768x18xf32, #tpu.memory_space<vmem>>, vector<768x18xf32>
    %cst_187 = arith.constant dense<0.000000e+00> : vector<2x18xf32>
    %734 = tpu.matmul %732, %733, %cst_187 {dimension_numbers = #tpu.dot_dimension_numbers<[1], [0], [0], [1], [0, 0, 1, 1], [], []>} : vector<2x768xf32>, vector<768x18xf32>, vector<2x18xf32> -> vector<2x18xf32>
    %c0_188 = arith.constant 0 : index
    %c0_189 = arith.constant 0 : index
    %735 = vector.load %arg6[%c0_188, %c0_189] : memref<1x18xf32, #tpu.memory_space<vmem>>, vector<1x18xf32>
    %736 = vector.broadcast %735 : vector<1x18xf32> to vector<2x18xf32>
    %737 = arith.addf %734, %736 : vector<2x18xf32>
    %c0_190 = arith.constant 0 : index
    %c0_191 = arith.constant 0 : index
    %738 = vector.load %arg7[%c0_190, %c0_191] : memref<2x18xf32, #tpu.memory_space<vmem>>, vector<2x18xf32>
    tpu.vector_store %arg7[%c0_190, %c0_191], %737 {strides = array<i32>} : memref<2x18xf32, #tpu.memory_space<vmem>>, vector<2x18xf32>,
    return
  }
  func.func @transform_0(%arg0: i32) -> (i32, i32, i32) {
    %c0_i32 = arith.constant 0 : i32
    %c0_i32_0 = arith.constant 0 : i32
    %c0_i32_1 = arith.constant 0 : i32
    %c0_i32_2 = arith.constant 0 : i32
    return %c0_i32, %c0_i32_0, %c0_i32_1 : i32, i32, i32
  }
  func.func @transform_1(%arg0: i32) -> (i32, i32) {
    %c0_i32 = arith.constant 0 : i32
    %c0_i32_0 = arith.constant 0 : i32
    %c0_i32_1 = arith.constant 0 : i32
    return %c0_i32, %c0_i32_0 : i32, i32
  }
  func.func @transform_2(%arg0: i32) -> (i32, i32) {
    %c0_i32 = arith.constant 0 : i32
    %c0_i32_0 = arith.constant 0 : i32
    %c0_i32_1 = arith.constant 0 : i32
    return %c0_i32, %c0_i32_0 : i32, i32
  }
  func.func @transform_3(%arg0: i32) -> (i32, i32) {
    %c0_i32 = arith.constant 0 : i32
    %c0_i32_0 = arith.constant 0 : i32
    %c0_i32_1 = arith.constant 0 : i32
    return %c0_i32, %c0_i32_0 : i32, i32
  }
  func.func @transform_4(%arg0: i32) -> (i32, i32) {
    %c0_i32 = arith.constant 0 : i32
    %c0_i32_0 = arith.constant 0 : i32
    %c0_i32_1 = arith.constant 0 : i32
    return %c0_i32, %c0_i32_0 : i32, i32
  }
  func.func @transform_5(%arg0: i32) -> (i32, i32) {
    %c0_i32 = arith.constant 0 : i32
    %c0_i32_0 = arith.constant 0 : i32
    %c0_i32_1 = arith.constant 0 : i32
    return %c0_i32, %c0_i32_0 : i32, i32
  }
  func.func @transform_6(%arg0: i32) -> (i32, i32) {
    %c0_i32 = arith.constant 0 : i32
    %c0_i32_0 = arith.constant 0 : i32
    %c0_i32_1 = arith.constant 0 : i32
    return %c0_i32, %c0_i32_0 : i32, i32
  }
}

</mosaic_0001>

<llo_original>
// kernel: lstm_model_forward.1
$region0: #{lstm_model_forward.1}
  #allocation0 [shape = 'u32[]', space=smem, size = 0x4, offset = 0x4, fixed_abs, tag = 'smem constant byte address 0x4 - core index']
  #allocation1 [shape = 'u32[144,128]{1,0:T(1,128)}', space=vmem, size = 0x12000, scoped, tag = 'internal scratch']
  #allocation2 [shape = 'f32[2,24,128]{2,1,0:T(8,128)}', space=vmem, size = 0x6000, scoped, tag = 'scratch operand']
  #allocation3 [shape = 'f32[2,768]{1,0:T(2,128)}', space=vmem, size = 0x1800, scoped, tag = 'scratch operand']
  %s0 = inlined_call_operand.vmem [shape: f32[2,24,4], index: 0, kind: input, shape index: {}]
  %s1 = inlined_call_operand.vmem [shape: f32[4,128], index: 1, kind: input, shape index: {}]
  %s2 = inlined_call_operand.vmem [shape: f32[32,128], index: 2, kind: input, shape index: {}]
  %s3 = inlined_call_operand.vmem [shape: f32[1,128], index: 3, kind: input, shape index: {}]
  %s4 = inlined_call_operand.vmem [shape: f32[768,18], index: 4, kind: input, shape index: {}]
  %s5 = inlined_call_operand.vmem [shape: f32[1,18], index: 5, kind: input, shape index: {}]
  %s6 = inlined_call_operand.vmem [shape: f32[2,18], index: 6, kind: output, shape index: {}]
  %s7 = sld [smem:[#allocation0]]
  $region34: #{lstm_model_forward.1} parent=0
    _
  %s9 = ssub.s32 1, %s7
  %s10 = scalar_select 0, %s9, %s7
  // Predicated region
  $region2: #{lstm_model_forward.1} parent=0 // pred_check
    _
  $region3: #{lstm_model_forward.1} parent=0 // pred_check_branch
    %12 = sbr.rel (0) target = $region5
  $region4: #{lstm_model_forward.1} parent=0 // pred_region
    _
  $region5: #{lstm_model_forward.1} parent=0 // pred_fallthru
    _
  // Predicated region
  $region6: #{lstm_model_forward.1} parent=0 // pred_check
    _
  $region7: #{lstm_model_forward.1} parent=0 // pred_check_branch
    %14 = sbr.rel (0) target = $region9
  $region8: #{lstm_model_forward.1} parent=0 // pred_region
    _
  $region9: #{lstm_model_forward.1} parent=0 // pred_fallthru
    _
  // Predicated region
  $region10: #{lstm_model_forward.1} parent=0 // pred_check
    _
  $region11: #{lstm_model_forward.1} parent=0 // pred_check_branch
    %16 = sbr.rel (0) target = $region13
  $region12: #{lstm_model_forward.1} parent=0 // pred_region
    _
  $region13: #{lstm_model_forward.1} parent=0 // pred_fallthru
    _
  // Predicated region
  $region14: #{lstm_model_forward.1} parent=0 // pred_check
    _
  $region15: #{lstm_model_forward.1} parent=0 // pred_check_branch
    %18 = sbr.rel (0) target = $region17
  $region16: #{lstm_model_forward.1} parent=0 // pred_region
    _
  $region17: #{lstm_model_forward.1} parent=0 // pred_fallthru
    _
  // Predicated region
  $region18: #{lstm_model_forward.1} parent=0 // pred_check
    _
  $region19: #{lstm_model_forward.1} parent=0 // pred_check_branch
    %20 = sbr.rel (0) target = $region21
  $region20: #{lstm_model_forward.1} parent=0 // pred_region
    _
  $region21: #{lstm_model_forward.1} parent=0 // pred_fallthru
    _
  // Predicated region
  $region22: #{lstm_model_forward.1} parent=0 // pred_check
    _
  $region23: #{lstm_model_forward.1} parent=0 // pred_check_branch
    %22 = sbr.rel (0) target = $region25
  $region24: #{lstm_model_forward.1} parent=0 // pred_region
    _
  $region25: #{lstm_model_forward.1} parent=0 // pred_fallthru
    _
  %v23 = vld [vmem:[%s0] sm:$0xff]
  %v24 = vld [vmem:[%s0 + $0x8] sm:$0xff]
  %v25 = vld [vmem:[%s0 + $0x10] sm:$0xff]
  %v26 = vld [vmem:[%s0 + $0x18] sm:$0xff]
  %v27 = vld [vmem:[%s0 + $0x20] sm:$0xff]
  %v28 = vld [vmem:[%s0 + $0x28] sm:$0xff]
  %v29 = vld [vmem:[%s1] sm:$0xf]
  %v30 = vld [vmem:[%s3] sm:$0x1]
  %v32 = vlaneseq
  %v33 = vshrl.u32 %v32, 7
  %v34 = vsub.s32 0, %v33
  %v35 = vrot.slane %v30, %v34
  %vm37 = vcmask 31744
  %v39 = vsel %vm37, %v23, 0
  %v42 = vsel %vm37, %v24, 0
  %v45 = vsel %vm37, %v25, 0
  %v48 = vsel %vm37, %v26, 0
  %v51 = vsel %vm37, %v27, 0
  %v54 = vsel %vm37, %v28, 0
  %vm56 = vcmask 1043456
  %v58 = vsel %vm56, %v29, 0
  %60 = vmatprep.subr.mxu0 0.0
  %61 = vmatpush1.msra.mxu0 %v58
  %62 = vmatprep.subr.mxu0 0.0
  %63 = vmatpush1.msra.mxu0 0.0
  %64 = vmatprep.subr.mxu0 0.0
  %65 = vmatpush1.msra.mxu0 0.0
  %66 = vmatprep.subr.mxu0 0.0
  %67 = vmatpush1.msra.mxu0 0.0
  %68 = vmatprep.subr.mxu0 0.0
  %69 = vmatpush1.msra.mxu0 0.0
  %70 = vmatprep.subr.mxu0 0.0
  %71 = vmatpush1.msra.mxu0 0.0
  %72 = vmatprep.subr.mxu0 0.0
  %73 = vmatpush1.msra.mxu0 0.0
  %74 = vmatprep.subr.mxu0 0.0
  %75 = vmatpush1.msra.mxu0 0.0
  %76 = vmatprep.subr.mxu0 0.0
  %77 = vmatpush1.msra.mxu0 0.0
  %78 = vmatprep.subr.mxu0 0.0
  %79 = vmatpush1.msra.mxu0 0.0
  %80 = vmatprep.subr.mxu0 0.0
  %81 = vmatpush1.msra.mxu0 0.0
  %82 = vmatprep.subr.mxu0 0.0
  %83 = vmatpush1.msra.mxu0 0.0
  %84 = vmatprep.subr.mxu0 0.0
  %85 = vmatpush1.msra.mxu0 0.0
  %86 = vmatprep.subr.mxu0 0.0
  %87 = vmatpush1.msra.mxu0 0.0
  %88 = vmatprep.subr.mxu0 0.0
  %89 = vmatpush1.msra.mxu0 0.0
  %90 = vmatprep.subr.mxu0 0.0
  %91 = vmatpush1.msra.mxu0 0.0
  %92 = vmatprep.subr.mxu0 0.0
  %93 = vmatpush1.msra.mxu0 0.0
  %94 = vmatprep.subr.mxu0 0.0
  %95 = vmatpush1.msra.mxu0 0.0
  %96 = vmatprep.subr.mxu0 0.0
  %97 = vmatpush1.msra.mxu0 0.0
  %98 = vmatprep.subr.mxu0 0.0
  %99 = vmatpush1.msra.mxu0 0.0
  %100 = vmatprep.subr.mxu0 0.0
  %101 = vmatpush1.msra.mxu0 0.0
  %102 = vmatprep.subr.mxu0 0.0
  %103 = vmatpush1.msra.mxu0 0.0
  %104 = vmatprep.subr.mxu0 0.0
  %105 = vmatpush1.msra.mxu0 0.0
  %106 = vmatprep.subr.mxu0 0.0
  %107 = vmatpush1.msra.mxu0 0.0
  %108 = vmatprep.subr.mxu0 0.0
  %109 = vmatpush1.msra.mxu0 0.0
  %110 = vmatprep.subr.mxu0 0.0
  %111 = vmatpush1.msra.mxu0 0.0
  %112 = vmatprep.subr.mxu0 0.0
  %113 = vmatpush1.msra.mxu0 0.0
  %114 = vmatprep.subr.mxu0 0.0
  %115 = vmatpush1.msra.mxu0 0.0
  %116 = vmatprep.subr.mxu0 0.0
  %117 = vmatpush1.msra.mxu0 0.0
  %118 = vmatprep.subr.mxu0 0.0
  %119 = vmatpush1.msra.mxu0 0.0
  %120 = vmatprep.subr.mxu0 0.0
  %121 = vmatpush1.msra.mxu0 0.0
  %122 = vmatprep.subr.mxu0 0.0
  %123 = vmatpush1.msra.mxu0 0.0
  %124 = vmatprep.mubr.f32.mxu0 0.0
  %125 = vmatmul.mubr.f32.gmra.mrb[0].mxu0 %v39
  %v126 = vpop.f32.mrb[0].mxu0
  %v127 = vadd.f32 %v35, %v126
  %v128 = vpop.f32.mrb[0].mxu0
  %129 = vmatprep.mubr.f32.mxu0 0.0
  %130 = vmatmul.mubr.f32.gmra.mrb[0].mxu0 %v42
  %v131 = vpop.f32.mrb[0].mxu0
  %v132 = vadd.f32 %v35, %v131
  %v133 = vpop.f32.mrb[0].mxu0
  %134 = vmatprep.mubr.f32.mxu0 0.0
  %135 = vmatmul.mubr.f32.gmra.mrb[0].mxu0 %v45
  %v136 = vpop.f32.mrb[0].mxu0
  %v137 = vadd.f32 %v35, %v136
  %v138 = vpop.f32.mrb[0].mxu0
  %139 = vmatprep.mubr.f32.mxu0 0.0
  %140 = vmatmul.mubr.f32.gmra.mrb[0].mxu0 %v48
  %v141 = vpop.f32.mrb[0].mxu0
  %v142 = vadd.f32 %v35, %v141
  %v143 = vpop.f32.mrb[0].mxu0
  %144 = vmatprep.mubr.f32.mxu0 0.0
  %145 = vmatmul.mubr.f32.gmra.mrb[0].mxu0 %v51
  %v146 = vpop.f32.mrb[0].mxu0
  %v147 = vadd.f32 %v35, %v146
  %v148 = vpop.f32.mrb[0].mxu0
  %149 = vmatprep.mubr.f32.mxu0 0.0
  %150 = vmatmul.mubr.f32.gmra.mrb[0].mxu0 %v54
  %v151 = vpop.f32.mrb[0].mxu0
  %v152 = vadd.f32 %v35, %v151
  %v153 = vpop.f32.mrb[0].mxu0
  %154 = vdwg.mxu0
  %155 = vst [vmem:[#allocation2] sm:$0xff] %v127
  %156 = vst [vmem:[#allocation2 + $0x8] sm:$0xff] %v132
  %157 = vst [vmem:[#allocation2 + $0x10] sm:$0xff] %v137
  %158 = vst [vmem:[#allocation2 + $0x18] sm:$0xff] %v142
  %159 = vst [vmem:[#allocation2 + $0x20] sm:$0xff] %v147
  %160 = vst [vmem:[#allocation2 + $0x28] sm:$0xff] %v152
  %v161 = vld [vmem:[%s2] sm:$0xff]
  %v162 = vld [vmem:[%s2 + $0x8] sm:$0xff]
  %v163 = vld [vmem:[%s2 + $0x10] sm:$0xff]
  %v164 = vld [vmem:[%s2 + $0x18] sm:$0xff]
  %v165 = vld [vmem:[#allocation2] sm:$0x1]
  %v166 = vld [vmem:[#allocation2 + $0x18] sm:$0x1]
  %vm167 = vcmask 261120
  %v169 = vsel %vm167, 0.0, 0
  %171 = vmatprep.subr.mxu0 0.0
  %172 = vmatpush1.msra.mxu0 %v161
  %173 = vmatprep.subr.mxu0 0.0
  %174 = vmatpush1.msra.mxu0 %v162
  %175 = vmatprep.subr.mxu0 0.0
  %176 = vmatpush1.msra.mxu0 %v163
  %177 = vmatprep.subr.mxu0 0.0
  %178 = vmatpush1.msra.mxu0 %v164
  %179 = vmatprep.subr.mxu0 0.0
  %180 = vmatpush1.msra.mxu0 0.0
  %181 = vmatprep.subr.mxu0 0.0
  %182 = vmatpush1.msra.mxu0 0.0
  %183 = vmatprep.subr.mxu0 0.0
  %184 = vmatpush1.msra.mxu0 0.0
  %185 = vmatprep.subr.mxu0 0.0
  %186 = vmatpush1.msra.mxu0 0.0
  %187 = vmatprep.subr.mxu0 0.0
  %188 = vmatpush1.msra.mxu0 0.0
  %189 = vmatprep.subr.mxu0 0.0
  %190 = vmatpush1.msra.mxu0 0.0
  %191 = vmatprep.subr.mxu0 0.0
  %192 = vmatpush1.msra.mxu0 0.0
  %193 = vmatprep.subr.mxu0 0.0
  %194 = vmatpush1.msra.mxu0 0.0
  %195 = vmatprep.subr.mxu0 0.0
  %196 = vmatpush1.msra.mxu0 0.0
  %197 = vmatprep.subr.mxu0 0.0
  %198 = vmatpush1.msra.mxu0 0.0
  %199 = vmatprep.subr.mxu0 0.0
  %200 = vmatpush1.msra.mxu0 0.0
  %201 = vmatprep.subr.mxu0 0.0
  %202 = vmatpush1.msra.mxu0 0.0
  %203 = vmatprep.subr.mxu0 0.0
  %204 = vmatpush1.msra.mxu0 0.0
  %205 = vmatprep.subr.mxu0 0.0
  %206 = vmatpush1.msra.mxu0 0.0
  %207 = vmatprep.subr.mxu0 0.0
  %208 = vmatpush1.msra.mxu0 0.0
  %209 = vmatprep.subr.mxu0 0.0
  %210 = vmatpush1.msra.mxu0 0.0
  %211 = vmatprep.subr.mxu0 0.0
  %212 = vmatpush1.msra.mxu0 0.0
  %213 = vmatprep.subr.mxu0 0.0
  %214 = vmatpush1.msra.mxu0 0.0
  %215 = vmatprep.subr.mxu0 0.0
  %216 = vmatpush1.msra.mxu0 0.0
  %217 = vmatprep.subr.mxu0 0.0
  %218 = vmatpush1.msra.mxu0 0.0
  %219 = vmatprep.subr.mxu0 0.0
  %220 = vmatpush1.msra.mxu0 0.0
  %221 = vmatprep.subr.mxu0 0.0
  %222 = vmatpush1.msra.mxu0 0.0
  %223 = vmatprep.subr.mxu0 0.0
  %224 = vmatpush1.msra.mxu0 0.0
  %225 = vmatprep.subr.mxu0 0.0
  %226 = vmatpush1.msra.mxu0 0.0
  %227 = vmatprep.subr.mxu0 0.0
  %228 = vmatpush1.msra.mxu0 0.0
  %229 = vmatprep.subr.mxu0 0.0
  %230 = vmatpush1.msra.mxu0 0.0
  %231 = vmatprep.subr.mxu0 0.0
  %232 = vmatpush1.msra.mxu0 0.0
  %233 = vmatprep.subr.mxu0 0.0
  %234 = vmatpush1.msra.mxu0 0.0
  %235 = vmatprep.mubr.f32.mxu0 0.0
  %236 = vmatmul.mubr.f32.gmra.mrb[0].mxu0 %v169
  %v237 = vpop.f32.mrb[0].mxu0
  %v238 = vadd.f32 0.0, %v237
  %v239 = vpop.f32.mrb[0].mxu0
  %240 = vdwg.mxu0
  %v242 = vrot.slane %v238, 1
  %v245 = vadd.f32 %v165, %v238
  %v246 = vadd.f32 %v166, %v242
  %v247 = vxor.u32 %v245, 2147483648
  %v248 = vxor.u32 %v246, 2147483648
  %v249 = vmul.f32 %v247, 1.442695
  %v250 = vpow.pop %v249
  %v251 = vmul.f32 %v248, 1.442695
  %v252 = vpow.pop %v251
  %v253 = vadd.f32 %v250, 1.0
  %v254 = vadd.f32 %v252, 1.0
  %v255 = vrcp.pop %v253
  %v256 = vmul.f32 1.0, %v255
  %v257 = vrcp.pop %v254
  %v258 = vmul.f32 1.0, %v257
  %v259 = vtanh.pop %v245
  %v260 = vtanh.pop %v246
  %v261 = vmul.f32 %v256, 0.0
  %v262 = vmul.f32 %v258, 0.0
  %265 = vrot.lane.b32.xlu0 %v259, 64
  %v266 = vpop.permute.xlu0 %265
  %267 = vrot.lane.b32.xlu0 %v260, 64
  %v268 = vpop.permute.xlu0 %267
  %v271 = vmul.f32 %v256, %v266
  %v272 = vmul.f32 %v258, %v268
  %275 = vrot.lane.b32.xlu0 %v271, 32
  %v276 = vpop.permute.xlu0 %275
  %277 = vrot.lane.b32.xlu0 %v272, 32
  %v278 = vpop.permute.xlu0 %277
  %v281 = vadd.f32 %v261, %v276
  %v282 = vadd.f32 %v262, %v278
  %v283 = vtanh.pop %v281
  %v284 = vtanh.pop %v282
  %287 = vrot.lane.b32.xlu0 %v283, 64
  %v288 = vpop.permute.xlu0 %287
  %289 = vrot.lane.b32.xlu0 %v284, 64
  %v290 = vpop.permute.xlu0 %289
  %v293 = vmul.f32 %v256, %v288
  %v294 = vmul.f32 %v258, %v290
  %v298 = vunpack.c.l.s4 1983009808
  %v299 = vunpack.c.0.s8 %v298
  %v300 = vlaneseq
  %v301 = vshrl.u32 %v300, 7
  %v302 = vsub.s32 %v299, %v301
  %v303 = vrot.slane %v293, %v302
  %v305 = vunpack.c.l.s4 1983009808
  %v306 = vunpack.c.0.s8 %v305
  %v307 = vlaneseq
  %v308 = vshrl.u32 %v307, 7
  %v309 = vsub.s32 %v306, %v308
  %v310 = vrot.slane %v294, %v309
  %vm311 = vcmask 1044484
  %v312 = vsel %vm311, %v303, %v303
  %vm313 = vcmask 1046534
  %v314 = vsel %vm313, %v303, %v312
  %v315 = vrot.slane %v310, 7
  %vm316 = vcmask 1041409
  %v317 = vsel %vm316, %v315, %v314
  %vm318 = vcmask 1043459
  %v319 = vsel %vm318, %v315, %v317
  %vm320 = vcmask 1045509
  %v321 = vsel %vm320, %v315, %v319
  %vm322 = vcmask 1047559
  %v323 = vsel %vm322, %v315, %v321
  %324 = vrot.lane.b32.xlu0 %v323, 32
  %v325 = vpop.permute.xlu0 %324
  %vm327 = vcmask 254976
  %328 = vst.msk [vmem:[#allocation3] sm:$0x3] %vm327, %v325
  %v329 = vld [vmem:[#allocation2 + $0x1] sm:$0x1]
  %v330 = vld [vmem:[#allocation2 + $0x19] sm:$0x1]
  %v331 = vrot.slane %v294, 7
  %v332 = vsel %vm316, %v331, %v293
  %333 = vrot.lane.b32.xlu0 %v332, 32
  %v334 = vpop.permute.xlu0 %333
  %v335 = vsel %vm167, %v334, 0
  %337 = vmatprep.subr.mxu0 0.0
  %338 = vmatpush1.msra.mxu0 %v161
  %339 = vmatprep.subr.mxu0 0.0
  %340 = vmatpush1.msra.mxu0 %v162
  %341 = vmatprep.subr.mxu0 0.0
  %342 = vmatpush1.msra.mxu0 %v163
  %343 = vmatprep.subr.mxu0 0.0
  %344 = vmatpush1.msra.mxu0 %v164
  %345 = vmatprep.subr.mxu0 0.0
  %346 = vmatpush1.msra.mxu0 0.0
  %347 = vmatprep.subr.mxu0 0.0
  %348 = vmatpush1.msra.mxu0 0.0
  %349 = vmatprep.subr.mxu0 0.0
  %350 = vmatpush1.msra.mxu0 0.0
  %351 = vmatprep.subr.mxu0 0.0
  %352 = vmatpush1.msra.mxu0 0.0
  %353 = vmatprep.subr.mxu0 0.0
  %354 = vmatpush1.msra.mxu0 0.0
  %355 = vmatprep.subr.mxu0 0.0
  %356 = vmatpush1.msra.mxu0 0.0
  %357 = vmatprep.subr.mxu0 0.0
  %358 = vmatpush1.msra.mxu0 0.0
  %359 = vmatprep.subr.mxu0 0.0
  %360 = vmatpush1.msra.mxu0 0.0
  %361 = vmatprep.subr.mxu0 0.0
  %362 = vmatpush1.msra.mxu0 0.0
  %363 = vmatprep.subr.mxu0 0.0
  %364 = vmatpush1.msra.mxu0 0.0
  %365 = vmatprep.subr.mxu0 0.0
  %366 = vmatpush1.msra.mxu0 0.0
  %367 = vmatprep.subr.mxu0 0.0
  %368 = vmatpush1.msra.mxu0 0.0
  %369 = vmatprep.subr.mxu0 0.0
  %370 = vmatpush1.msra.mxu0 0.0
  %371 = vmatprep.subr.mxu0 0.0
  %372 = vmatpush1.msra.mxu0 0.0
  %373 = vmatprep.subr.mxu0 0.0
  %374 = vmatpush1.msra.mxu0 0.0
  %375 = vmatprep.subr.mxu0 0.0
  %376 = vmatpush1.msra.mxu0 0.0
  %377 = vmatprep.subr.mxu0 0.0
  %378 = vmatpush1.msra.mxu0 0.0
  %379 = vmatprep.subr.mxu0 0.0
  %380 = vmatpush1.msra.mxu0 0.0
  %381 = vmatprep.subr.mxu0 0.0
  %382 = vmatpush1.msra.mxu0 0.0
  %383 = vmatprep.subr.mxu0 0.0
  %384 = vmatpush1.msra.mxu0 0.0
  %385 = vmatprep.subr.mxu0 0.0
  %386 = vmatpush1.msra.mxu0 0.0
  %387 = vmatprep.subr.mxu0 0.0
  %388 = vmatpush1.msra.mxu0 0.0
  %389 = vmatprep.subr.mxu0 0.0
  %390 = vmatpush1.msra.mxu0 0.0
  %391 = vmatprep.subr.mxu0 0.0
  %392 = vmatpush1.msra.mxu0 0.0
  %393 = vmatprep.subr.mxu0 0.0
  %394 = vmatpush1.msra.mxu0 0.0
  %395 = vmatprep.subr.mxu0 0.0
  %396 = vmatpush1.msra.mxu0 0.0
  %397 = vmatprep.subr.mxu0 0.0
  %398 = vmatpush1.msra.mxu0 0.0
  %399 = vmatprep.subr.mxu0 0.0
  %400 = vmatpush1.msra.mxu0 0.0
  %401 = vmatprep.mubr.f32.mxu0 0.0
  %402 = vmatmul.mubr.f32.gmra.mrb[0].mxu0 %v335
  %v403 = vpop.f32.mrb[0].mxu0
  %v404 = vadd.f32 0.0, %v403
  %v405 = vpop.f32.mrb[0].mxu0
  %406 = vdwg.mxu0
  %v408 = vrot.slane %v404, 1
  %v411 = vadd.f32 %v329, %v404
  %v412 = vadd.f32 %v330, %v408
  %v413 = vxor.u32 %v411, 2147483648
  %v414 = vxor.u32 %v412, 2147483648
  %v415 = vmul.f32 %v413, 1.442695
  %v416 = vpow.pop %v415
  %v417 = vmul.f32 %v414, 1.442695
  %v418 = vpow.pop %v417
  %v419 = vadd.f32 %v416, 1.0
  %v420 = vadd.f32 %v418, 1.0
  %v421 = vrcp.pop %v419
  %v422 = vmul.f32 1.0, %v421
  %v423 = vrcp.pop %v420
  %v424 = vmul.f32 1.0, %v423
  %v425 = vtanh.pop %v411
  %v426 = vtanh.pop %v412
  %v427 = vmul.f32 %v422, %v281
  %v428 = vmul.f32 %v424, %v282
  %431 = vrot.lane.b32.xlu0 %v425, 64
  %v432 = vpop.permute.xlu0 %431
  %433 = vrot.lane.b32.xlu0 %v426, 64
  %v434 = vpop.permute.xlu0 %433
  %v437 = vmul.f32 %v422, %v432
  %v438 = vmul.f32 %v424, %v434
  %441 = vrot.lane.b32.xlu0 %v437, 32
  %v442 = vpop.permute.xlu0 %441
  %443 = vrot.lane.b32.xlu0 %v438, 32
  %v444 = vpop.permute.xlu0 %443
  %v447 = vadd.f32 %v427, %v442
  %v448 = vadd.f32 %v428, %v444
  %v449 = vtanh.pop %v447
  %v450 = vtanh.pop %v448
  %453 = vrot.lane.b32.xlu0 %v449, 64
  %v454 = vpop.permute.xlu0 %453
  %455 = vrot.lane.b32.xlu0 %v450, 64
  %v456 = vpop.permute.xlu0 %455
  %v459 = vmul.f32 %v422, %v454
  %v460 = vmul.f32 %v424, %v456
  %v464 = vunpack.c.l.s4 1983009808
  %v465 = vunpack.c.0.s8 %v464
  %v466 = vlaneseq
  %v467 = vshrl.u32 %v466, 7
  %v468 = vsub.s32 %v465, %v467
  %v469 = vrot.slane %v459, %v468
  %v471 = vunpack.c.l.s4 1983009808
  %v472 = vunpack.c.0.s8 %v471
  %v473 = vlaneseq
  %v474 = vshrl.u32 %v473, 7
  %v475 = vsub.s32 %v472, %v474
  %v476 = vrot.slane %v460, %v475
  %v477 = vsel %vm311, %v469, %v469
  %v478 = vsel %vm313, %v469, %v477
  %v479 = vrot.slane %v476, 7
  %v480 = vsel %vm316, %v479, %v478
  %v481 = vsel %vm318, %v479, %v480
  %v482 = vsel %vm320, %v479, %v481
  %v483 = vsel %vm322, %v479, %v482
  %484 = vrot.lane.b32.xlu0 %v483, 64
  %v485 = vpop.permute.xlu0 %484
  %vm487 = vcmask 517376
  %488 = vst.msk [vmem:[#allocation3] sm:$0x3] %vm487, %v485
  %v489 = vld [vmem:[#allocation2 + $0x2] sm:$0x1]
  %v490 = vld [vmem:[#allocation2 + $0x1a] sm:$0x1]
  %v491 = vrot.slane %v460, 7
  %v492 = vsel %vm316, %v491, %v459
  %493 = vrot.lane.b32.xlu0 %v492, 32
  %v494 = vpop.permute.xlu0 %493
  %v495 = vsel %vm167, %v494, 0
  %497 = vmatprep.subr.mxu0 0.0
  %498 = vmatpush1.msra.mxu0 %v161
  %499 = vmatprep.subr.mxu0 0.0
  %500 = vmatpush1.msra.mxu0 %v162
  %501 = vmatprep.subr.mxu0 0.0
  %502 = vmatpush1.msra.mxu0 %v163
  %503 = vmatprep.subr.mxu0 0.0
  %504 = vmatpush1.msra.mxu0 %v164
  %505 = vmatprep.subr.mxu0 0.0
  %506 = vmatpush1.msra.mxu0 0.0
  %507 = vmatprep.subr.mxu0 0.0
  %508 = vmatpush1.msra.mxu0 0.0
  %509 = vmatprep.subr.mxu0 0.0
  %510 = vmatpush1.msra.mxu0 0.0
  %511 = vmatprep.subr.mxu0 0.0
  %512 = vmatpush1.msra.mxu0 0.0
  %513 = vmatprep.subr.mxu0 0.0
  %514 = vmatpush1.msra.mxu0 0.0
  %515 = vmatprep.subr.mxu0 0.0
  %516 = vmatpush1.msra.mxu0 0.0
  %517 = vmatprep.subr.mxu0 0.0
  %518 = vmatpush1.msra.mxu0 0.0
  %519 = vmatprep.subr.mxu0 0.0
  %520 = vmatpush1.msra.mxu0 0.0
  %521 = vmatprep.subr.mxu0 0.0
  %522 = vmatpush1.msra.mxu0 0.0
  %523 = vmatprep.subr.mxu0 0.0
  %524 = vmatpush1.msra.mxu0 0.0
  %525 = vmatprep.subr.mxu0 0.0
  %526 = vmatpush1.msra.mxu0 0.0
  %527 = vmatprep.subr.mxu0 0.0
  %528 = vmatpush1.msra.mxu0 0.0
  %529 = vmatprep.subr.mxu0 0.0
  %530 = vmatpush1.msra.mxu0 0.0
  %531 = vmatprep.subr.mxu0 0.0
  %532 = vmatpush1.msra.mxu0 0.0
  %533 = vmatprep.subr.mxu0 0.0
  %534 = vmatpush1.msra.mxu0 0.0
  %535 = vmatprep.subr.mxu0 0.0
  %536 = vmatpush1.msra.mxu0 0.0
  %537 = vmatprep.subr.mxu0 0.0
  %538 = vmatpush1.msra.mxu0 0.0
  %539 = vmatprep.subr.mxu0 0.0
  %540 = vmatpush1.msra.mxu0 0.0
  %541 = vmatprep.subr.mxu0 0.0
  %542 = vmatpush1.msra.mxu0 0.0
  %543 = vmatprep.subr.mxu0 0.0
  %544 = vmatpush1.msra.mxu0 0.0
  %545 = vmatprep.subr.mxu0 0.0
  %546 = vmatpush1.msra.mxu0 0.0
  %547 = vmatprep.subr.mxu0 0.0
  %548 = vmatpush1.msra.mxu0 0.0
  %549 = vmatprep.subr.mxu0 0.0
  %550 = vmatpush1.msra.mxu0 0.0
  %551 = vmatprep.subr.mxu0 0.0
  %552 = vmatpush1.msra.mxu0 0.0
  %553 = vmatprep.subr.mxu0 0.0
  %554 = vmatpush1.msra.mxu0 0.0
  %555 = vmatprep.subr.mxu0 0.0
  %556 = vmatpush1.msra.mxu0 0.0
  %557 = vmatprep.subr.mxu0 0.0
  %558 = vmatpush1.msra.mxu0 0.0
  %559 = vmatprep.subr.mxu0 0.0
  %560 = vmatpush1.msra.mxu0 0.0
  %561 = vmatprep.mubr.f32.mxu0 0.0
  %562 = vmatmul.mubr.f32.gmra.mrb[0].mxu0 %v495
  %v563 = vpop.f32.mrb[0].mxu0
  %v564 = vadd.f32 0.0, %v563
  %v565 = vpop.f32.mrb[0].mxu0
  %566 = vdwg.mxu0
  %v568 = vrot.slane %v564, 1
  %v571 = vadd.f32 %v489, %v564
  %v572 = vadd.f32 %v490, %v568
  %v573 = vxor.u32 %v571, 2147483648
  %v574 = vxor.u32 %v572, 2147483648
  %v575 = vmul.f32 %v573, 1.442695
  %v576 = vpow.pop %v575
  %v577 = vmul.f32 %v574, 1.442695
  %v578 = vpow.pop %v577
  %v579 = vadd.f32 %v576, 1.0
  %v580 = vadd.f32 %v578, 1.0
  %v581 = vrcp.pop %v579
  %v582 = vmul.f32 1.0, %v581
  %v583 = vrcp.pop %v580
  %v584 = vmul.f32 1.0, %v583
  %v585 = vtanh.pop %v571
  %v586 = vtanh.pop %v572
  %v587 = vmul.f32 %v582, %v447
  %v588 = vmul.f32 %v584, %v448
  %591 = vrot.lane.b32.xlu0 %v585, 64
  %v592 = vpop.permute.xlu0 %591
  %593 = vrot.lane.b32.xlu0 %v586, 64
  %v594 = vpop.permute.xlu0 %593
  %v597 = vmul.f32 %v582, %v592
  %v598 = vmul.f32 %v584, %v594
  %601 = vrot.lane.b32.xlu0 %v597, 32
  %v602 = vpop.permute.xlu0 %601
  %603 = vrot.lane.b32.xlu0 %v598, 32
  %v604 = vpop.permute.xlu0 %603
  %v607 = vadd.f32 %v587, %v602
  %v608 = vadd.f32 %v588, %v604
  %v609 = vtanh.pop %v607
  %v610 = vtanh.pop %v608
  %613 = vrot.lane.b32.xlu0 %v609, 64
  %v614 = vpop.permute.xlu0 %613
  %615 = vrot.lane.b32.xlu0 %v610, 64
  %v616 = vpop.permute.xlu0 %615
  %v619 = vmul.f32 %v582, %v614
  %v620 = vmul.f32 %v584, %v616
  %v624 = vunpack.c.l.s4 1983009808
  %v625 = vunpack.c.0.s8 %v624
  %v626 = vlaneseq
  %v627 = vshrl.u32 %v626, 7
  %v628 = vsub.s32 %v625, %v627
  %v629 = vrot.slane %v619, %v628
  %v631 = vunpack.c.l.s4 1983009808
  %v632 = vunpack.c.0.s8 %v631
  %v633 = vlaneseq
  %v634 = vshrl.u32 %v633, 7
  %v635 = vsub.s32 %v632, %v634
  %v636 = vrot.slane %v620, %v635
  %v637 = vsel %vm311, %v629, %v629
  %v638 = vsel %vm313, %v629, %v637
  %v639 = vrot.slane %v636, 7
  %v640 = vsel %vm316, %v639, %v638
  %v641 = vsel %vm318, %v639, %v640
  %v642 = vsel %vm320, %v639, %v641
  %v643 = vsel %vm322, %v639, %v642
  %644 = vrot.lane.b32.xlu0 %v643, 96
  %v645 = vpop.permute.xlu0 %644
  %vm647 = vcmask 779776
  %648 = vst.msk [vmem:[#allocation3] sm:$0x3] %vm647, %v645
  %v649 = vld [vmem:[#allocation2 + $0x3] sm:$0x1]
  %v650 = vld [vmem:[#allocation2 + $0x1b] sm:$0x1]
  %v651 = vrot.slane %v620, 7
  %v652 = vsel %vm316, %v651, %v619
  %653 = vrot.lane.b32.xlu0 %v652, 32
  %v654 = vpop.permute.xlu0 %653
  %v655 = vsel %vm167, %v654, 0
  %657 = vmatprep.subr.mxu0 0.0
  %658 = vmatpush1.msra.mxu0 %v161
  %659 = vmatprep.subr.mxu0 0.0
  %660 = vmatpush1.msra.mxu0 %v162
  %661 = vmatprep.subr.mxu0 0.0
  %662 = vmatpush1.msra.mxu0 %v163
  %663 = vmatprep.subr.mxu0 0.0
  %664 = vmatpush1.msra.mxu0 %v164
  %665 = vmatprep.subr.mxu0 0.0
  %666 = vmatpush1.msra.mxu0 0.0
  %667 = vmatprep.subr.mxu0 0.0
  %668 = vmatpush1.msra.mxu0 0.0
  %669 = vmatprep.subr.mxu0 0.0
  %670 = vmatpush1.msra.mxu0 0.0
  %671 = vmatprep.subr.mxu0 0.0
  %672 = vmatpush1.msra.mxu0 0.0
  %673 = vmatprep.subr.mxu0 0.0
  %674 = vmatpush1.msra.mxu0 0.0
  %675 = vmatprep.subr.mxu0 0.0
  %676 = vmatpush1.msra.mxu0 0.0
  %677 = vmatprep.subr.mxu0 0.0
  %678 = vmatpush1.msra.mxu0 0.0
  %679 = vmatprep.subr.mxu0 0.0
  %680 = vmatpush1.msra.mxu0 0.0
  %681 = vmatprep.subr.mxu0 0.0
  %682 = vmatpush1.msra.mxu0 0.0
  %683 = vmatprep.subr.mxu0 0.0
  %684 = vmatpush1.msra.mxu0 0.0
  %685 = vmatprep.subr.mxu0 0.0
  %686 = vmatpush1.msra.mxu0 0.0
  %687 = vmatprep.subr.mxu0 0.0
  %688 = vmatpush1.msra.mxu0 0.0
  %689 = vmatprep.subr.mxu0 0.0
  %690 = vmatpush1.msra.mxu0 0.0
  %691 = vmatprep.subr.mxu0 0.0
  %692 = vmatpush1.msra.mxu0 0.0
  %693 = vmatprep.subr.mxu0 0.0
  %694 = vmatpush1.msra.mxu0 0.0
  %695 = vmatprep.subr.mxu0 0.0
  %696 = vmatpush1.msra.mxu0 0.0
  %697 = vmatprep.subr.mxu0 0.0
  %698 = vmatpush1.msra.mxu0 0.0
  %699 = vmatprep.subr.mxu0 0.0
  %700 = vmatpush1.msra.mxu0 0.0
  %701 = vmatprep.subr.mxu0 0.0
  %702 = vmatpush1.msra.mxu0 0.0
  %703 = vmatprep.subr.mxu0 0.0
  %704 = vmatpush1.msra.mxu0 0.0
  %705 = vmatprep.subr.mxu0 0.0
  %706 = vmatpush1.msra.mxu0 0.0
  %707 = vmatprep.subr.mxu0 0.0
  %708 = vmatpush1.msra.mxu0 0.0
  %709 = vmatprep.subr.mxu0 0.0
  %710 = vmatpush1.msra.mxu0 0.0
  %711 = vmatprep.subr.mxu0 0.0
  %712 = vmatpush1.msra.mxu0 0.0
  %713 = vmatprep.subr.mxu0 0.0
  %714 = vmatpush1.msra.mxu0 0.0
  %715 = vmatprep.subr.mxu0 0.0
  %716 = vmatpush1.msra.mxu0 0.0
  %717 = vmatprep.subr.mxu0 0.0
  %718 = vmatpush1.msra.mxu0 0.0
  %719 = vmatprep.subr.mxu0 0.0
  %720 = vmatpush1.msra.mxu0 0.0
  %721 = vmatprep.mubr.f32.mxu0 0.0
  %722 = vmatmul.mubr.f32.gmra.mrb[0].mxu0 %v655
  %v723 = vpop.f32.mrb[0].mxu0
  %v724 = vadd.f32 0.0, %v723
  %v725 = vpop.f32.mrb[0].mxu0
  %726 = vdwg.mxu0
  %v728 = vrot.slane %v724, 1
  %v731 = vadd.f32 %v649, %v724
  %v732 = vadd.f32 %v650, %v728
  %v733 = vxor.u32 %v731, 2147483648
  %v734 = vxor.u32 %v732, 2147483648
  %v735 = vmul.f32 %v733, 1.442695
  %v736 = vpow.pop %v735
  %v737 = vmul.f32 %v734, 1.442695
  %v738 = vpow.pop %v737
  %v739 = vadd.f32 %v736, 1.0
  %v740 = vadd.f32 %v738, 1.0
  %v741 = vrcp.pop %v739
  %v742 = vmul.f32 1.0, %v741
  %v743 = vrcp.pop %v740
  %v744 = vmul.f32 1.0, %v743
  %v745 = vtanh.pop %v731
  %v746 = vtanh.pop %v732
  %v747 = vmul.f32 %v742, %v607
  %v748 = vmul.f32 %v744, %v608
  %751 = vrot.lane.b32.xlu0 %v745, 64
  %v752 = vpop.permute.xlu0 %751
  %753 = vrot.lane.b32.xlu0 %v746, 64
  %v754 = vpop.permute.xlu0 %753
  %v757 = vmul.f32 %v742, %v752
  %v758 = vmul.f32 %v744, %v754
  %761 = vrot.lane.b32.xlu0 %v757, 32
  %v762 = vpop.permute.xlu0 %761
  %763 = vrot.lane.b32.xlu0 %v758, 32
  %v764 = vpop.permute.xlu0 %763
  %v767 = vadd.f32 %v747, %v762
  %v768 = vadd.f32 %v748, %v764
  %v769 = vtanh.pop %v767
  %v770 = vtanh.pop %v768
  %773 = vrot.lane.b32.xlu0 %v769, 64
  %v774 = vpop.permute.xlu0 %773
  %775 = vrot.lane.b32.xlu0 %v770, 64
  %v776 = vpop.permute.xlu0 %775
  %v779 = vmul.f32 %v742, %v774
  %v780 = vmul.f32 %v744, %v776
  %v784 = vunpack.c.l.s4 1983009808
  %v785 = vunpack.c.0.s8 %v784
  %v786 = vlaneseq
  %v787 = vshrl.u32 %v786, 7
  %v788 = vsub.s32 %v785, %v787
  %v789 = vrot.slane %v779, %v788
  %v791 = vunpack.c.l.s4 1983009808
  %v792 = vunpack.c.0.s8 %v791
  %v793 = vlaneseq
  %v794 = vshrl.u32 %v793, 7
  %v795 = vsub.s32 %v792, %v794
  %v796 = vrot.slane %v780, %v795
  %v797 = vsel %vm311, %v789, %v789
  %v798 = vsel %vm313, %v789, %v797
  %v799 = vrot.slane %v796, 7
  %v800 = vsel %vm316, %v799, %v798
  %v801 = vsel %vm318, %v799, %v800
  %v802 = vsel %vm320, %v799, %v801
  %v803 = vsel %vm322, %v799, %v802
  %vm805 = vcmask 1042176
  %806 = vst.msk [vmem:[#allocation3] sm:$0x3] %vm805, %v803
  %v807 = vld [vmem:[#allocation2 + $0x4] sm:$0x1]
  %v808 = vld [vmem:[#allocation2 + $0x1c] sm:$0x1]
  %v809 = vrot.slane %v780, 7
  %v810 = vsel %vm316, %v809, %v779
  %811 = vrot.lane.b32.xlu0 %v810, 32
  %v812 = vpop.permute.xlu0 %811
  %v813 = vsel %vm167, %v812, 0
  %815 = vmatprep.subr.mxu0 0.0
  %816 = vmatpush1.msra.mxu0 %v161
  %817 = vmatprep.subr.mxu0 0.0
  %818 = vmatpush1.msra.mxu0 %v162
  %819 = vmatprep.subr.mxu0 0.0
  %820 = vmatpush1.msra.mxu0 %v163
  %821 = vmatprep.subr.mxu0 0.0
  %822 = vmatpush1.msra.mxu0 %v164
  %823 = vmatprep.subr.mxu0 0.0
  %824 = vmatpush1.msra.mxu0 0.0
  %825 = vmatprep.subr.mxu0 0.0
  %826 = vmatpush1.msra.mxu0 0.0
  %827 = vmatprep.subr.mxu0 0.0
  %828 = vmatpush1.msra.mxu0 0.0
  %829 = vmatprep.subr.mxu0 0.0
  %830 = vmatpush1.msra.mxu0 0.0
  %831 = vmatprep.subr.mxu0 0.0
  %832 = vmatpush1.msra.mxu0 0.0
  %833 = vmatprep.subr.mxu0 0.0
  %834 = vmatpush1.msra.mxu0 0.0
  %835 = vmatprep.subr.mxu0 0.0
  %836 = vmatpush1.msra.mxu0 0.0
  %837 = vmatprep.subr.mxu0 0.0
  %838 = vmatpush1.msra.mxu0 0.0
  %839 = vmatprep.subr.mxu0 0.0
  %840 = vmatpush1.msra.mxu0 0.0
  %841 = vmatprep.subr.mxu0 0.0
  %842 = vmatpush1.msra.mxu0 0.0
  %843 = vmatprep.subr.mxu0 0.0
  %844 = vmatpush1.msra.mxu0 0.0
  %845 = vmatprep.subr.mxu0 0.0
  %846 = vmatpush1.msra.mxu0 0.0
  %847 = vmatprep.subr.mxu0 0.0
  %848 = vmatpush1.msra.mxu0 0.0
  %849 = vmatprep.subr.mxu0 0.0
  %850 = vmatpush1.msra.mxu0 0.0
  %851 = vmatprep.subr.mxu0 0.0
  %852 = vmatpush1.msra.mxu0 0.0
  %853 = vmatprep.subr.mxu0 0.0
  %854 = vmatpush1.msra.mxu0 0.0
  %855 = vmatprep.subr.mxu0 0.0
  %856 = vmatpush1.msra.mxu0 0.0
  %857 = vmatprep.subr.mxu0 0.0
  %858 = vmatpush1.msra.mxu0 0.0
  %859 = vmatprep.subr.mxu0 0.0
  %860 = vmatpush1.msra.mxu0 0.0
  %861 = vmatprep.subr.mxu0 0.0
  %862 = vmatpush1.msra.mxu0 0.0
  %863 = vmatprep.subr.mxu0 0.0
  %864 = vmatpush1.msra.mxu0 0.0
  %865 = vmatprep.subr.mxu0 0.0
  %866 = vmatpush1.msra.mxu0 0.0
  %867 = vmatprep.subr.mxu0 0.0
  %868 = vmatpush1.msra.mxu0 0.0
  %869 = vmatprep.subr.mxu0 0.0
  %870 = vmatpush1.msra.mxu0 0.0
  %871 = vmatprep.subr.mxu0 0.0
  %872 = vmatpush1.msra.mxu0 0.0
  %873 = vmatprep.subr.mxu0 0.0
  %874 = vmatpush1.msra.mxu0 0.0
  %875 = vmatprep.subr.mxu0 0.0
  %876 = vmatpush1.msra.mxu0 0.0
  %877 = vmatprep.subr.mxu0 0.0
  %878 = vmatpush1.msra.mxu0 0.0
  %879 = vmatprep.mubr.f32.mxu0 0.0
  %880 = vmatmul.mubr.f32.gmra.mrb[0].mxu0 %v813
  %v881 = vpop.f32.mrb[0].mxu0
  %v882 = vadd.f32 0.0, %v881
  %v883 = vpop.f32.mrb[0].mxu0
  %884 = vdwg.mxu0
  %v886 = vrot.slane %v882, 1
  %v889 = vadd.f32 %v807, %v882
  %v890 = vadd.f32 %v808, %v886
  %v891 = vxor.u32 %v889, 2147483648
  %v892 = vxor.u32 %v890, 2147483648
  %v893 = vmul.f32 %v891, 1.442695
  %v894 = vpow.pop %v893
  %v895 = vmul.f32 %v892, 1.442695
  %v896 = vpow.pop %v895
  %v897 = vadd.f32 %v894, 1.0
  %v898 = vadd.f32 %v896, 1.0
  %v899 = vrcp.pop %v897
  %v900 = vmul.f32 1.0, %v899
  %v901 = vrcp.pop %v898
  %v902 = vmul.f32 1.0, %v901
  %v903 = vtanh.pop %v889
  %v904 = vtanh.pop %v890
  %v905 = vmul.f32 %v900, %v767
  %v906 = vmul.f32 %v902, %v768
  %909 = vrot.lane.b32.xlu0 %v903, 64
  %v910 = vpop.permute.xlu0 %909
  %911 = vrot.lane.b32.xlu0 %v904, 64
  %v912 = vpop.permute.xlu0 %911
  %v915 = vmul.f32 %v900, %v910
  %v916 = vmul.f32 %v902, %v912
  %919 = vrot.lane.b32.xlu0 %v915, 32
  %v920 = vpop.permute.xlu0 %919
  %921 = vrot.lane.b32.xlu0 %v916, 32
  %v922 = vpop.permute.xlu0 %921
  %v925 = vadd.f32 %v905, %v920
  %v926 = vadd.f32 %v906, %v922
  %v927 = vtanh.pop %v925
  %v928 = vtanh.pop %v926
  %931 = vrot.lane.b32.xlu0 %v927, 64
  %v932 = vpop.permute.xlu0 %931
  %933 = vrot.lane.b32.xlu0 %v928, 64
  %v934 = vpop.permute.xlu0 %933
  %v937 = vmul.f32 %v900, %v932
  %v938 = vmul.f32 %v902, %v934
  %v942 = vunpack.c.l.s4 1983009808
  %v943 = vunpack.c.0.s8 %v942
  %v944 = vlaneseq
  %v945 = vshrl.u32 %v944, 7
  %v946 = vsub.s32 %v943, %v945
  %v947 = vrot.slane %v937, %v946
  %v949 = vunpack.c.l.s4 1983009808
  %v950 = vunpack.c.0.s8 %v949
  %v951 = vlaneseq
  %v952 = vshrl.u32 %v951, 7
  %v953 = vsub.s32 %v950, %v952
  %v954 = vrot.slane %v938, %v953
  %v955 = vsel %vm311, %v947, %v947
  %v956 = vsel %vm313, %v947, %v955
  %v957 = vrot.slane %v954, 7
  %v958 = vsel %vm316, %v957, %v956
  %v959 = vsel %vm318, %v957, %v958
  %v960 = vsel %vm320, %v957, %v959
  %v961 = vsel %vm322, %v957, %v960
  %962 = vrot.lane.b32.xlu0 %v961, 32
  %v963 = vpop.permute.xlu0 %962
  %965 = vst.msk [vmem:[#allocation3 + $0x2] sm:$0x3] %vm327, %v963
  %v966 = vld [vmem:[#allocation2 + $0x5] sm:$0x1]
  %v967 = vld [vmem:[#allocation2 + $0x1d] sm:$0x1]
  %v968 = vrot.slane %v938, 7
  %v969 = vsel %vm316, %v968, %v937
  %970 = vrot.lane.b32.xlu0 %v969, 32
  %v971 = vpop.permute.xlu0 %970
  %v972 = vsel %vm167, %v971, 0
  %974 = vmatprep.subr.mxu0 0.0
  %975 = vmatpush1.msra.mxu0 %v161
  %976 = vmatprep.subr.mxu0 0.0
  %977 = vmatpush1.msra.mxu0 %v162
  %978 = vmatprep.subr.mxu0 0.0
  %979 = vmatpush1.msra.mxu0 %v163
  %980 = vmatprep.subr.mxu0 0.0
  %981 = vmatpush1.msra.mxu0 %v164
  %982 = vmatprep.subr.mxu0 0.0
  %983 = vmatpush1.msra.mxu0 0.0
  %984 = vmatprep.subr.mxu0 0.0
  %985 = vmatpush1.msra.mxu0 0.0
  %986 = vmatprep.subr.mxu0 0.0
  %987 = vmatpush1.msra.mxu0 0.0
  %988 = vmatprep.subr.mxu0 0.0
  %989 = vmatpush1.msra.mxu0 0.0
  %990 = vmatprep.subr.mxu0 0.0
  %991 = vmatpush1.msra.mxu0 0.0
  %992 = vmatprep.subr.mxu0 0.0
  %993 = vmatpush1.msra.mxu0 0.0
  %994 = vmatprep.subr.mxu0 0.0
  %995 = vmatpush1.msra.mxu0 0.0
  %996 = vmatprep.subr.mxu0 0.0
  %997 = vmatpush1.msra.mxu0 0.0
  %998 = vmatprep.subr.mxu0 0.0
  %999 = vmatpush1.msra.mxu0 0.0
  %1000 = vmatprep.subr.mxu0 0.0
  %1001 = vmatpush1.msra.mxu0 0.0
  %1002 = vmatprep.subr.mxu0 0.0
  %1003 = vmatpush1.msra.mxu0 0.0
  %1004 = vmatprep.subr.mxu0 0.0
  %1005 = vmatpush1.msra.mxu0 0.0
  %1006 = vmatprep.subr.mxu0 0.0
  %1007 = vmatpush1.msra.mxu0 0.0
  %1008 = vmatprep.subr.mxu0 0.0
  %1009 = vmatpush1.msra.mxu0 0.0
  %1010 = vmatprep.subr.mxu0 0.0
  %1011 = vmatpush1.msra.mxu0 0.0
  %1012 = vmatprep.subr.mxu0 0.0
  %1013 = vmatpush1.msra.mxu0 0.0
  %1014 = vmatprep.subr.mxu0 0.0
  %1015 = vmatpush1.msra.mxu0 0.0
  %1016 = vmatprep.subr.mxu0 0.0
  %1017 = vmatpush1.msra.mxu0 0.0
  %1018 = vmatprep.subr.mxu0 0.0
  %1019 = vmatpush1.msra.mxu0 0.0
  %1020 = vmatprep.subr.mxu0 0.0
  %1021 = vmatpush1.msra.mxu0 0.0
  %1022 = vmatprep.subr.mxu0 0.0
  %1023 = vmatpush1.msra.mxu0 0.0
  %1024 = vmatprep.subr.mxu0 0.0
  %1025 = vmatpush1.msra.mxu0 0.0
  %1026 = vmatprep.subr.mxu0 0.0
  %1027 = vmatpush1.msra.mxu0 0.0
  %1028 = vmatprep.subr.mxu0 0.0
  %1029 = vmatpush1.msra.mxu0 0.0
  %1030 = vmatprep.subr.mxu0 0.0
  %1031 = vmatpush1.msra.mxu0 0.0
  %1032 = vmatprep.subr.mxu0 0.0
  %1033 = vmatpush1.msra.mxu0 0.0
  %1034 = vmatprep.subr.mxu0 0.0
  %1035 = vmatpush1.msra.mxu0 0.0
  %1036 = vmatprep.subr.mxu0 0.0
  %1037 = vmatpush1.msra.mxu0 0.0
  %1038 = vmatprep.mubr.f32.mxu0 0.0
  %1039 = vmatmul.mubr.f32.gmra.mrb[0].mxu0 %v972
  %v1040 = vpop.f32.mrb[0].mxu0
  %v1041 = vadd.f32 0.0, %v1040
  %v1042 = vpop.f32.mrb[0].mxu0
  %1043 = vdwg.mxu0
  %v1045 = vrot.slane %v1041, 1
  %v1048 = vadd.f32 %v966, %v1041
  %v1049 = vadd.f32 %v967, %v1045
  %v1050 = vxor.u32 %v1048, 2147483648
  %v1051 = vxor.u32 %v1049, 2147483648
  %v1052 = vmul.f32 %v1050, 1.442695
  %v1053 = vpow.pop %v1052
  %v1054 = vmul.f32 %v1051, 1.442695
  %v1055 = vpow.pop %v1054
  %v1056 = vadd.f32 %v1053, 1.0
  %v1057 = vadd.f32 %v1055, 1.0
  %v1058 = vrcp.pop %v1056
  %v1059 = vmul.f32 1.0, %v1058
  %v1060 = vrcp.pop %v1057
  %v1061 = vmul.f32 1.0, %v1060
  %v1062 = vtanh.pop %v1048
  %v1063 = vtanh.pop %v1049
  %v1064 = vmul.f32 %v1059, %v925
  %v1065 = vmul.f32 %v1061, %v926
  %1068 = vrot.lane.b32.xlu0 %v1062, 64
  %v1069 = vpop.permute.xlu0 %1068
  %1070 = vrot.lane.b32.xlu0 %v1063, 64
  %v1071 = vpop.permute.xlu0 %1070
  %v1074 = vmul.f32 %v1059, %v1069
  %v1075 = vmul.f32 %v1061, %v1071
  %1078 = vrot.lane.b32.xlu0 %v1074, 32
  %v1079 = vpop.permute.xlu0 %1078
  %1080 = vrot.lane.b32.xlu0 %v1075, 32
  %v1081 = vpop.permute.xlu0 %1080
  %v1084 = vadd.f32 %v1064, %v1079
  %v1085 = vadd.f32 %v1065, %v1081
  %v1086 = vtanh.pop %v1084
  %v1087 = vtanh.pop %v1085
  %1090 = vrot.lane.b32.xlu0 %v1086, 64
  %v1091 = vpop.permute.xlu0 %1090
  %1092 = vrot.lane.b32.xlu0 %v1087, 64
  %v1093 = vpop.permute.xlu0 %1092
  %v1096 = vmul.f32 %v1059, %v1091
  %v1097 = vmul.f32 %v1061, %v1093
  %v1101 = vunpack.c.l.s4 1983009808
  %v1102 = vunpack.c.0.s8 %v1101
  %v1103 = vlaneseq
  %v1104 = vshrl.u32 %v1103, 7
  %v1105 = vsub.s32 %v1102, %v1104
  %v1106 = vrot.slane %v1096, %v1105
  %v1108 = vunpack.c.l.s4 1983009808
  %v1109 = vunpack.c.0.s8 %v1108
  %v1110 = vlaneseq
  %v1111 = vshrl.u32 %v1110, 7
  %v1112 = vsub.s32 %v1109, %v1111
  %v1113 = vrot.slane %v1097, %v1112
  %v1114 = vsel %vm311, %v1106, %v1106
  %v1115 = vsel %vm313, %v1106, %v1114
  %v1116 = vrot.slane %v1113, 7
  %v1117 = vsel %vm316, %v1116, %v1115
  %v1118 = vsel %vm318, %v1116, %v1117
  %v1119 = vsel %vm320, %v1116, %v1118
  %v1120 = vsel %vm322, %v1116, %v1119
  %1121 = vrot.lane.b32.xlu0 %v1120, 64
  %v1122 = vpop.permute.xlu0 %1121
  %1124 = vst.msk [vmem:[#allocation3 + $0x2] sm:$0x3] %vm487, %v1122
  %v1125 = vld [vmem:[#allocation2 + $0x6] sm:$0x1]
  %v1126 = vld [vmem:[#allocation2 + $0x1e] sm:$0x1]
  %v1127 = vrot.slane %v1097, 7
  %v1128 = vsel %vm316, %v1127, %v1096
  %1129 = vrot.lane.b32.xlu0 %v1128, 32
  %v1130 = vpop.permute.xlu0 %1129
  %v1131 = vsel %vm167, %v1130, 0
  %1133 = vmatprep.subr.mxu0 0.0
  %1134 = vmatpush1.msra.mxu0 %v161
  %1135 = vmatprep.subr.mxu0 0.0
  %1136 = vmatpush1.msra.mxu0 %v162
  %1137 = vmatprep.subr.mxu0 0.0
  %1138 = vmatpush1.msra.mxu0 %v163
  %1139 = vmatprep.subr.mxu0 0.0
  %1140 = vmatpush1.msra.mxu0 %v164
  %1141 = vmatprep.subr.mxu0 0.0
  %1142 = vmatpush1.msra.mxu0 0.0
  %1143 = vmatprep.subr.mxu0 0.0
  %1144 = vmatpush1.msra.mxu0 0.0
  %1145 = vmatprep.subr.mxu0 0.0
  %1146 = vmatpush1.msra.mxu0 0.0
  %1147 = vmatprep.subr.mxu0 0.0
  %1148 = vmatpush1.msra.mxu0 0.0
  %1149 = vmatprep.subr.mxu0 0.0
  %1150 = vmatpush1.msra.mxu0 0.0
  %1151 = vmatprep.subr.mxu0 0.0
  %1152 = vmatpush1.msra.mxu0 0.0
  %1153 = vmatprep.subr.mxu0 0.0
  %1154 = vmatpush1.msra.mxu0 0.0
  %1155 = vmatprep.subr.mxu0 0.0
  %1156 = vmatpush1.msra.mxu0 0.0
  %1157 = vmatprep.subr.mxu0 0.0
  %1158 = vmatpush1.msra.mxu0 0.0
  %1159 = vmatprep.subr.mxu0 0.0
  %1160 = vmatpush1.msra.mxu0 0.0
  %1161 = vmatprep.subr.mxu0 0.0
  %1162 = vmatpush1.msra.mxu0 0.0
  %1163 = vmatprep.subr.mxu0 0.0
  %1164 = vmatpush1.msra.mxu0 0.0
  %1165 = vmatprep.subr.mxu0 0.0
  %1166 = vmatpush1.msra.mxu0 0.0
  %1167 = vmatprep.subr.mxu0 0.0
  %1168 = vmatpush1.msra.mxu0 0.0
  %1169 = vmatprep.subr.mxu0 0.0
  %1170 = vmatpush1.msra.mxu0 0.0
  %1171 = vmatprep.subr.mxu0 0.0
  %1172 = vmatpush1.msra.mxu0 0.0
  %1173 = vmatprep.subr.mxu0 0.0
  %1174 = vmatpush1.msra.mxu0 0.0
  %1175 = vmatprep.subr.mxu0 0.0
  %1176 = vmatpush1.msra.mxu0 0.0
  %1177 = vmatprep.subr.mxu0 0.0
  %1178 = vmatpush1.msra.mxu0 0.0
  %1179 = vmatprep.subr.mxu0 0.0
  %1180 = vmatpush1.msra.mxu0 0.0
  %1181 = vmatprep.subr.mxu0 0.0
  %1182 = vmatpush1.msra.mxu0 0.0
  %1183 = vmatprep.subr.mxu0 0.0
  %1184 = vmatpush1.msra.mxu0 0.0
  %1185 = vmatprep.subr.mxu0 0.0
  %1186 = vmatpush1.msra.mxu0 0.0
  %1187 = vmatprep.subr.mxu0 0.0
  %1188 = vmatpush1.msra.mxu0 0.0
  %1189 = vmatprep.subr.mxu0 0.0
  %1190 = vmatpush1.msra.mxu0 0.0
  %1191 = vmatprep.subr.mxu0 0.0
  %1192 = vmatpush1.msra.mxu0 0.0
  %1193 = vmatprep.subr.mxu0 0.0
  %1194 = vmatpush1.msra.mxu0 0.0
  %1195 = vmatprep.subr.mxu0 0.0
  %1196 = vmatpush1.msra.mxu0 0.0
  %1197 = vmatprep.mubr.f32.mxu0 0.0
  %1198 = vmatmul.mubr.f32.gmra.mrb[0].mxu0 %v1131
  %v1199 = vpop.f32.mrb[0].mxu0
  %v1200 = vadd.f32 0.0, %v1199
  %v1201 = vpop.f32.mrb[0].mxu0
  %1202 = vdwg.mxu0
  %v1204 = vrot.slane %v1200, 1
  %v1207 = vadd.f32 %v1125, %v1200
  %v1208 = vadd.f32 %v1126, %v1204
  %v1209 = vxor.u32 %v1207, 2147483648
  %v1210 = vxor.u32 %v1208, 2147483648
  %v1211 = vmul.f32 %v1209, 1.442695
  %v1212 = vpow.pop %v1211
  %v1213 = vmul.f32 %v1210, 1.442695
  %v1214 = vpow.pop %v1213
  %v1215 = vadd.f32 %v1212, 1.0
  %v1216 = vadd.f32 %v1214, 1.0
  %v1217 = vrcp.pop %v1215
  %v1218 = vmul.f32 1.0, %v1217
  %v1219 = vrcp.pop %v1216
  %v1220 = vmul.f32 1.0, %v1219
  %v1221 = vtanh.pop %v1207
  %v1222 = vtanh.pop %v1208
  %v1223 = vmul.f32 %v1218, %v1084
  %v1224 = vmul.f32 %v1220, %v1085
  %1227 = vrot.lane.b32.xlu0 %v1221, 64
  %v1228 = vpop.permute.xlu0 %1227
  %1229 = vrot.lane.b32.xlu0 %v1222, 64
  %v1230 = vpop.permute.xlu0 %1229
  %v1233 = vmul.f32 %v1218, %v1228
  %v1234 = vmul.f32 %v1220, %v1230
  %1237 = vrot.lane.b32.xlu0 %v1233, 32
  %v1238 = vpop.permute.xlu0 %1237
  %1239 = vrot.lane.b32.xlu0 %v1234, 32
  %v1240 = vpop.permute.xlu0 %1239
  %v1243 = vadd.f32 %v1223, %v1238
  %v1244 = vadd.f32 %v1224, %v1240
  %v1245 = vtanh.pop %v1243
  %v1246 = vtanh.pop %v1244
  %1249 = vrot.lane.b32.xlu0 %v1245, 64
  %v1250 = vpop.permute.xlu0 %1249
  %1251 = vrot.lane.b32.xlu0 %v1246, 64
  %v1252 = vpop.permute.xlu0 %1251
  %v1255 = vmul.f32 %v1218, %v1250
  %v1256 = vmul.f32 %v1220, %v1252
  %v1260 = vunpack.c.l.s4 1983009808
  %v1261 = vunpack.c.0.s8 %v1260
  %v1262 = vlaneseq
  %v1263 = vshrl.u32 %v1262, 7
  %v1264 = vsub.s32 %v1261, %v1263
  %v1265 = vrot.slane %v1255, %v1264
  %v1267 = vunpack.c.l.s4 1983009808
  %v1268 = vunpack.c.0.s8 %v1267
  %v1269 = vlaneseq
  %v1270 = vshrl.u32 %v1269, 7
  %v1271 = vsub.s32 %v1268, %v1270
  %v1272 = vrot.slane %v1256, %v1271
  %v1273 = vsel %vm311, %v1265, %v1265
  %v1274 = vsel %vm313, %v1265, %v1273
  %v1275 = vrot.slane %v1272, 7
  %v1276 = vsel %vm316, %v1275, %v1274
  %v1277 = vsel %vm318, %v1275, %v1276
  %v1278 = vsel %vm320, %v1275, %v1277
  %v1279 = vsel %vm322, %v1275, %v1278
  %1280 = vrot.lane.b32.xlu0 %v1279, 96
  %v1281 = vpop.permute.xlu0 %1280
  %1283 = vst.msk [vmem:[#allocation3 + $0x2] sm:$0x3] %vm647, %v1281
  %v1284 = vld [vmem:[#allocation2 + $0x7] sm:$0x1]
  %v1285 = vld [vmem:[#allocation2 + $0x1f] sm:$0x1]
  %v1286 = vrot.slane %v1256, 7
  %v1287 = vsel %vm316, %v1286, %v1255
  %1288 = vrot.lane.b32.xlu0 %v1287, 32
  %v1289 = vpop.permute.xlu0 %1288
  %v1290 = vsel %vm167, %v1289, 0
  %1292 = vmatprep.subr.mxu0 0.0
  %1293 = vmatpush1.msra.mxu0 %v161
  %1294 = vmatprep.subr.mxu0 0.0
  %1295 = vmatpush1.msra.mxu0 %v162
  %1296 = vmatprep.subr.mxu0 0.0
  %1297 = vmatpush1.msra.mxu0 %v163
  %1298 = vmatprep.subr.mxu0 0.0
  %1299 = vmatpush1.msra.mxu0 %v164
  %1300 = vmatprep.subr.mxu0 0.0
  %1301 = vmatpush1.msra.mxu0 0.0
  %1302 = vmatprep.subr.mxu0 0.0
  %1303 = vmatpush1.msra.mxu0 0.0
  %1304 = vmatprep.subr.mxu0 0.0
  %1305 = vmatpush1.msra.mxu0 0.0
  %1306 = vmatprep.subr.mxu0 0.0
  %1307 = vmatpush1.msra.mxu0 0.0
  %1308 = vmatprep.subr.mxu0 0.0
  %1309 = vmatpush1.msra.mxu0 0.0
  %1310 = vmatprep.subr.mxu0 0.0
  %1311 = vmatpush1.msra.mxu0 0.0
  %1312 = vmatprep.subr.mxu0 0.0
  %1313 = vmatpush1.msra.mxu0 0.0
  %1314 = vmatprep.subr.mxu0 0.0
  %1315 = vmatpush1.msra.mxu0 0.0
  %1316 = vmatprep.subr.mxu0 0.0
  %1317 = vmatpush1.msra.mxu0 0.0
  %1318 = vmatprep.subr.mxu0 0.0
  %1319 = vmatpush1.msra.mxu0 0.0
  %1320 = vmatprep.subr.mxu0 0.0
  %1321 = vmatpush1.msra.mxu0 0.0
  %1322 = vmatprep.subr.mxu0 0.0
  %1323 = vmatpush1.msra.mxu0 0.0
  %1324 = vmatprep.subr.mxu0 0.0
  %1325 = vmatpush1.msra.mxu0 0.0
  %1326 = vmatprep.subr.mxu0 0.0
  %1327 = vmatpush1.msra.mxu0 0.0
  %1328 = vmatprep.subr.mxu0 0.0
  %1329 = vmatpush1.msra.mxu0 0.0
  %1330 = vmatprep.subr.mxu0 0.0
  %1331 = vmatpush1.msra.mxu0 0.0
  %1332 = vmatprep.subr.mxu0 0.0
  %1333 = vmatpush1.msra.mxu0 0.0
  %1334 = vmatprep.subr.mxu0 0.0
  %1335 = vmatpush1.msra.mxu0 0.0
  %1336 = vmatprep.subr.mxu0 0.0
  %1337 = vmatpush1.msra.mxu0 0.0
  %1338 = vmatprep.subr.mxu0 0.0
  %1339 = vmatpush1.msra.mxu0 0.0
  %1340 = vmatprep.subr.mxu0 0.0
  %1341 = vmatpush1.msra.mxu0 0.0
  %1342 = vmatprep.subr.mxu0 0.0
  %1343 = vmatpush1.msra.mxu0 0.0
  %1344 = vmatprep.subr.mxu0 0.0
  %1345 = vmatpush1.msra.mxu0 0.0
  %1346 = vmatprep.subr.mxu0 0.0
  %1347 = vmatpush1.msra.mxu0 0.0
  %1348 = vmatprep.subr.mxu0 0.0
  %1349 = vmatpush1.msra.mxu0 0.0
  %1350 = vmatprep.subr.mxu0 0.0
  %1351 = vmatpush1.msra.mxu0 0.0
  %1352 = vmatprep.subr.mxu0 0.0
  %1353 = vmatpush1.msra.mxu0 0.0
  %1354 = vmatprep.subr.mxu0 0.0
  %1355 = vmatpush1.msra.mxu0 0.0
  %1356 = vmatprep.mubr.f32.mxu0 0.0
  %1357 = vmatmul.mubr.f32.gmra.mrb[0].mxu0 %v1290
  %v1358 = vpop.f32.mrb[0].mxu0
  %v1359 = vadd.f32 0.0, %v1358
  %v1360 = vpop.f32.mrb[0].mxu0
  %1361 = vdwg.mxu0
  %v1363 = vrot.slane %v1359, 1
  %v1366 = vadd.f32 %v1284, %v1359
  %v1367 = vadd.f32 %v1285, %v1363
  %v1368 = vxor.u32 %v1366, 2147483648
  %v1369 = vxor.u32 %v1367, 2147483648
  %v1370 = vmul.f32 %v1368, 1.442695
  %v1371 = vpow.pop %v1370
  %v1372 = vmul.f32 %v1369, 1.442695
  %v1373 = vpow.pop %v1372
  %v1374 = vadd.f32 %v1371, 1.0
  %v1375 = vadd.f32 %v1373, 1.0
  %v1376 = vrcp.pop %v1374
  %v1377 = vmul.f32 1.0, %v1376
  %v1378 = vrcp.pop %v1375
  %v1379 = vmul.f32 1.0, %v1378
  %v1380 = vtanh.pop %v1366
  %v1381 = vtanh.pop %v1367
  %v1382 = vmul.f32 %v1377, %v1243
  %v1383 = vmul.f32 %v1379, %v1244
  %1386 = vrot.lane.b32.xlu0 %v1380, 64
  %v1387 = vpop.permute.xlu0 %1386
  %1388 = vrot.lane.b32.xlu0 %v1381, 64
  %v1389 = vpop.permute.xlu0 %1388
  %v1392 = vmul.f32 %v1377, %v1387
  %v1393 = vmul.f32 %v1379, %v1389
  %1396 = vrot.lane.b32.xlu0 %v1392, 32
  %v1397 = vpop.permute.xlu0 %1396
  %1398 = vrot.lane.b32.xlu0 %v1393, 32
  %v1399 = vpop.permute.xlu0 %1398
  %v1402 = vadd.f32 %v1382, %v1397
  %v1403 = vadd.f32 %v1383, %v1399
  %v1404 = vtanh.pop %v1402
  %v1405 = vtanh.pop %v1403
  %1408 = vrot.lane.b32.xlu0 %v1404, 64
  %v1409 = vpop.permute.xlu0 %1408
  %1410 = vrot.lane.b32.xlu0 %v1405, 64
  %v1411 = vpop.permute.xlu0 %1410
  %v1414 = vmul.f32 %v1377, %v1409
  %v1415 = vmul.f32 %v1379, %v1411
  %v1419 = vunpack.c.l.s4 1983009808
  %v1420 = vunpack.c.0.s8 %v1419
  %v1421 = vlaneseq
  %v1422 = vshrl.u32 %v1421, 7
  %v1423 = vsub.s32 %v1420, %v1422
  %v1424 = vrot.slane %v1414, %v1423
  %v1426 = vunpack.c.l.s4 1983009808
  %v1427 = vunpack.c.0.s8 %v1426
  %v1428 = vlaneseq
  %v1429 = vshrl.u32 %v1428, 7
  %v1430 = vsub.s32 %v1427, %v1429
  %v1431 = vrot.slane %v1415, %v1430
  %v1432 = vsel %vm311, %v1424, %v1424
  %v1433 = vsel %vm313, %v1424, %v1432
  %v1434 = vrot.slane %v1431, 7
  %v1435 = vsel %vm316, %v1434, %v1433
  %v1436 = vsel %vm318, %v1434, %v1435
  %v1437 = vsel %vm320, %v1434, %v1436
  %v1438 = vsel %vm322, %v1434, %v1437
  %1440 = vst.msk [vmem:[#allocation3 + $0x2] sm:$0x3] %vm805, %v1438
  %v1441 = vld [vmem:[#allocation2 + $0x8] sm:$0x1]
  %v1442 = vld [vmem:[#allocation2 + $0x20] sm:$0x1]
  %v1443 = vrot.slane %v1415, 7
  %v1444 = vsel %vm316, %v1443, %v1414
  %1445 = vrot.lane.b32.xlu0 %v1444, 32
  %v1446 = vpop.permute.xlu0 %1445
  %v1447 = vsel %vm167, %v1446, 0
  %1449 = vmatprep.subr.mxu0 0.0
  %1450 = vmatpush1.msra.mxu0 %v161
  %1451 = vmatprep.subr.mxu0 0.0
  %1452 = vmatpush1.msra.mxu0 %v162
  %1453 = vmatprep.subr.mxu0 0.0
  %1454 = vmatpush1.msra.mxu0 %v163
  %1455 = vmatprep.subr.mxu0 0.0
  %1456 = vmatpush1.msra.mxu0 %v164
  %1457 = vmatprep.subr.mxu0 0.0
  %1458 = vmatpush1.msra.mxu0 0.0
  %1459 = vmatprep.subr.mxu0 0.0
  %1460 = vmatpush1.msra.mxu0 0.0
  %1461 = vmatprep.subr.mxu0 0.0
  %1462 = vmatpush1.msra.mxu0 0.0
  %1463 = vmatprep.subr.mxu0 0.0
  %1464 = vmatpush1.msra.mxu0 0.0
  %1465 = vmatprep.subr.mxu0 0.0
  %1466 = vmatpush1.msra.mxu0 0.0
  %1467 = vmatprep.subr.mxu0 0.0
  %1468 = vmatpush1.msra.mxu0 0.0
  %1469 = vmatprep.subr.mxu0 0.0
  %1470 = vmatpush1.msra.mxu0 0.0
  %1471 = vmatprep.subr.mxu0 0.0
  %1472 = vmatpush1.msra.mxu0 0.0
  %1473 = vmatprep.subr.mxu0 0.0
  %1474 = vmatpush1.msra.mxu0 0.0
  %1475 = vmatprep.subr.mxu0 0.0
  %1476 = vmatpush1.msra.mxu0 0.0
  %1477 = vmatprep.subr.mxu0 0.0
  %1478 = vmatpush1.msra.mxu0 0.0
  %1479 = vmatprep.subr.mxu0 0.0
  %1480 = vmatpush1.msra.mxu0 0.0
  %1481 = vmatprep.subr.mxu0 0.0
  %1482 = vmatpush1.msra.mxu0 0.0
  %1483 = vmatprep.subr.mxu0 0.0
  %1484 = vmatpush1.msra.mxu0 0.0
  %1485 = vmatprep.subr.mxu0 0.0
  %1486 = vmatpush1.msra.mxu0 0.0
  %1487 = vmatprep.subr.mxu0 0.0
  %1488 = vmatpush1.msra.mxu0 0.0
  %1489 = vmatprep.subr.mxu0 0.0
  %1490 = vmatpush1.msra.mxu0 0.0
  %1491 = vmatprep.subr.mxu0 0.0
  %1492 = vmatpush1.msra.mxu0 0.0
  %1493 = vmatprep.subr.mxu0 0.0
  %1494 = vmatpush1.msra.mxu0 0.0
  %1495 = vmatprep.subr.mxu0 0.0
  %1496 = vmatpush1.msra.mxu0 0.0
  %1497 = vmatprep.subr.mxu0 0.0
  %1498 = vmatpush1.msra.mxu0 0.0
  %1499 = vmatprep.subr.mxu0 0.0
  %1500 = vmatpush1.msra.mxu0 0.0
  %1501 = vmatprep.subr.mxu0 0.0
  %1502 = vmatpush1.msra.mxu0 0.0
  %1503 = vmatprep.subr.mxu0 0.0
  %1504 = vmatpush1.msra.mxu0 0.0
  %1505 = vmatprep.subr.mxu0 0.0
  %1506 = vmatpush1.msra.mxu0 0.0
  %1507 = vmatprep.subr.mxu0 0.0
  %1508 = vmatpush1.msra.mxu0 0.0
  %1509 = vmatprep.subr.mxu0 0.0
  %1510 = vmatpush1.msra.mxu0 0.0
  %1511 = vmatprep.subr.mxu0 0.0
  %1512 = vmatpush1.msra.mxu0 0.0
  %1513 = vmatprep.mubr.f32.mxu0 0.0
  %1514 = vmatmul.mubr.f32.gmra.mrb[0].mxu0 %v1447
  %v1515 = vpop.f32.mrb[0].mxu0
  %v1516 = vadd.f32 0.0, %v1515
  %v1517 = vpop.f32.mrb[0].mxu0
  %1518 = vdwg.mxu0
  %v1520 = vrot.slane %v1516, 1
  %v1523 = vadd.f32 %v1441, %v1516
  %v1524 = vadd.f32 %v1442, %v1520
  %v1525 = vxor.u32 %v1523, 2147483648
  %v1526 = vxor.u32 %v1524, 2147483648
  %v1527 = vmul.f32 %v1525, 1.442695
  %v1528 = vpow.pop %v1527
  %v1529 = vmul.f32 %v1526, 1.442695
  %v1530 = vpow.pop %v1529
  %v1531 = vadd.f32 %v1528, 1.0
  %v1532 = vadd.f32 %v1530, 1.0
  %v1533 = vrcp.pop %v1531
  %v1534 = vmul.f32 1.0, %v1533
  %v1535 = vrcp.pop %v1532
  %v1536 = vmul.f32 1.0, %v1535
  %v1537 = vtanh.pop %v1523
  %v1538 = vtanh.pop %v1524
  %v1539 = vmul.f32 %v1534, %v1402
  %v1540 = vmul.f32 %v1536, %v1403
  %1543 = vrot.lane.b32.xlu0 %v1537, 64
  %v1544 = vpop.permute.xlu0 %1543
  %1545 = vrot.lane.b32.xlu0 %v1538, 64
  %v1546 = vpop.permute.xlu0 %1545
  %v1549 = vmul.f32 %v1534, %v1544
  %v1550 = vmul.f32 %v1536, %v1546
  %1553 = vrot.lane.b32.xlu0 %v1549, 32
  %v1554 = vpop.permute.xlu0 %1553
  %1555 = vrot.lane.b32.xlu0 %v1550, 32
  %v1556 = vpop.permute.xlu0 %1555
  %v1559 = vadd.f32 %v1539, %v1554
  %v1560 = vadd.f32 %v1540, %v1556
  %v1561 = vtanh.pop %v1559
  %v1562 = vtanh.pop %v1560
  %1565 = vrot.lane.b32.xlu0 %v1561, 64
  %v1566 = vpop.permute.xlu0 %1565
  %1567 = vrot.lane.b32.xlu0 %v1562, 64
  %v1568 = vpop.permute.xlu0 %1567
  %v1571 = vmul.f32 %v1534, %v1566
  %v1572 = vmul.f32 %v1536, %v1568
  %v1576 = vunpack.c.l.s4 1983009808
  %v1577 = vunpack.c.0.s8 %v1576
  %v1578 = vlaneseq
  %v1579 = vshrl.u32 %v1578, 7
  %v1580 = vsub.s32 %v1577, %v1579
  %v1581 = vrot.slane %v1571, %v1580
  %v1583 = vunpack.c.l.s4 1983009808
  %v1584 = vunpack.c.0.s8 %v1583
  %v1585 = vlaneseq
  %v1586 = vshrl.u32 %v1585, 7
  %v1587 = vsub.s32 %v1584, %v1586
  %v1588 = vrot.slane %v1572, %v1587
  %v1589 = vsel %vm311, %v1581, %v1581
  %v1590 = vsel %vm313, %v1581, %v1589
  %v1591 = vrot.slane %v1588, 7
  %v1592 = vsel %vm316, %v1591, %v1590
  %v1593 = vsel %vm318, %v1591, %v1592
  %v1594 = vsel %vm320, %v1591, %v1593
  %v1595 = vsel %vm322, %v1591, %v1594
  %1596 = vrot.lane.b32.xlu0 %v1595, 32
  %v1597 = vpop.permute.xlu0 %1596
  %1599 = vst.msk [vmem:[#allocation3 + $0x4] sm:$0x3] %vm327, %v1597
  %v1600 = vld [vmem:[#allocation2 + $0x9] sm:$0x1]
  %v1601 = vld [vmem:[#allocation2 + $0x21] sm:$0x1]
  %v1602 = vrot.slane %v1572, 7
  %v1603 = vsel %vm316, %v1602, %v1571
  %1604 = vrot.lane.b32.xlu0 %v1603, 32
  %v1605 = vpop.permute.xlu0 %1604
  %v1606 = vsel %vm167, %v1605, 0
  %1608 = vmatprep.subr.mxu0 0.0
  %1609 = vmatpush1.msra.mxu0 %v161
  %1610 = vmatprep.subr.mxu0 0.0
  %1611 = vmatpush1.msra.mxu0 %v162
  %1612 = vmatprep.subr.mxu0 0.0
  %1613 = vmatpush1.msra.mxu0 %v163
  %1614 = vmatprep.subr.mxu0 0.0
  %1615 = vmatpush1.msra.mxu0 %v164
  %1616 = vmatprep.subr.mxu0 0.0
  %1617 = vmatpush1.msra.mxu0 0.0
  %1618 = vmatprep.subr.mxu0 0.0
  %1619 = vmatpush1.msra.mxu0 0.0
  %1620 = vmatprep.subr.mxu0 0.0
  %1621 = vmatpush1.msra.mxu0 0.0
  %1622 = vmatprep.subr.mxu0 0.0
  %1623 = vmatpush1.msra.mxu0 0.0
  %1624 = vmatprep.subr.mxu0 0.0
  %1625 = vmatpush1.msra.mxu0 0.0
  %1626 = vmatprep.subr.mxu0 0.0
  %1627 = vmatpush1.msra.mxu0 0.0
  %1628 = vmatprep.subr.mxu0 0.0
  %1629 = vmatpush1.msra.mxu0 0.0
  %1630 = vmatprep.subr.mxu0 0.0
  %1631 = vmatpush1.msra.mxu0 0.0
  %1632 = vmatprep.subr.mxu0 0.0
  %1633 = vmatpush1.msra.mxu0 0.0
  %1634 = vmatprep.subr.mxu0 0.0
  %1635 = vmatpush1.msra.mxu0 0.0
  %1636 = vmatprep.subr.mxu0 0.0
  %1637 = vmatpush1.msra.mxu0 0.0
  %1638 = vmatprep.subr.mxu0 0.0
  %1639 = vmatpush1.msra.mxu0 0.0
  %1640 = vmatprep.subr.mxu0 0.0
  %1641 = vmatpush1.msra.mxu0 0.0
  %1642 = vmatprep.subr.mxu0 0.0
  %1643 = vmatpush1.msra.mxu0 0.0
  %1644 = vmatprep.subr.mxu0 0.0
  %1645 = vmatpush1.msra.mxu0 0.0
  %1646 = vmatprep.subr.mxu0 0.0
  %1647 = vmatpush1.msra.mxu0 0.0
  %1648 = vmatprep.subr.mxu0 0.0
  %1649 = vmatpush1.msra.mxu0 0.0
  %1650 = vmatprep.subr.mxu0 0.0
  %1651 = vmatpush1.msra.mxu0 0.0
  %1652 = vmatprep.subr.mxu0 0.0
  %1653 = vmatpush1.msra.mxu0 0.0
  %1654 = vmatprep.subr.mxu0 0.0
  %1655 = vmatpush1.msra.mxu0 0.0
  %1656 = vmatprep.subr.mxu0 0.0
  %1657 = vmatpush1.msra.mxu0 0.0
  %1658 = vmatprep.subr.mxu0 0.0
  %1659 = vmatpush1.msra.mxu0 0.0
  %1660 = vmatprep.subr.mxu0 0.0
  %1661 = vmatpush1.msra.mxu0 0.0
  %1662 = vmatprep.subr.mxu0 0.0
  %1663 = vmatpush1.msra.mxu0 0.0
  %1664 = vmatprep.subr.mxu0 0.0
  %1665 = vmatpush1.msra.mxu0 0.0
  %1666 = vmatprep.subr.mxu0 0.0
  %1667 = vmatpush1.msra.mxu0 0.0
  %1668 = vmatprep.subr.mxu0 0.0
  %1669 = vmatpush1.msra.mxu0 0.0
  %1670 = vmatprep.subr.mxu0 0.0
  %1671 = vmatpush1.msra.mxu0 0.0
  %1672 = vmatprep.mubr.f32.mxu0 0.0
  %1673 = vmatmul.mubr.f32.gmra.mrb[0].mxu0 %v1606
  %v1674 = vpop.f32.mrb[0].mxu0
  %v1675 = vadd.f32 0.0, %v1674
  %v1676 = vpop.f32.mrb[0].mxu0
  %1677 = vdwg.mxu0
  %v1679 = vrot.slane %v1675, 1
  %v1682 = vadd.f32 %v1600, %v1675
  %v1683 = vadd.f32 %v1601, %v1679
  %v1684 = vxor.u32 %v1682, 2147483648
  %v1685 = vxor.u32 %v1683, 2147483648
  %v1686 = vmul.f32 %v1684, 1.442695
  %v1687 = vpow.pop %v1686
  %v1688 = vmul.f32 %v1685, 1.442695
  %v1689 = vpow.pop %v1688
  %v1690 = vadd.f32 %v1687, 1.0
  %v1691 = vadd.f32 %v1689, 1.0
  %v1692 = vrcp.pop %v1690
  %v1693 = vmul.f32 1.0, %v1692
  %v1694 = vrcp.pop %v1691
  %v1695 = vmul.f32 1.0, %v1694
  %v1696 = vtanh.pop %v1682
  %v1697 = vtanh.pop %v1683
  %v1698 = vmul.f32 %v1693, %v1559
  %v1699 = vmul.f32 %v1695, %v1560
  %1702 = vrot.lane.b32.xlu0 %v1696, 64
  %v1703 = vpop.permute.xlu0 %1702
  %1704 = vrot.lane.b32.xlu0 %v1697, 64
  %v1705 = vpop.permute.xlu0 %1704
  %v1708 = vmul.f32 %v1693, %v1703
  %v1709 = vmul.f32 %v1695, %v1705
  %1712 = vrot.lane.b32.xlu0 %v1708, 32
  %v1713 = vpop.permute.xlu0 %1712
  %1714 = vrot.lane.b32.xlu0 %v1709, 32
  %v1715 = vpop.permute.xlu0 %1714
  %v1718 = vadd.f32 %v1698, %v1713
  %v1719 = vadd.f32 %v1699, %v1715
  %v1720 = vtanh.pop %v1718
  %v1721 = vtanh.pop %v1719
  %1724 = vrot.lane.b32.xlu0 %v1720, 64
  %v1725 = vpop.permute.xlu0 %1724
  %1726 = vrot.lane.b32.xlu0 %v1721, 64
  %v1727 = vpop.permute.xlu0 %1726
  %v1730 = vmul.f32 %v1693, %v1725
  %v1731 = vmul.f32 %v1695, %v1727
  %v1735 = vunpack.c.l.s4 1983009808
  %v1736 = vunpack.c.0.s8 %v1735
  %v1737 = vlaneseq
  %v1738 = vshrl.u32 %v1737, 7
  %v1739 = vsub.s32 %v1736, %v1738
  %v1740 = vrot.slane %v1730, %v1739
  %v1742 = vunpack.c.l.s4 1983009808
  %v1743 = vunpack.c.0.s8 %v1742
  %v1744 = vlaneseq
  %v1745 = vshrl.u32 %v1744, 7
  %v1746 = vsub.s32 %v1743, %v1745
  %v1747 = vrot.slane %v1731, %v1746
  %v1748 = vsel %vm311, %v1740, %v1740
  %v1749 = vsel %vm313, %v1740, %v1748
  %v1750 = vrot.slane %v1747, 7
  %v1751 = vsel %vm316, %v1750, %v1749
  %v1752 = vsel %vm318, %v1750, %v1751
  %v1753 = vsel %vm320, %v1750, %v1752
  %v1754 = vsel %vm322, %v1750, %v1753
  %1755 = vrot.lane.b32.xlu0 %v1754, 64
  %v1756 = vpop.permute.xlu0 %1755
  %1758 = vst.msk [vmem:[#allocation3 + $0x4] sm:$0x3] %vm487, %v1756
  %v1759 = vld [vmem:[#allocation2 + $0xa] sm:$0x1]
  %v1760 = vld [vmem:[#allocation2 + $0x22] sm:$0x1]
  %v1761 = vrot.slane %v1731, 7
  %v1762 = vsel %vm316, %v1761, %v1730
  %1763 = vrot.lane.b32.xlu0 %v1762, 32
  %v1764 = vpop.permute.xlu0 %1763
  %v1765 = vsel %vm167, %v1764, 0
  %1767 = vmatprep.subr.mxu0 0.0
  %1768 = vmatpush1.msra.mxu0 %v161
  %1769 = vmatprep.subr.mxu0 0.0
  %1770 = vmatpush1.msra.mxu0 %v162
  %1771 = vmatprep.subr.mxu0 0.0
  %1772 = vmatpush1.msra.mxu0 %v163
  %1773 = vmatprep.subr.mxu0 0.0
  %1774 = vmatpush1.msra.mxu0 %v164
  %1775 = vmatprep.subr.mxu0 0.0
  %1776 = vmatpush1.msra.mxu0 0.0
  %1777 = vmatprep.subr.mxu0 0.0
  %1778 = vmatpush1.msra.mxu0 0.0
  %1779 = vmatprep.subr.mxu0 0.0
  %1780 = vmatpush1.msra.mxu0 0.0
  %1781 = vmatprep.subr.mxu0 0.0
  %1782 = vmatpush1.msra.mxu0 0.0
  %1783 = vmatprep.subr.mxu0 0.0
  %1784 = vmatpush1.msra.mxu0 0.0
  %1785 = vmatprep.subr.mxu0 0.0
  %1786 = vmatpush1.msra.mxu0 0.0
  %1787 = vmatprep.subr.mxu0 0.0
  %1788 = vmatpush1.msra.mxu0 0.0
  %1789 = vmatprep.subr.mxu0 0.0
  %1790 = vmatpush1.msra.mxu0 0.0
  %1791 = vmatprep.subr.mxu0 0.0
  %1792 = vmatpush1.msra.mxu0 0.0
  %1793 = vmatprep.subr.mxu0 0.0
  %1794 = vmatpush1.msra.mxu0 0.0
  %1795 = vmatprep.subr.mxu0 0.0
  %1796 = vmatpush1.msra.mxu0 0.0
  %1797 = vmatprep.subr.mxu0 0.0
  %1798 = vmatpush1.msra.mxu0 0.0
  %1799 = vmatprep.subr.mxu0 0.0
  %1800 = vmatpush1.msra.mxu0 0.0
  %1801 = vmatprep.subr.mxu0 0.0
  %1802 = vmatpush1.msra.mxu0 0.0
  %1803 = vmatprep.subr.mxu0 0.0
  %1804 = vmatpush1.msra.mxu0 0.0
  %1805 = vmatprep.subr.mxu0 0.0
  %1806 = vmatpush1.msra.mxu0 0.0
  %1807 = vmatprep.subr.mxu0 0.0
  %1808 = vmatpush1.msra.mxu0 0.0
  %1809 = vmatprep.subr.mxu0 0.0
  %1810 = vmatpush1.msra.mxu0 0.0
  %1811 = vmatprep.subr.mxu0 0.0
  %1812 = vmatpush1.msra.mxu0 0.0
  %1813 = vmatprep.subr.mxu0 0.0
  %1814 = vmatpush1.msra.mxu0 0.0
  %1815 = vmatprep.subr.mxu0 0.0
  %1816 = vmatpush1.msra.mxu0 0.0
  %1817 = vmatprep.subr.mxu0 0.0
  %1818 = vmatpush1.msra.mxu0 0.0
  %1819 = vmatprep.subr.mxu0 0.0
  %1820 = vmatpush1.msra.mxu0 0.0
  %1821 = vmatprep.subr.mxu0 0.0
  %1822 = vmatpush1.msra.mxu0 0.0
  %1823 = vmatprep.subr.mxu0 0.0
  %1824 = vmatpush1.msra.mxu0 0.0
  %1825 = vmatprep.subr.mxu0 0.0
  %1826 = vmatpush1.msra.mxu0 0.0
  %1827 = vmatprep.subr.mxu0 0.0
  %1828 = vmatpush1.msra.mxu0 0.0
  %1829 = vmatprep.subr.mxu0 0.0
  %1830 = vmatpush1.msra.mxu0 0.0
  %1831 = vmatprep.mubr.f32.mxu0 0.0
  %1832 = vmatmul.mubr.f32.gmra.mrb[0].mxu0 %v1765
  %v1833 = vpop.f32.mrb[0].mxu0
  %v1834 = vadd.f32 0.0, %v1833
  %v1835 = vpop.f32.mrb[0].mxu0
  %1836 = vdwg.mxu0
  %v1838 = vrot.slane %v1834, 1
  %v1841 = vadd.f32 %v1759, %v1834
  %v1842 = vadd.f32 %v1760, %v1838
  %v1843 = vxor.u32 %v1841, 2147483648
  %v1844 = vxor.u32 %v1842, 2147483648
  %v1845 = vmul.f32 %v1843, 1.442695
  %v1846 = vpow.pop %v1845
  %v1847 = vmul.f32 %v1844, 1.442695
  %v1848 = vpow.pop %v1847
  %v1849 = vadd.f32 %v1846, 1.0
  %v1850 = vadd.f32 %v1848, 1.0
  %v1851 = vrcp.pop %v1849
  %v1852 = vmul.f32 1.0, %v1851
  %v1853 = vrcp.pop %v1850
  %v1854 = vmul.f32 1.0, %v1853
  %v1855 = vtanh.pop %v1841
  %v1856 = vtanh.pop %v1842
  %v1857 = vmul.f32 %v1852, %v1718
  %v1858 = vmul.f32 %v1854, %v1719
  %1861 = vrot.lane.b32.xlu0 %v1855, 64
  %v1862 = vpop.permute.xlu0 %1861
  %1863 = vrot.lane.b32.xlu0 %v1856, 64
  %v1864 = vpop.permute.xlu0 %1863
  %v1867 = vmul.f32 %v1852, %v1862
  %v1868 = vmul.f32 %v1854, %v1864
  %1871 = vrot.lane.b32.xlu0 %v1867, 32
  %v1872 = vpop.permute.xlu0 %1871
  %1873 = vrot.lane.b32.xlu0 %v1868, 32
  %v1874 = vpop.permute.xlu0 %1873
  %v1877 = vadd.f32 %v1857, %v1872
  %v1878 = vadd.f32 %v1858, %v1874
  %v1879 = vtanh.pop %v1877
  %v1880 = vtanh.pop %v1878
  %1883 = vrot.lane.b32.xlu0 %v1879, 64
  %v1884 = vpop.permute.xlu0 %1883
  %1885 = vrot.lane.b32.xlu0 %v1880, 64
  %v1886 = vpop.permute.xlu0 %1885
  %v1889 = vmul.f32 %v1852, %v1884
  %v1890 = vmul.f32 %v1854, %v1886
  %v1894 = vunpack.c.l.s4 1983009808
  %v1895 = vunpack.c.0.s8 %v1894
  %v1896 = vlaneseq
  %v1897 = vshrl.u32 %v1896, 7
  %v1898 = vsub.s32 %v1895, %v1897
  %v1899 = vrot.slane %v1889, %v1898
  %v1901 = vunpack.c.l.s4 1983009808
  %v1902 = vunpack.c.0.s8 %v1901
  %v1903 = vlaneseq
  %v1904 = vshrl.u32 %v1903, 7
  %v1905 = vsub.s32 %v1902, %v1904
  %v1906 = vrot.slane %v1890, %v1905
  %v1907 = vsel %vm311, %v1899, %v1899
  %v1908 = vsel %vm313, %v1899, %v1907
  %v1909 = vrot.slane %v1906, 7
  %v1910 = vsel %vm316, %v1909, %v1908
  %v1911 = vsel %vm318, %v1909, %v1910
  %v1912 = vsel %vm320, %v1909, %v1911
  %v1913 = vsel %vm322, %v1909, %v1912
  %1914 = vrot.lane.b32.xlu0 %v1913, 96
  %v1915 = vpop.permute.xlu0 %1914
  %1917 = vst.msk [vmem:[#allocation3 + $0x4] sm:$0x3] %vm647, %v1915
  %v1918 = vld [vmem:[#allocation2 + $0xb] sm:$0x1]
  %v1919 = vld [vmem:[#allocation2 + $0x23] sm:$0x1]
  %v1920 = vrot.slane %v1890, 7
  %v1921 = vsel %vm316, %v1920, %v1889
  %1922 = vrot.lane.b32.xlu0 %v1921, 32
  %v1923 = vpop.permute.xlu0 %1922
  %v1924 = vsel %vm167, %v1923, 0
  %1926 = vmatprep.subr.mxu0 0.0
  %1927 = vmatpush1.msra.mxu0 %v161
  %1928 = vmatprep.subr.mxu0 0.0
  %1929 = vmatpush1.msra.mxu0 %v162
  %1930 = vmatprep.subr.mxu0 0.0
  %1931 = vmatpush1.msra.mxu0 %v163
  %1932 = vmatprep.subr.mxu0 0.0
  %1933 = vmatpush1.msra.mxu0 %v164
  %1934 = vmatprep.subr.mxu0 0.0
  %1935 = vmatpush1.msra.mxu0 0.0
  %1936 = vmatprep.subr.mxu0 0.0
  %1937 = vmatpush1.msra.mxu0 0.0
  %1938 = vmatprep.subr.mxu0 0.0
  %1939 = vmatpush1.msra.mxu0 0.0
  %1940 = vmatprep.subr.mxu0 0.0
  %1941 = vmatpush1.msra.mxu0 0.0
  %1942 = vmatprep.subr.mxu0 0.0
  %1943 = vmatpush1.msra.mxu0 0.0
  %1944 = vmatprep.subr.mxu0 0.0
  %1945 = vmatpush1.msra.mxu0 0.0
  %1946 = vmatprep.subr.mxu0 0.0
  %1947 = vmatpush1.msra.mxu0 0.0
  %1948 = vmatprep.subr.mxu0 0.0
  %1949 = vmatpush1.msra.mxu0 0.0
  %1950 = vmatprep.subr.mxu0 0.0
  %1951 = vmatpush1.msra.mxu0 0.0
  %1952 = vmatprep.subr.mxu0 0.0
  %1953 = vmatpush1.msra.mxu0 0.0
  %1954 = vmatprep.subr.mxu0 0.0
  %1955 = vmatpush1.msra.mxu0 0.0
  %1956 = vmatprep.subr.mxu0 0.0
  %1957 = vmatpush1.msra.mxu0 0.0
  %1958 = vmatprep.subr.mxu0 0.0
  %1959 = vmatpush1.msra.mxu0 0.0
  %1960 = vmatprep.subr.mxu0 0.0
  %1961 = vmatpush1.msra.mxu0 0.0
  %1962 = vmatprep.subr.mxu0 0.0
  %1963 = vmatpush1.msra.mxu0 0.0
  %1964 = vmatprep.subr.mxu0 0.0
  %1965 = vmatpush1.msra.mxu0 0.0
  %1966 = vmatprep.subr.mxu0 0.0
  %1967 = vmatpush1.msra.mxu0 0.0
  %1968 = vmatprep.subr.mxu0 0.0
  %1969 = vmatpush1.msra.mxu0 0.0
  %1970 = vmatprep.subr.mxu0 0.0
  %1971 = vmatpush1.msra.mxu0 0.0
  %1972 = vmatprep.subr.mxu0 0.0
  %1973 = vmatpush1.msra.mxu0 0.0
  %1974 = vmatprep.subr.mxu0 0.0
  %1975 = vmatpush1.msra.mxu0 0.0
  %1976 = vmatprep.subr.mxu0 0.0
  %1977 = vmatpush1.msra.mxu0 0.0
  %1978 = vmatprep.subr.mxu0 0.0
  %1979 = vmatpush1.msra.mxu0 0.0
  %1980 = vmatprep.subr.mxu0 0.0
  %1981 = vmatpush1.msra.mxu0 0.0
  %1982 = vmatprep.subr.mxu0 0.0
  %1983 = vmatpush1.msra.mxu0 0.0
  %1984 = vmatprep.subr.mxu0 0.0
  %1985 = vmatpush1.msra.mxu0 0.0
  %1986 = vmatprep.subr.mxu0 0.0
  %1987 = vmatpush1.msra.mxu0 0.0
  %1988 = vmatprep.subr.mxu0 0.0
  %1989 = vmatpush1.msra.mxu0 0.0
  %1990 = vmatprep.mubr.f32.mxu0 0.0
  %1991 = vmatmul.mubr.f32.gmra.mrb[0].mxu0 %v1924
  %v1992 = vpop.f32.mrb[0].mxu0
  %v1993 = vadd.f32 0.0, %v1992
  %v1994 = vpop.f32.mrb[0].mxu0
  %1995 = vdwg.mxu0
  %v1997 = vrot.slane %v1993, 1
  %v2000 = vadd.f32 %v1918, %v1993
  %v2001 = vadd.f32 %v1919, %v1997
  %v2002 = vxor.u32 %v2000, 2147483648
  %v2003 = vxor.u32 %v2001, 2147483648
  %v2004 = vmul.f32 %v2002, 1.442695
  %v2005 = vpow.pop %v2004
  %v2006 = vmul.f32 %v2003, 1.442695
  %v2007 = vpow.pop %v2006
  %v2008 = vadd.f32 %v2005, 1.0
  %v2009 = vadd.f32 %v2007, 1.0
  %v2010 = vrcp.pop %v2008
  %v2011 = vmul.f32 1.0, %v2010
  %v2012 = vrcp.pop %v2009
  %v2013 = vmul.f32 1.0, %v2012
  %v2014 = vtanh.pop %v2000
  %v2015 = vtanh.pop %v2001
  %v2016 = vmul.f32 %v2011, %v1877
  %v2017 = vmul.f32 %v2013, %v1878
  %2020 = vrot.lane.b32.xlu0 %v2014, 64
  %v2021 = vpop.permute.xlu0 %2020
  %2022 = vrot.lane.b32.xlu0 %v2015, 64
  %v2023 = vpop.permute.xlu0 %2022
  %v2026 = vmul.f32 %v2011, %v2021
  %v2027 = vmul.f32 %v2013, %v2023
  %2030 = vrot.lane.b32.xlu0 %v2026, 32
  %v2031 = vpop.permute.xlu0 %2030
  %2032 = vrot.lane.b32.xlu0 %v2027, 32
  %v2033 = vpop.permute.xlu0 %2032
  %v2036 = vadd.f32 %v2016, %v2031
  %v2037 = vadd.f32 %v2017, %v2033
  %v2038 = vtanh.pop %v2036
  %v2039 = vtanh.pop %v2037
  %2042 = vrot.lane.b32.xlu0 %v2038, 64
  %v2043 = vpop.permute.xlu0 %2042
  %2044 = vrot.lane.b32.xlu0 %v2039, 64
  %v2045 = vpop.permute.xlu0 %2044
  %v2048 = vmul.f32 %v2011, %v2043
  %v2049 = vmul.f32 %v2013, %v2045
  %v2053 = vunpack.c.l.s4 1983009808
  %v2054 = vunpack.c.0.s8 %v2053
  %v2055 = vlaneseq
  %v2056 = vshrl.u32 %v2055, 7
  %v2057 = vsub.s32 %v2054, %v2056
  %v2058 = vrot.slane %v2048, %v2057
  %v2060 = vunpack.c.l.s4 1983009808
  %v2061 = vunpack.c.0.s8 %v2060
  %v2062 = vlaneseq
  %v2063 = vshrl.u32 %v2062, 7
  %v2064 = vsub.s32 %v2061, %v2063
  %v2065 = vrot.slane %v2049, %v2064
  %v2066 = vsel %vm311, %v2058, %v2058
  %v2067 = vsel %vm313, %v2058, %v2066
  %v2068 = vrot.slane %v2065, 7
  %v2069 = vsel %vm316, %v2068, %v2067
  %v2070 = vsel %vm318, %v2068, %v2069
  %v2071 = vsel %vm320, %v2068, %v2070
  %v2072 = vsel %vm322, %v2068, %v2071
  %2074 = vst.msk [vmem:[#allocation3 + $0x4] sm:$0x3] %vm805, %v2072
  %v2075 = vld [vmem:[#allocation2 + $0xc] sm:$0x1]
  %v2076 = vld [vmem:[#allocation2 + $0x24] sm:$0x1]
  %v2077 = vrot.slane %v2049, 7
  %v2078 = vsel %vm316, %v2077, %v2048
  %2079 = vrot.lane.b32.xlu0 %v2078, 32
  %v2080 = vpop.permute.xlu0 %2079
  %v2081 = vsel %vm167, %v2080, 0
  %2083 = vmatprep.subr.mxu0 0.0
  %2084 = vmatpush1.msra.mxu0 %v161
  %2085 = vmatprep.subr.mxu0 0.0
  %2086 = vmatpush1.msra.mxu0 %v162
  %2087 = vmatprep.subr.mxu0 0.0
  %2088 = vmatpush1.msra.mxu0 %v163
  %2089 = vmatprep.subr.mxu0 0.0
  %2090 = vmatpush1.msra.mxu0 %v164
  %2091 = vmatprep.subr.mxu0 0.0
  %2092 = vmatpush1.msra.mxu0 0.0
  %2093 = vmatprep.subr.mxu0 0.0
  %2094 = vmatpush1.msra.mxu0 0.0
  %2095 = vmatprep.subr.mxu0 0.0
  %2096 = vmatpush1.msra.mxu0 0.0
  %2097 = vmatprep.subr.mxu0 0.0
  %2098 = vmatpush1.msra.mxu0 0.0
  %2099 = vmatprep.subr.mxu0 0.0
  %2100 = vmatpush1.msra.mxu0 0.0
  %2101 = vmatprep.subr.mxu0 0.0
  %2102 = vmatpush1.msra.mxu0 0.0
  %2103 = vmatprep.subr.mxu0 0.0
  %2104 = vmatpush1.msra.mxu0 0.0
  %2105 = vmatprep.subr.mxu0 0.0
  %2106 = vmatpush1.msra.mxu0 0.0
  %2107 = vmatprep.subr.mxu0 0.0
  %2108 = vmatpush1.msra.mxu0 0.0
  %2109 = vmatprep.subr.mxu0 0.0
  %2110 = vmatpush1.msra.mxu0 0.0
  %2111 = vmatprep.subr.mxu0 0.0
  %2112 = vmatpush1.msra.mxu0 0.0
  %2113 = vmatprep.subr.mxu0 0.0
  %2114 = vmatpush1.msra.mxu0 0.0
  %2115 = vmatprep.subr.mxu0 0.0
  %2116 = vmatpush1.msra.mxu0 0.0
  %2117 = vmatprep.subr.mxu0 0.0
  %2118 = vmatpush1.msra.mxu0 0.0
  %2119 = vmatprep.subr.mxu0 0.0
  %2120 = vmatpush1.msra.mxu0 0.0
  %2121 = vmatprep.subr.mxu0 0.0
  %2122 = vmatpush1.msra.mxu0 0.0
  %2123 = vmatprep.subr.mxu0 0.0
  %2124 = vmatpush1.msra.mxu0 0.0
  %2125 = vmatprep.subr.mxu0 0.0
  %2126 = vmatpush1.msra.mxu0 0.0
  %2127 = vmatprep.subr.mxu0 0.0
  %2128 = vmatpush1.msra.mxu0 0.0
  %2129 = vmatprep.subr.mxu0 0.0
  %2130 = vmatpush1.msra.mxu0 0.0
  %2131 = vmatprep.subr.mxu0 0.0
  %2132 = vmatpush1.msra.mxu0 0.0
  %2133 = vmatprep.subr.mxu0 0.0
  %2134 = vmatpush1.msra.mxu0 0.0
  %2135 = vmatprep.subr.mxu0 0.0
  %2136 = vmatpush1.msra.mxu0 0.0
  %2137 = vmatprep.subr.mxu0 0.0
  %2138 = vmatpush1.msra.mxu0 0.0
  %2139 = vmatprep.subr.mxu0 0.0
  %2140 = vmatpush1.msra.mxu0 0.0
  %2141 = vmatprep.subr.mxu0 0.0
  %2142 = vmatpush1.msra.mxu0 0.0
  %2143 = vmatprep.subr.mxu0 0.0
  %2144 = vmatpush1.msra.mxu0 0.0
  %2145 = vmatprep.subr.mxu0 0.0
  %2146 = vmatpush1.msra.mxu0 0.0
  %2147 = vmatprep.mubr.f32.mxu0 0.0
  %2148 = vmatmul.mubr.f32.gmra.mrb[0].mxu0 %v2081
  %v2149 = vpop.f32.mrb[0].mxu0
  %v2150 = vadd.f32 0.0, %v2149
  %v2151 = vpop.f32.mrb[0].mxu0
  %2152 = vdwg.mxu0
  %v2154 = vrot.slane %v2150, 1
  %v2157 = vadd.f32 %v2075, %v2150
  %v2158 = vadd.f32 %v2076, %v2154
  %v2159 = vxor.u32 %v2157, 2147483648
  %v2160 = vxor.u32 %v2158, 2147483648
  %v2161 = vmul.f32 %v2159, 1.442695
  %v2162 = vpow.pop %v2161
  %v2163 = vmul.f32 %v2160, 1.442695
  %v2164 = vpow.pop %v2163
  %v2165 = vadd.f32 %v2162, 1.0
  %v2166 = vadd.f32 %v2164, 1.0
  %v2167 = vrcp.pop %v2165
  %v2168 = vmul.f32 1.0, %v2167
  %v2169 = vrcp.pop %v2166
  %v2170 = vmul.f32 1.0, %v2169
  %v2171 = vtanh.pop %v2157
  %v2172 = vtanh.pop %v2158
  %v2173 = vmul.f32 %v2168, %v2036
  %v2174 = vmul.f32 %v2170, %v2037
  %2177 = vrot.lane.b32.xlu0 %v2171, 64
  %v2178 = vpop.permute.xlu0 %2177
  %2179 = vrot.lane.b32.xlu0 %v2172, 64
  %v2180 = vpop.permute.xlu0 %2179
  %v2183 = vmul.f32 %v2168, %v2178
  %v2184 = vmul.f32 %v2170, %v2180
  %2187 = vrot.lane.b32.xlu0 %v2183, 32
  %v2188 = vpop.permute.xlu0 %2187
  %2189 = vrot.lane.b32.xlu0 %v2184, 32
  %v2190 = vpop.permute.xlu0 %2189
  %v2193 = vadd.f32 %v2173, %v2188
  %v2194 = vadd.f32 %v2174, %v2190
  %v2195 = vtanh.pop %v2193
  %v2196 = vtanh.pop %v2194
  %2199 = vrot.lane.b32.xlu0 %v2195, 64
  %v2200 = vpop.permute.xlu0 %2199
  %2201 = vrot.lane.b32.xlu0 %v2196, 64
  %v2202 = vpop.permute.xlu0 %2201
  %v2205 = vmul.f32 %v2168, %v2200
  %v2206 = vmul.f32 %v2170, %v2202
  %v2210 = vunpack.c.l.s4 1983009808
  %v2211 = vunpack.c.0.s8 %v2210
  %v2212 = vlaneseq
  %v2213 = vshrl.u32 %v2212, 7
  %v2214 = vsub.s32 %v2211, %v2213
  %v2215 = vrot.slane %v2205, %v2214
  %v2217 = vunpack.c.l.s4 1983009808
  %v2218 = vunpack.c.0.s8 %v2217
  %v2219 = vlaneseq
  %v2220 = vshrl.u32 %v2219, 7
  %v2221 = vsub.s32 %v2218, %v2220
  %v2222 = vrot.slane %v2206, %v2221
  %v2223 = vsel %vm311, %v2215, %v2215
  %v2224 = vsel %vm313, %v2215, %v2223
  %v2225 = vrot.slane %v2222, 7
  %v2226 = vsel %vm316, %v2225, %v2224
  %v2227 = vsel %vm318, %v2225, %v2226
  %v2228 = vsel %vm320, %v2225, %v2227
  %v2229 = vsel %vm322, %v2225, %v2228
  %2230 = vrot.lane.b32.xlu0 %v2229, 32
  %v2231 = vpop.permute.xlu0 %2230
  %2233 = vst.msk [vmem:[#allocation3 + $0x6] sm:$0x3] %vm327, %v2231
  %v2234 = vld [vmem:[#allocation2 + $0xd] sm:$0x1]
  %v2235 = vld [vmem:[#allocation2 + $0x25] sm:$0x1]
  %v2236 = vrot.slane %v2206, 7
  %v2237 = vsel %vm316, %v2236, %v2205
  %2238 = vrot.lane.b32.xlu0 %v2237, 32
  %v2239 = vpop.permute.xlu0 %2238
  %v2240 = vsel %vm167, %v2239, 0
  %2242 = vmatprep.subr.mxu0 0.0
  %2243 = vmatpush1.msra.mxu0 %v161
  %2244 = vmatprep.subr.mxu0 0.0
  %2245 = vmatpush1.msra.mxu0 %v162
  %2246 = vmatprep.subr.mxu0 0.0
  %2247 = vmatpush1.msra.mxu0 %v163
  %2248 = vmatprep.subr.mxu0 0.0
  %2249 = vmatpush1.msra.mxu0 %v164
  %2250 = vmatprep.subr.mxu0 0.0
  %2251 = vmatpush1.msra.mxu0 0.0
  %2252 = vmatprep.subr.mxu0 0.0
  %2253 = vmatpush1.msra.mxu0 0.0
  %2254 = vmatprep.subr.mxu0 0.0
  %2255 = vmatpush1.msra.mxu0 0.0
  %2256 = vmatprep.subr.mxu0 0.0
  %2257 = vmatpush1.msra.mxu0 0.0
  %2258 = vmatprep.subr.mxu0 0.0
  %2259 = vmatpush1.msra.mxu0 0.0
  %2260 = vmatprep.subr.mxu0 0.0
  %2261 = vmatpush1.msra.mxu0 0.0
  %2262 = vmatprep.subr.mxu0 0.0
  %2263 = vmatpush1.msra.mxu0 0.0
  %2264 = vmatprep.subr.mxu0 0.0
  %2265 = vmatpush1.msra.mxu0 0.0
  %2266 = vmatprep.subr.mxu0 0.0
  %2267 = vmatpush1.msra.mxu0 0.0
  %2268 = vmatprep.subr.mxu0 0.0
  %2269 = vmatpush1.msra.mxu0 0.0
  %2270 = vmatprep.subr.mxu0 0.0
  %2271 = vmatpush1.msra.mxu0 0.0
  %2272 = vmatprep.subr.mxu0 0.0
  %2273 = vmatpush1.msra.mxu0 0.0
  %2274 = vmatprep.subr.mxu0 0.0
  %2275 = vmatpush1.msra.mxu0 0.0
  %2276 = vmatprep.subr.mxu0 0.0
  %2277 = vmatpush1.msra.mxu0 0.0
  %2278 = vmatprep.subr.mxu0 0.0
  %2279 = vmatpush1.msra.mxu0 0.0
  %2280 = vmatprep.subr.mxu0 0.0
  %2281 = vmatpush1.msra.mxu0 0.0
  %2282 = vmatprep.subr.mxu0 0.0
  %2283 = vmatpush1.msra.mxu0 0.0
  %2284 = vmatprep.subr.mxu0 0.0
  %2285 = vmatpush1.msra.mxu0 0.0
  %2286 = vmatprep.subr.mxu0 0.0
  %2287 = vmatpush1.msra.mxu0 0.0
  %2288 = vmatprep.subr.mxu0 0.0
  %2289 = vmatpush1.msra.mxu0 0.0
  %2290 = vmatprep.subr.mxu0 0.0
  %2291 = vmatpush1.msra.mxu0 0.0
  %2292 = vmatprep.subr.mxu0 0.0
  %2293 = vmatpush1.msra.mxu0 0.0
  %2294 = vmatprep.subr.mxu0 0.0
  %2295 = vmatpush1.msra.mxu0 0.0
  %2296 = vmatprep.subr.mxu0 0.0
  %2297 = vmatpush1.msra.mxu0 0.0
  %2298 = vmatprep.subr.mxu0 0.0
  %2299 = vmatpush1.msra.mxu0 0.0
  %2300 = vmatprep.subr.mxu0 0.0
  %2301 = vmatpush1.msra.mxu0 0.0
  %2302 = vmatprep.subr.mxu0 0.0
  %2303 = vmatpush1.msra.mxu0 0.0
  %2304 = vmatprep.subr.mxu0 0.0
  %2305 = vmatpush1.msra.mxu0 0.0
  %2306 = vmatprep.mubr.f32.mxu0 0.0
  %2307 = vmatmul.mubr.f32.gmra.mrb[0].mxu0 %v2240
  %v2308 = vpop.f32.mrb[0].mxu0
  %v2309 = vadd.f32 0.0, %v2308
  %v2310 = vpop.f32.mrb[0].mxu0
  %2311 = vdwg.mxu0
  %v2313 = vrot.slane %v2309, 1
  %v2316 = vadd.f32 %v2234, %v2309
  %v2317 = vadd.f32 %v2235, %v2313
  %v2318 = vxor.u32 %v2316, 2147483648
  %v2319 = vxor.u32 %v2317, 2147483648
  %v2320 = vmul.f32 %v2318, 1.442695
  %v2321 = vpow.pop %v2320
  %v2322 = vmul.f32 %v2319, 1.442695
  %v2323 = vpow.pop %v2322
  %v2324 = vadd.f32 %v2321, 1.0
  %v2325 = vadd.f32 %v2323, 1.0
  %v2326 = vrcp.pop %v2324
  %v2327 = vmul.f32 1.0, %v2326
  %v2328 = vrcp.pop %v2325
  %v2329 = vmul.f32 1.0, %v2328
  %v2330 = vtanh.pop %v2316
  %v2331 = vtanh.pop %v2317
  %v2332 = vmul.f32 %v2327, %v2193
  %v2333 = vmul.f32 %v2329, %v2194
  %2336 = vrot.lane.b32.xlu0 %v2330, 64
  %v2337 = vpop.permute.xlu0 %2336
  %2338 = vrot.lane.b32.xlu0 %v2331, 64
  %v2339 = vpop.permute.xlu0 %2338
  %v2342 = vmul.f32 %v2327, %v2337
  %v2343 = vmul.f32 %v2329, %v2339
  %2346 = vrot.lane.b32.xlu0 %v2342, 32
  %v2347 = vpop.permute.xlu0 %2346
  %2348 = vrot.lane.b32.xlu0 %v2343, 32
  %v2349 = vpop.permute.xlu0 %2348
  %v2352 = vadd.f32 %v2332, %v2347
  %v2353 = vadd.f32 %v2333, %v2349
  %v2354 = vtanh.pop %v2352
  %v2355 = vtanh.pop %v2353
  %2358 = vrot.lane.b32.xlu0 %v2354, 64
  %v2359 = vpop.permute.xlu0 %2358
  %2360 = vrot.lane.b32.xlu0 %v2355, 64
  %v2361 = vpop.permute.xlu0 %2360
  %v2364 = vmul.f32 %v2327, %v2359
  %v2365 = vmul.f32 %v2329, %v2361
  %v2369 = vunpack.c.l.s4 1983009808
  %v2370 = vunpack.c.0.s8 %v2369
  %v2371 = vlaneseq
  %v2372 = vshrl.u32 %v2371, 7
  %v2373 = vsub.s32 %v2370, %v2372
  %v2374 = vrot.slane %v2364, %v2373
  %v2376 = vunpack.c.l.s4 1983009808
  %v2377 = vunpack.c.0.s8 %v2376
  %v2378 = vlaneseq
  %v2379 = vshrl.u32 %v2378, 7
  %v2380 = vsub.s32 %v2377, %v2379
  %v2381 = vrot.slane %v2365, %v2380
  %v2382 = vsel %vm311, %v2374, %v2374
  %v2383 = vsel %vm313, %v2374, %v2382
  %v2384 = vrot.slane %v2381, 7
  %v2385 = vsel %vm316, %v2384, %v2383
  %v2386 = vsel %vm318, %v2384, %v2385
  %v2387 = vsel %vm320, %v2384, %v2386
  %v2388 = vsel %vm322, %v2384, %v2387
  %2389 = vrot.lane.b32.xlu0 %v2388, 64
  %v2390 = vpop.permute.xlu0 %2389
  %2392 = vst.msk [vmem:[#allocation3 + $0x6] sm:$0x3] %vm487, %v2390
  %v2393 = vld [vmem:[#allocation2 + $0xe] sm:$0x1]
  %v2394 = vld [vmem:[#allocation2 + $0x26] sm:$0x1]
  %v2395 = vrot.slane %v2365, 7
  %v2396 = vsel %vm316, %v2395, %v2364
  %2397 = vrot.lane.b32.xlu0 %v2396, 32
  %v2398 = vpop.permute.xlu0 %2397
  %v2399 = vsel %vm167, %v2398, 0
  %2401 = vmatprep.subr.mxu0 0.0
  %2402 = vmatpush1.msra.mxu0 %v161
  %2403 = vmatprep.subr.mxu0 0.0
  %2404 = vmatpush1.msra.mxu0 %v162
  %2405 = vmatprep.subr.mxu0 0.0
  %2406 = vmatpush1.msra.mxu0 %v163
  %2407 = vmatprep.subr.mxu0 0.0
  %2408 = vmatpush1.msra.mxu0 %v164
  %2409 = vmatprep.subr.mxu0 0.0
  %2410 = vmatpush1.msra.mxu0 0.0
  %2411 = vmatprep.subr.mxu0 0.0
  %2412 = vmatpush1.msra.mxu0 0.0
  %2413 = vmatprep.subr.mxu0 0.0
  %2414 = vmatpush1.msra.mxu0 0.0
  %2415 = vmatprep.subr.mxu0 0.0
  %2416 = vmatpush1.msra.mxu0 0.0
  %2417 = vmatprep.subr.mxu0 0.0
  %2418 = vmatpush1.msra.mxu0 0.0
  %2419 = vmatprep.subr.mxu0 0.0
  %2420 = vmatpush1.msra.mxu0 0.0
  %2421 = vmatprep.subr.mxu0 0.0
  %2422 = vmatpush1.msra.mxu0 0.0
  %2423 = vmatprep.subr.mxu0 0.0
  %2424 = vmatpush1.msra.mxu0 0.0
  %2425 = vmatprep.subr.mxu0 0.0
  %2426 = vmatpush1.msra.mxu0 0.0
  %2427 = vmatprep.subr.mxu0 0.0
  %2428 = vmatpush1.msra.mxu0 0.0
  %2429 = vmatprep.subr.mxu0 0.0
  %2430 = vmatpush1.msra.mxu0 0.0
  %2431 = vmatprep.subr.mxu0 0.0
  %2432 = vmatpush1.msra.mxu0 0.0
  %2433 = vmatprep.subr.mxu0 0.0
  %2434 = vmatpush1.msra.mxu0 0.0
  %2435 = vmatprep.subr.mxu0 0.0
  %2436 = vmatpush1.msra.mxu0 0.0
  %2437 = vmatprep.subr.mxu0 0.0
  %2438 = vmatpush1.msra.mxu0 0.0
  %2439 = vmatprep.subr.mxu0 0.0
  %2440 = vmatpush1.msra.mxu0 0.0
  %2441 = vmatprep.subr.mxu0 0.0
  %2442 = vmatpush1.msra.mxu0 0.0
  %2443 = vmatprep.subr.mxu0 0.0
  %2444 = vmatpush1.msra.mxu0 0.0
  %2445 = vmatprep.subr.mxu0 0.0
  %2446 = vmatpush1.msra.mxu0 0.0
  %2447 = vmatprep.subr.mxu0 0.0
  %2448 = vmatpush1.msra.mxu0 0.0
  %2449 = vmatprep.subr.mxu0 0.0
  %2450 = vmatpush1.msra.mxu0 0.0
  %2451 = vmatprep.subr.mxu0 0.0
  %2452 = vmatpush1.msra.mxu0 0.0
  %2453 = vmatprep.subr.mxu0 0.0
  %2454 = vmatpush1.msra.mxu0 0.0
  %2455 = vmatprep.subr.mxu0 0.0
  %2456 = vmatpush1.msra.mxu0 0.0
  %2457 = vmatprep.subr.mxu0 0.0
  %2458 = vmatpush1.msra.mxu0 0.0
  %2459 = vmatprep.subr.mxu0 0.0
  %2460 = vmatpush1.msra.mxu0 0.0
  %2461 = vmatprep.subr.mxu0 0.0
  %2462 = vmatpush1.msra.mxu0 0.0
  %2463 = vmatprep.subr.mxu0 0.0
  %2464 = vmatpush1.msra.mxu0 0.0
  %2465 = vmatprep.mubr.f32.mxu0 0.0
  %2466 = vmatmul.mubr.f32.gmra.mrb[0].mxu0 %v2399
  %v2467 = vpop.f32.mrb[0].mxu0
  %v2468 = vadd.f32 0.0, %v2467
  %v2469 = vpop.f32.mrb[0].mxu0
  %2470 = vdwg.mxu0
  %v2472 = vrot.slane %v2468, 1
  %v2475 = vadd.f32 %v2393, %v2468
  %v2476 = vadd.f32 %v2394, %v2472
  %v2477 = vxor.u32 %v2475, 2147483648
  %v2478 = vxor.u32 %v2476, 2147483648
  %v2479 = vmul.f32 %v2477, 1.442695
  %v2480 = vpow.pop %v2479
  %v2481 = vmul.f32 %v2478, 1.442695
  %v2482 = vpow.pop %v2481
  %v2483 = vadd.f32 %v2480, 1.0
  %v2484 = vadd.f32 %v2482, 1.0
  %v2485 = vrcp.pop %v2483
  %v2486 = vmul.f32 1.0, %v2485
  %v2487 = vrcp.pop %v2484
  %v2488 = vmul.f32 1.0, %v2487
  %v2489 = vtanh.pop %v2475
  %v2490 = vtanh.pop %v2476
  %v2491 = vmul.f32 %v2486, %v2352
  %v2492 = vmul.f32 %v2488, %v2353
  %2495 = vrot.lane.b32.xlu0 %v2489, 64
  %v2496 = vpop.permute.xlu0 %2495
  %2497 = vrot.lane.b32.xlu0 %v2490, 64
  %v2498 = vpop.permute.xlu0 %2497
  %v2501 = vmul.f32 %v2486, %v2496
  %v2502 = vmul.f32 %v2488, %v2498
  %2505 = vrot.lane.b32.xlu0 %v2501, 32
  %v2506 = vpop.permute.xlu0 %2505
  %2507 = vrot.lane.b32.xlu0 %v2502, 32
  %v2508 = vpop.permute.xlu0 %2507
  %v2511 = vadd.f32 %v2491, %v2506
  %v2512 = vadd.f32 %v2492, %v2508
  %v2513 = vtanh.pop %v2511
  %v2514 = vtanh.pop %v2512
  %2517 = vrot.lane.b32.xlu0 %v2513, 64
  %v2518 = vpop.permute.xlu0 %2517
  %2519 = vrot.lane.b32.xlu0 %v2514, 64
  %v2520 = vpop.permute.xlu0 %2519
  %v2523 = vmul.f32 %v2486, %v2518
  %v2524 = vmul.f32 %v2488, %v2520
  %v2528 = vunpack.c.l.s4 1983009808
  %v2529 = vunpack.c.0.s8 %v2528
  %v2530 = vlaneseq
  %v2531 = vshrl.u32 %v2530, 7
  %v2532 = vsub.s32 %v2529, %v2531
  %v2533 = vrot.slane %v2523, %v2532
  %v2535 = vunpack.c.l.s4 1983009808
  %v2536 = vunpack.c.0.s8 %v2535
  %v2537 = vlaneseq
  %v2538 = vshrl.u32 %v2537, 7
  %v2539 = vsub.s32 %v2536, %v2538
  %v2540 = vrot.slane %v2524, %v2539
  %v2541 = vsel %vm311, %v2533, %v2533
  %v2542 = vsel %vm313, %v2533, %v2541
  %v2543 = vrot.slane %v2540, 7
  %v2544 = vsel %vm316, %v2543, %v2542
  %v2545 = vsel %vm318, %v2543, %v2544
  %v2546 = vsel %vm320, %v2543, %v2545
  %v2547 = vsel %vm322, %v2543, %v2546
  %2548 = vrot.lane.b32.xlu0 %v2547, 96
  %v2549 = vpop.permute.xlu0 %2548
  %2551 = vst.msk [vmem:[#allocation3 + $0x6] sm:$0x3] %vm647, %v2549
  %v2552 = vld [vmem:[#allocation2 + $0xf] sm:$0x1]
  %v2553 = vld [vmem:[#allocation2 + $0x27] sm:$0x1]
  %v2554 = vrot.slane %v2524, 7
  %v2555 = vsel %vm316, %v2554, %v2523
  %2556 = vrot.lane.b32.xlu0 %v2555, 32
  %v2557 = vpop.permute.xlu0 %2556
  %v2558 = vsel %vm167, %v2557, 0
  %2560 = vmatprep.subr.mxu0 0.0
  %2561 = vmatpush1.msra.mxu0 %v161
  %2562 = vmatprep.subr.mxu0 0.0
  %2563 = vmatpush1.msra.mxu0 %v162
  %2564 = vmatprep.subr.mxu0 0.0
  %2565 = vmatpush1.msra.mxu0 %v163
  %2566 = vmatprep.subr.mxu0 0.0
  %2567 = vmatpush1.msra.mxu0 %v164
  %2568 = vmatprep.subr.mxu0 0.0
  %2569 = vmatpush1.msra.mxu0 0.0
  %2570 = vmatprep.subr.mxu0 0.0
  %2571 = vmatpush1.msra.mxu0 0.0
  %2572 = vmatprep.subr.mxu0 0.0
  %2573 = vmatpush1.msra.mxu0 0.0
  %2574 = vmatprep.subr.mxu0 0.0
  %2575 = vmatpush1.msra.mxu0 0.0
  %2576 = vmatprep.subr.mxu0 0.0
  %2577 = vmatpush1.msra.mxu0 0.0
  %2578 = vmatprep.subr.mxu0 0.0
  %2579 = vmatpush1.msra.mxu0 0.0
  %2580 = vmatprep.subr.mxu0 0.0
  %2581 = vmatpush1.msra.mxu0 0.0
  %2582 = vmatprep.subr.mxu0 0.0
  %2583 = vmatpush1.msra.mxu0 0.0
  %2584 = vmatprep.subr.mxu0 0.0
  %2585 = vmatpush1.msra.mxu0 0.0
  %2586 = vmatprep.subr.mxu0 0.0
  %2587 = vmatpush1.msra.mxu0 0.0
  %2588 = vmatprep.subr.mxu0 0.0
  %2589 = vmatpush1.msra.mxu0 0.0
  %2590 = vmatprep.subr.mxu0 0.0
  %2591 = vmatpush1.msra.mxu0 0.0
  %2592 = vmatprep.subr.mxu0 0.0
  %2593 = vmatpush1.msra.mxu0 0.0
  %2594 = vmatprep.subr.mxu0 0.0
  %2595 = vmatpush1.msra.mxu0 0.0
  %2596 = vmatprep.subr.mxu0 0.0
  %2597 = vmatpush1.msra.mxu0 0.0
  %2598 = vmatprep.subr.mxu0 0.0
  %2599 = vmatpush1.msra.mxu0 0.0
  %2600 = vmatprep.subr.mxu0 0.0
  %2601 = vmatpush1.msra.mxu0 0.0
  %2602 = vmatprep.subr.mxu0 0.0
  %2603 = vmatpush1.msra.mxu0 0.0
  %2604 = vmatprep.subr.mxu0 0.0
  %2605 = vmatpush1.msra.mxu0 0.0
  %2606 = vmatprep.subr.mxu0 0.0
  %2607 = vmatpush1.msra.mxu0 0.0
  %2608 = vmatprep.subr.mxu0 0.0
  %2609 = vmatpush1.msra.mxu0 0.0
  %2610 = vmatprep.subr.mxu0 0.0
  %2611 = vmatpush1.msra.mxu0 0.0
  %2612 = vmatprep.subr.mxu0 0.0
  %2613 = vmatpush1.msra.mxu0 0.0
  %2614 = vmatprep.subr.mxu0 0.0
  %2615 = vmatpush1.msra.mxu0 0.0
  %2616 = vmatprep.subr.mxu0 0.0
  %2617 = vmatpush1.msra.mxu0 0.0
  %2618 = vmatprep.subr.mxu0 0.0
  %2619 = vmatpush1.msra.mxu0 0.0
  %2620 = vmatprep.subr.mxu0 0.0
  %2621 = vmatpush1.msra.mxu0 0.0
  %2622 = vmatprep.subr.mxu0 0.0
  %2623 = vmatpush1.msra.mxu0 0.0
  %2624 = vmatprep.mubr.f32.mxu0 0.0
  %2625 = vmatmul.mubr.f32.gmra.mrb[0].mxu0 %v2558
  %v2626 = vpop.f32.mrb[0].mxu0
  %v2627 = vadd.f32 0.0, %v2626
  %v2628 = vpop.f32.mrb[0].mxu0
  %2629 = vdwg.mxu0
  %v2631 = vrot.slane %v2627, 1
  %v2634 = vadd.f32 %v2552, %v2627
  %v2635 = vadd.f32 %v2553, %v2631
  %v2636 = vxor.u32 %v2634, 2147483648
  %v2637 = vxor.u32 %v2635, 2147483648
  %v2638 = vmul.f32 %v2636, 1.442695
  %v2639 = vpow.pop %v2638
  %v2640 = vmul.f32 %v2637, 1.442695
  %v2641 = vpow.pop %v2640
  %v2642 = vadd.f32 %v2639, 1.0
  %v2643 = vadd.f32 %v2641, 1.0
  %v2644 = vrcp.pop %v2642
  %v2645 = vmul.f32 1.0, %v2644
  %v2646 = vrcp.pop %v2643
  %v2647 = vmul.f32 1.0, %v2646
  %v2648 = vtanh.pop %v2634
  %v2649 = vtanh.pop %v2635
  %v2650 = vmul.f32 %v2645, %v2511
  %v2651 = vmul.f32 %v2647, %v2512
  %2654 = vrot.lane.b32.xlu0 %v2648, 64
  %v2655 = vpop.permute.xlu0 %2654
  %2656 = vrot.lane.b32.xlu0 %v2649, 64
  %v2657 = vpop.permute.xlu0 %2656
  %v2660 = vmul.f32 %v2645, %v2655
  %v2661 = vmul.f32 %v2647, %v2657
  %2664 = vrot.lane.b32.xlu0 %v2660, 32
  %v2665 = vpop.permute.xlu0 %2664
  %2666 = vrot.lane.b32.xlu0 %v2661, 32
  %v2667 = vpop.permute.xlu0 %2666
  %v2670 = vadd.f32 %v2650, %v2665
  %v2671 = vadd.f32 %v2651, %v2667
  %v2672 = vtanh.pop %v2670
  %v2673 = vtanh.pop %v2671
  %2676 = vrot.lane.b32.xlu0 %v2672, 64
  %v2677 = vpop.permute.xlu0 %2676
  %2678 = vrot.lane.b32.xlu0 %v2673, 64
  %v2679 = vpop.permute.xlu0 %2678
  %v2682 = vmul.f32 %v2645, %v2677
  %v2683 = vmul.f32 %v2647, %v2679
  %v2687 = vunpack.c.l.s4 1983009808
  %v2688 = vunpack.c.0.s8 %v2687
  %v2689 = vlaneseq
  %v2690 = vshrl.u32 %v2689, 7
  %v2691 = vsub.s32 %v2688, %v2690
  %v2692 = vrot.slane %v2682, %v2691
  %v2694 = vunpack.c.l.s4 1983009808
  %v2695 = vunpack.c.0.s8 %v2694
  %v2696 = vlaneseq
  %v2697 = vshrl.u32 %v2696, 7
  %v2698 = vsub.s32 %v2695, %v2697
  %v2699 = vrot.slane %v2683, %v2698
  %v2700 = vsel %vm311, %v2692, %v2692
  %v2701 = vsel %vm313, %v2692, %v2700
  %v2702 = vrot.slane %v2699, 7
  %v2703 = vsel %vm316, %v2702, %v2701
  %v2704 = vsel %vm318, %v2702, %v2703
  %v2705 = vsel %vm320, %v2702, %v2704
  %v2706 = vsel %vm322, %v2702, %v2705
  %2708 = vst.msk [vmem:[#allocation3 + $0x6] sm:$0x3] %vm805, %v2706
  %v2709 = vld [vmem:[#allocation2 + $0x10] sm:$0x1]
  %v2710 = vld [vmem:[#allocation2 + $0x28] sm:$0x1]
  %v2711 = vrot.slane %v2683, 7
  %v2712 = vsel %vm316, %v2711, %v2682
  %2713 = vrot.lane.b32.xlu0 %v2712, 32
  %v2714 = vpop.permute.xlu0 %2713
  %v2715 = vsel %vm167, %v2714, 0
  %2717 = vmatprep.subr.mxu0 0.0
  %2718 = vmatpush1.msra.mxu0 %v161
  %2719 = vmatprep.subr.mxu0 0.0
  %2720 = vmatpush1.msra.mxu0 %v162
  %2721 = vmatprep.subr.mxu0 0.0
  %2722 = vmatpush1.msra.mxu0 %v163
  %2723 = vmatprep.subr.mxu0 0.0
  %2724 = vmatpush1.msra.mxu0 %v164
  %2725 = vmatprep.subr.mxu0 0.0
  %2726 = vmatpush1.msra.mxu0 0.0
  %2727 = vmatprep.subr.mxu0 0.0
  %2728 = vmatpush1.msra.mxu0 0.0
  %2729 = vmatprep.subr.mxu0 0.0
  %2730 = vmatpush1.msra.mxu0 0.0
  %2731 = vmatprep.subr.mxu0 0.0
  %2732 = vmatpush1.msra.mxu0 0.0
  %2733 = vmatprep.subr.mxu0 0.0
  %2734 = vmatpush1.msra.mxu0 0.0
  %2735 = vmatprep.subr.mxu0 0.0
  %2736 = vmatpush1.msra.mxu0 0.0
  %2737 = vmatprep.subr.mxu0 0.0
  %2738 = vmatpush1.msra.mxu0 0.0
  %2739 = vmatprep.subr.mxu0 0.0
  %2740 = vmatpush1.msra.mxu0 0.0
  %2741 = vmatprep.subr.mxu0 0.0
  %2742 = vmatpush1.msra.mxu0 0.0
  %2743 = vmatprep.subr.mxu0 0.0
  %2744 = vmatpush1.msra.mxu0 0.0
  %2745 = vmatprep.subr.mxu0 0.0
  %2746 = vmatpush1.msra.mxu0 0.0
  %2747 = vmatprep.subr.mxu0 0.0
  %2748 = vmatpush1.msra.mxu0 0.0
  %2749 = vmatprep.subr.mxu0 0.0
  %2750 = vmatpush1.msra.mxu0 0.0
  %2751 = vmatprep.subr.mxu0 0.0
  %2752 = vmatpush1.msra.mxu0 0.0
  %2753 = vmatprep.subr.mxu0 0.0
  %2754 = vmatpush1.msra.mxu0 0.0
  %2755 = vmatprep.subr.mxu0 0.0
  %2756 = vmatpush1.msra.mxu0 0.0
  %2757 = vmatprep.subr.mxu0 0.0
  %2758 = vmatpush1.msra.mxu0 0.0
  %2759 = vmatprep.subr.mxu0 0.0
  %2760 = vmatpush1.msra.mxu0 0.0
  %2761 = vmatprep.subr.mxu0 0.0
  %2762 = vmatpush1.msra.mxu0 0.0
  %2763 = vmatprep.subr.mxu0 0.0
  %2764 = vmatpush1.msra.mxu0 0.0
  %2765 = vmatprep.subr.mxu0 0.0
  %2766 = vmatpush1.msra.mxu0 0.0
  %2767 = vmatprep.subr.mxu0 0.0
  %2768 = vmatpush1.msra.mxu0 0.0
  %2769 = vmatprep.subr.mxu0 0.0
  %2770 = vmatpush1.msra.mxu0 0.0
  %2771 = vmatprep.subr.mxu0 0.0
  %2772 = vmatpush1.msra.mxu0 0.0
  %2773 = vmatprep.subr.mxu0 0.0
  %2774 = vmatpush1.msra.mxu0 0.0
  %2775 = vmatprep.subr.mxu0 0.0
  %2776 = vmatpush1.msra.mxu0 0.0
  %2777 = vmatprep.subr.mxu0 0.0
  %2778 = vmatpush1.msra.mxu0 0.0
  %2779 = vmatprep.subr.mxu0 0.0
  %2780 = vmatpush1.msra.mxu0 0.0
  %2781 = vmatprep.mubr.f32.mxu0 0.0
  %2782 = vmatmul.mubr.f32.gmra.mrb[0].mxu0 %v2715
  %v2783 = vpop.f32.mrb[0].mxu0
  %v2784 = vadd.f32 0.0, %v2783
  %v2785 = vpop.f32.mrb[0].mxu0
  %2786 = vdwg.mxu0
  %v2788 = vrot.slane %v2784, 1
  %v2791 = vadd.f32 %v2709, %v2784
  %v2792 = vadd.f32 %v2710, %v2788
  %v2793 = vxor.u32 %v2791, 2147483648
  %v2794 = vxor.u32 %v2792, 2147483648
  %v2795 = vmul.f32 %v2793, 1.442695
  %v2796 = vpow.pop %v2795
  %v2797 = vmul.f32 %v2794, 1.442695
  %v2798 = vpow.pop %v2797
  %v2799 = vadd.f32 %v2796, 1.0
  %v2800 = vadd.f32 %v2798, 1.0
  %v2801 = vrcp.pop %v2799
  %v2802 = vmul.f32 1.0, %v2801
  %v2803 = vrcp.pop %v2800
  %v2804 = vmul.f32 1.0, %v2803
  %v2805 = vtanh.pop %v2791
  %v2806 = vtanh.pop %v2792
  %v2807 = vmul.f32 %v2802, %v2670
  %v2808 = vmul.f32 %v2804, %v2671
  %2811 = vrot.lane.b32.xlu0 %v2805, 64
  %v2812 = vpop.permute.xlu0 %2811
  %2813 = vrot.lane.b32.xlu0 %v2806, 64
  %v2814 = vpop.permute.xlu0 %2813
  %v2817 = vmul.f32 %v2802, %v2812
  %v2818 = vmul.f32 %v2804, %v2814
  %2821 = vrot.lane.b32.xlu0 %v2817, 32
  %v2822 = vpop.permute.xlu0 %2821
  %2823 = vrot.lane.b32.xlu0 %v2818, 32
  %v2824 = vpop.permute.xlu0 %2823
  %v2827 = vadd.f32 %v2807, %v2822
  %v2828 = vadd.f32 %v2808, %v2824
  %v2829 = vtanh.pop %v2827
  %v2830 = vtanh.pop %v2828
  %2833 = vrot.lane.b32.xlu0 %v2829, 64
  %v2834 = vpop.permute.xlu0 %2833
  %2835 = vrot.lane.b32.xlu0 %v2830, 64
  %v2836 = vpop.permute.xlu0 %2835
  %v2839 = vmul.f32 %v2802, %v2834
  %v2840 = vmul.f32 %v2804, %v2836
  %v2844 = vunpack.c.l.s4 1983009808
  %v2845 = vunpack.c.0.s8 %v2844
  %v2846 = vlaneseq
  %v2847 = vshrl.u32 %v2846, 7
  %v2848 = vsub.s32 %v2845, %v2847
  %v2849 = vrot.slane %v2839, %v2848
  %v2851 = vunpack.c.l.s4 1983009808
  %v2852 = vunpack.c.0.s8 %v2851
  %v2853 = vlaneseq
  %v2854 = vshrl.u32 %v2853, 7
  %v2855 = vsub.s32 %v2852, %v2854
  %v2856 = vrot.slane %v2840, %v2855
  %v2857 = vsel %vm311, %v2849, %v2849
  %v2858 = vsel %vm313, %v2849, %v2857
  %v2859 = vrot.slane %v2856, 7
  %v2860 = vsel %vm316, %v2859, %v2858
  %v2861 = vsel %vm318, %v2859, %v2860
  %v2862 = vsel %vm320, %v2859, %v2861
  %v2863 = vsel %vm322, %v2859, %v2862
  %2864 = vrot.lane.b32.xlu0 %v2863, 32
  %v2865 = vpop.permute.xlu0 %2864
  %2867 = vst.msk [vmem:[#allocation3 + $0x8] sm:$0x3] %vm327, %v2865
  %v2868 = vld [vmem:[#allocation2 + $0x11] sm:$0x1]
  %v2869 = vld [vmem:[#allocation2 + $0x29] sm:$0x1]
  %v2870 = vrot.slane %v2840, 7
  %v2871 = vsel %vm316, %v2870, %v2839
  %2872 = vrot.lane.b32.xlu0 %v2871, 32
  %v2873 = vpop.permute.xlu0 %2872
  %v2874 = vsel %vm167, %v2873, 0
  %2876 = vmatprep.subr.mxu0 0.0
  %2877 = vmatpush1.msra.mxu0 %v161
  %2878 = vmatprep.subr.mxu0 0.0
  %2879 = vmatpush1.msra.mxu0 %v162
  %2880 = vmatprep.subr.mxu0 0.0
  %2881 = vmatpush1.msra.mxu0 %v163
  %2882 = vmatprep.subr.mxu0 0.0
  %2883 = vmatpush1.msra.mxu0 %v164
  %2884 = vmatprep.subr.mxu0 0.0
  %2885 = vmatpush1.msra.mxu0 0.0
  %2886 = vmatprep.subr.mxu0 0.0
  %2887 = vmatpush1.msra.mxu0 0.0
  %2888 = vmatprep.subr.mxu0 0.0
  %2889 = vmatpush1.msra.mxu0 0.0
  %2890 = vmatprep.subr.mxu0 0.0
  %2891 = vmatpush1.msra.mxu0 0.0
  %2892 = vmatprep.subr.mxu0 0.0
  %2893 = vmatpush1.msra.mxu0 0.0
  %2894 = vmatprep.subr.mxu0 0.0
  %2895 = vmatpush1.msra.mxu0 0.0
  %2896 = vmatprep.subr.mxu0 0.0
  %2897 = vmatpush1.msra.mxu0 0.0
  %2898 = vmatprep.subr.mxu0 0.0
  %2899 = vmatpush1.msra.mxu0 0.0
  %2900 = vmatprep.subr.mxu0 0.0
  %2901 = vmatpush1.msra.mxu0 0.0
  %2902 = vmatprep.subr.mxu0 0.0
  %2903 = vmatpush1.msra.mxu0 0.0
  %2904 = vmatprep.subr.mxu0 0.0
  %2905 = vmatpush1.msra.mxu0 0.0
  %2906 = vmatprep.subr.mxu0 0.0
  %2907 = vmatpush1.msra.mxu0 0.0
  %2908 = vmatprep.subr.mxu0 0.0
  %2909 = vmatpush1.msra.mxu0 0.0
  %2910 = vmatprep.subr.mxu0 0.0
  %2911 = vmatpush1.msra.mxu0 0.0
  %2912 = vmatprep.subr.mxu0 0.0
  %2913 = vmatpush1.msra.mxu0 0.0
  %2914 = vmatprep.subr.mxu0 0.0
  %2915 = vmatpush1.msra.mxu0 0.0
  %2916 = vmatprep.subr.mxu0 0.0
  %2917 = vmatpush1.msra.mxu0 0.0
  %2918 = vmatprep.subr.mxu0 0.0
  %2919 = vmatpush1.msra.mxu0 0.0
  %2920 = vmatprep.subr.mxu0 0.0
  %2921 = vmatpush1.msra.mxu0 0.0
  %2922 = vmatprep.subr.mxu0 0.0
  %2923 = vmatpush1.msra.mxu0 0.0
  %2924 = vmatprep.subr.mxu0 0.0
  %2925 = vmatpush1.msra.mxu0 0.0
  %2926 = vmatprep.subr.mxu0 0.0
  %2927 = vmatpush1.msra.mxu0 0.0
  %2928 = vmatprep.subr.mxu0 0.0
  %2929 = vmatpush1.msra.mxu0 0.0
  %2930 = vmatprep.subr.mxu0 0.0
  %2931 = vmatpush1.msra.mxu0 0.0
  %2932 = vmatprep.subr.mxu0 0.0
  %2933 = vmatpush1.msra.mxu0 0.0
  %2934 = vmatprep.subr.mxu0 0.0
  %2935 = vmatpush1.msra.mxu0 0.0
  %2936 = vmatprep.subr.mxu0 0.0
  %2937 = vmatpush1.msra.mxu0 0.0
  %2938 = vmatprep.subr.mxu0 0.0
  %2939 = vmatpush1.msra.mxu0 0.0
  %2940 = vmatprep.mubr.f32.mxu0 0.0
  %2941 = vmatmul.mubr.f32.gmra.mrb[0].mxu0 %v2874
  %v2942 = vpop.f32.mrb[0].mxu0
  %v2943 = vadd.f32 0.0, %v2942
  %v2944 = vpop.f32.mrb[0].mxu0
  %2945 = vdwg.mxu0
  %v2947 = vrot.slane %v2943, 1
  %v2950 = vadd.f32 %v2868, %v2943
  %v2951 = vadd.f32 %v2869, %v2947
  %v2952 = vxor.u32 %v2950, 2147483648
  %v2953 = vxor.u32 %v2951, 2147483648
  %v2954 = vmul.f32 %v2952, 1.442695
  %v2955 = vpow.pop %v2954
  %v2956 = vmul.f32 %v2953, 1.442695
  %v2957 = vpow.pop %v2956
  %v2958 = vadd.f32 %v2955, 1.0
  %v2959 = vadd.f32 %v2957, 1.0
  %v2960 = vrcp.pop %v2958
  %v2961 = vmul.f32 1.0, %v2960
  %v2962 = vrcp.pop %v2959
  %v2963 = vmul.f32 1.0, %v2962
  %v2964 = vtanh.pop %v2950
  %v2965 = vtanh.pop %v2951
  %v2966 = vmul.f32 %v2961, %v2827
  %v2967 = vmul.f32 %v2963, %v2828
  %2970 = vrot.lane.b32.xlu0 %v2964, 64
  %v2971 = vpop.permute.xlu0 %2970
  %2972 = vrot.lane.b32.xlu0 %v2965, 64
  %v2973 = vpop.permute.xlu0 %2972
  %v2976 = vmul.f32 %v2961, %v2971
  %v2977 = vmul.f32 %v2963, %v2973
  %2980 = vrot.lane.b32.xlu0 %v2976, 32
  %v2981 = vpop.permute.xlu0 %2980
  %2982 = vrot.lane.b32.xlu0 %v2977, 32
  %v2983 = vpop.permute.xlu0 %2982
  %v2986 = vadd.f32 %v2966, %v2981
  %v2987 = vadd.f32 %v2967, %v2983
  %v2988 = vtanh.pop %v2986
  %v2989 = vtanh.pop %v2987
  %2992 = vrot.lane.b32.xlu0 %v2988, 64
  %v2993 = vpop.permute.xlu0 %2992
  %2994 = vrot.lane.b32.xlu0 %v2989, 64
  %v2995 = vpop.permute.xlu0 %2994
  %v2998 = vmul.f32 %v2961, %v2993
  %v2999 = vmul.f32 %v2963, %v2995
  %v3003 = vunpack.c.l.s4 1983009808
  %v3004 = vunpack.c.0.s8 %v3003
  %v3005 = vlaneseq
  %v3006 = vshrl.u32 %v3005, 7
  %v3007 = vsub.s32 %v3004, %v3006
  %v3008 = vrot.slane %v2998, %v3007
  %v3010 = vunpack.c.l.s4 1983009808
  %v3011 = vunpack.c.0.s8 %v3010
  %v3012 = vlaneseq
  %v3013 = vshrl.u32 %v3012, 7
  %v3014 = vsub.s32 %v3011, %v3013
  %v3015 = vrot.slane %v2999, %v3014
  %v3016 = vsel %vm311, %v3008, %v3008
  %v3017 = vsel %vm313, %v3008, %v3016
  %v3018 = vrot.slane %v3015, 7
  %v3019 = vsel %vm316, %v3018, %v3017
  %v3020 = vsel %vm318, %v3018, %v3019
  %v3021 = vsel %vm320, %v3018, %v3020
  %v3022 = vsel %vm322, %v3018, %v3021
  %3023 = vrot.lane.b32.xlu0 %v3022, 64
  %v3024 = vpop.permute.xlu0 %3023
  %3026 = vst.msk [vmem:[#allocation3 + $0x8] sm:$0x3] %vm487, %v3024
  %v3027 = vld [vmem:[#allocation2 + $0x12] sm:$0x1]
  %v3028 = vld [vmem:[#allocation2 + $0x2a] sm:$0x1]
  %v3029 = vrot.slane %v2999, 7
  %v3030 = vsel %vm316, %v3029, %v2998
  %3031 = vrot.lane.b32.xlu0 %v3030, 32
  %v3032 = vpop.permute.xlu0 %3031
  %v3033 = vsel %vm167, %v3032, 0
  %3035 = vmatprep.subr.mxu0 0.0
  %3036 = vmatpush1.msra.mxu0 %v161
  %3037 = vmatprep.subr.mxu0 0.0
  %3038 = vmatpush1.msra.mxu0 %v162
  %3039 = vmatprep.subr.mxu0 0.0
  %3040 = vmatpush1.msra.mxu0 %v163
  %3041 = vmatprep.subr.mxu0 0.0
  %3042 = vmatpush1.msra.mxu0 %v164
  %3043 = vmatprep.subr.mxu0 0.0
  %3044 = vmatpush1.msra.mxu0 0.0
  %3045 = vmatprep.subr.mxu0 0.0
  %3046 = vmatpush1.msra.mxu0 0.0
  %3047 = vmatprep.subr.mxu0 0.0
  %3048 = vmatpush1.msra.mxu0 0.0
  %3049 = vmatprep.subr.mxu0 0.0
  %3050 = vmatpush1.msra.mxu0 0.0
  %3051 = vmatprep.subr.mxu0 0.0
  %3052 = vmatpush1.msra.mxu0 0.0
  %3053 = vmatprep.subr.mxu0 0.0
  %3054 = vmatpush1.msra.mxu0 0.0
  %3055 = vmatprep.subr.mxu0 0.0
  %3056 = vmatpush1.msra.mxu0 0.0
  %3057 = vmatprep.subr.mxu0 0.0
  %3058 = vmatpush1.msra.mxu0 0.0
  %3059 = vmatprep.subr.mxu0 0.0
  %3060 = vmatpush1.msra.mxu0 0.0
  %3061 = vmatprep.subr.mxu0 0.0
  %3062 = vmatpush1.msra.mxu0 0.0
  %3063 = vmatprep.subr.mxu0 0.0
  %3064 = vmatpush1.msra.mxu0 0.0
  %3065 = vmatprep.subr.mxu0 0.0
  %3066 = vmatpush1.msra.mxu0 0.0
  %3067 = vmatprep.subr.mxu0 0.0
  %3068 = vmatpush1.msra.mxu0 0.0
  %3069 = vmatprep.subr.mxu0 0.0
  %3070 = vmatpush1.msra.mxu0 0.0
  %3071 = vmatprep.subr.mxu0 0.0
  %3072 = vmatpush1.msra.mxu0 0.0
  %3073 = vmatprep.subr.mxu0 0.0
  %3074 = vmatpush1.msra.mxu0 0.0
  %3075 = vmatprep.subr.mxu0 0.0
  %3076 = vmatpush1.msra.mxu0 0.0
  %3077 = vmatprep.subr.mxu0 0.0
  %3078 = vmatpush1.msra.mxu0 0.0
  %3079 = vmatprep.subr.mxu0 0.0
  %3080 = vmatpush1.msra.mxu0 0.0
  %3081 = vmatprep.subr.mxu0 0.0
  %3082 = vmatpush1.msra.mxu0 0.0
  %3083 = vmatprep.subr.mxu0 0.0
  %3084 = vmatpush1.msra.mxu0 0.0
  %3085 = vmatprep.subr.mxu0 0.0
  %3086 = vmatpush1.msra.mxu0 0.0
  %3087 = vmatprep.subr.mxu0 0.0
  %3088 = vmatpush1.msra.mxu0 0.0
  %3089 = vmatprep.subr.mxu0 0.0
  %3090 = vmatpush1.msra.mxu0 0.0
  %3091 = vmatprep.subr.mxu0 0.0
  %3092 = vmatpush1.msra.mxu0 0.0
  %3093 = vmatprep.subr.mxu0 0.0
  %3094 = vmatpush1.msra.mxu0 0.0
  %3095 = vmatprep.subr.mxu0 0.0
  %3096 = vmatpush1.msra.mxu0 0.0
  %3097 = vmatprep.subr.mxu0 0.0
  %3098 = vmatpush1.msra.mxu0 0.0
  %3099 = vmatprep.mubr.f32.mxu0 0.0
  %3100 = vmatmul.mubr.f32.gmra.mrb[0].mxu0 %v3033
  %v3101 = vpop.f32.mrb[0].mxu0
  %v3102 = vadd.f32 0.0, %v3101
  %v3103 = vpop.f32.mrb[0].mxu0
  %3104 = vdwg.mxu0
  %v3106 = vrot.slane %v3102, 1
  %v3109 = vadd.f32 %v3027, %v3102
  %v3110 = vadd.f32 %v3028, %v3106
  %v3111 = vxor.u32 %v3109, 2147483648
  %v3112 = vxor.u32 %v3110, 2147483648
  %v3113 = vmul.f32 %v3111, 1.442695
  %v3114 = vpow.pop %v3113
  %v3115 = vmul.f32 %v3112, 1.442695
  %v3116 = vpow.pop %v3115
  %v3117 = vadd.f32 %v3114, 1.0
  %v3118 = vadd.f32 %v3116, 1.0
  %v3119 = vrcp.pop %v3117
  %v3120 = vmul.f32 1.0, %v3119
  %v3121 = vrcp.pop %v3118
  %v3122 = vmul.f32 1.0, %v3121
  %v3123 = vtanh.pop %v3109
  %v3124 = vtanh.pop %v3110
  %v3125 = vmul.f32 %v3120, %v2986
  %v3126 = vmul.f32 %v3122, %v2987
  %3129 = vrot.lane.b32.xlu0 %v3123, 64
  %v3130 = vpop.permute.xlu0 %3129
  %3131 = vrot.lane.b32.xlu0 %v3124, 64
  %v3132 = vpop.permute.xlu0 %3131
  %v3135 = vmul.f32 %v3120, %v3130
  %v3136 = vmul.f32 %v3122, %v3132
  %3139 = vrot.lane.b32.xlu0 %v3135, 32
  %v3140 = vpop.permute.xlu0 %3139
  %3141 = vrot.lane.b32.xlu0 %v3136, 32
  %v3142 = vpop.permute.xlu0 %3141
  %v3145 = vadd.f32 %v3125, %v3140
  %v3146 = vadd.f32 %v3126, %v3142
  %v3147 = vtanh.pop %v3145
  %v3148 = vtanh.pop %v3146
  %3151 = vrot.lane.b32.xlu0 %v3147, 64
  %v3152 = vpop.permute.xlu0 %3151
  %3153 = vrot.lane.b32.xlu0 %v3148, 64
  %v3154 = vpop.permute.xlu0 %3153
  %v3157 = vmul.f32 %v3120, %v3152
  %v3158 = vmul.f32 %v3122, %v3154
  %v3162 = vunpack.c.l.s4 1983009808
  %v3163 = vunpack.c.0.s8 %v3162
  %v3164 = vlaneseq
  %v3165 = vshrl.u32 %v3164, 7
  %v3166 = vsub.s32 %v3163, %v3165
  %v3167 = vrot.slane %v3157, %v3166
  %v3169 = vunpack.c.l.s4 1983009808
  %v3170 = vunpack.c.0.s8 %v3169
  %v3171 = vlaneseq
  %v3172 = vshrl.u32 %v3171, 7
  %v3173 = vsub.s32 %v3170, %v3172
  %v3174 = vrot.slane %v3158, %v3173
  %v3175 = vsel %vm311, %v3167, %v3167
  %v3176 = vsel %vm313, %v3167, %v3175
  %v3177 = vrot.slane %v3174, 7
  %v3178 = vsel %vm316, %v3177, %v3176
  %v3179 = vsel %vm318, %v3177, %v3178
  %v3180 = vsel %vm320, %v3177, %v3179
  %v3181 = vsel %vm322, %v3177, %v3180
  %3182 = vrot.lane.b32.xlu0 %v3181, 96
  %v3183 = vpop.permute.xlu0 %3182
  %3185 = vst.msk [vmem:[#allocation3 + $0x8] sm:$0x3] %vm647, %v3183
  %v3186 = vld [vmem:[#allocation2 + $0x13] sm:$0x1]
  %v3187 = vld [vmem:[#allocation2 + $0x2b] sm:$0x1]
  %v3188 = vrot.slane %v3158, 7
  %v3189 = vsel %vm316, %v3188, %v3157
  %3190 = vrot.lane.b32.xlu0 %v3189, 32
  %v3191 = vpop.permute.xlu0 %3190
  %v3192 = vsel %vm167, %v3191, 0
  %3194 = vmatprep.subr.mxu0 0.0
  %3195 = vmatpush1.msra.mxu0 %v161
  %3196 = vmatprep.subr.mxu0 0.0
  %3197 = vmatpush1.msra.mxu0 %v162
  %3198 = vmatprep.subr.mxu0 0.0
  %3199 = vmatpush1.msra.mxu0 %v163
  %3200 = vmatprep.subr.mxu0 0.0
  %3201 = vmatpush1.msra.mxu0 %v164
  %3202 = vmatprep.subr.mxu0 0.0
  %3203 = vmatpush1.msra.mxu0 0.0
  %3204 = vmatprep.subr.mxu0 0.0
  %3205 = vmatpush1.msra.mxu0 0.0
  %3206 = vmatprep.subr.mxu0 0.0
  %3207 = vmatpush1.msra.mxu0 0.0
  %3208 = vmatprep.subr.mxu0 0.0
  %3209 = vmatpush1.msra.mxu0 0.0
  %3210 = vmatprep.subr.mxu0 0.0
  %3211 = vmatpush1.msra.mxu0 0.0
  %3212 = vmatprep.subr.mxu0 0.0
  %3213 = vmatpush1.msra.mxu0 0.0
  %3214 = vmatprep.subr.mxu0 0.0
  %3215 = vmatpush1.msra.mxu0 0.0
  %3216 = vmatprep.subr.mxu0 0.0
  %3217 = vmatpush1.msra.mxu0 0.0
  %3218 = vmatprep.subr.mxu0 0.0
  %3219 = vmatpush1.msra.mxu0 0.0
  %3220 = vmatprep.subr.mxu0 0.0
  %3221 = vmatpush1.msra.mxu0 0.0
  %3222 = vmatprep.subr.mxu0 0.0
  %3223 = vmatpush1.msra.mxu0 0.0
  %3224 = vmatprep.subr.mxu0 0.0
  %3225 = vmatpush1.msra.mxu0 0.0
  %3226 = vmatprep.subr.mxu0 0.0
  %3227 = vmatpush1.msra.mxu0 0.0
  %3228 = vmatprep.subr.mxu0 0.0
  %3229 = vmatpush1.msra.mxu0 0.0
  %3230 = vmatprep.subr.mxu0 0.0
  %3231 = vmatpush1.msra.mxu0 0.0
  %3232 = vmatprep.subr.mxu0 0.0
  %3233 = vmatpush1.msra.mxu0 0.0
  %3234 = vmatprep.subr.mxu0 0.0
  %3235 = vmatpush1.msra.mxu0 0.0
  %3236 = vmatprep.subr.mxu0 0.0
  %3237 = vmatpush1.msra.mxu0 0.0
  %3238 = vmatprep.subr.mxu0 0.0
  %3239 = vmatpush1.msra.mxu0 0.0
  %3240 = vmatprep.subr.mxu0 0.0
  %3241 = vmatpush1.msra.mxu0 0.0
  %3242 = vmatprep.subr.mxu0 0.0
  %3243 = vmatpush1.msra.mxu0 0.0
  %3244 = vmatprep.subr.mxu0 0.0
  %3245 = vmatpush1.msra.mxu0 0.0
  %3246 = vmatprep.subr.mxu0 0.0
  %3247 = vmatpush1.msra.mxu0 0.0
  %3248 = vmatprep.subr.mxu0 0.0
  %3249 = vmatpush1.msra.mxu0 0.0
  %3250 = vmatprep.subr.mxu0 0.0
  %3251 = vmatpush1.msra.mxu0 0.0
  %3252 = vmatprep.subr.mxu0 0.0
  %3253 = vmatpush1.msra.mxu0 0.0
  %3254 = vmatprep.subr.mxu0 0.0
  %3255 = vmatpush1.msra.mxu0 0.0
  %3256 = vmatprep.subr.mxu0 0.0
  %3257 = vmatpush1.msra.mxu0 0.0
  %3258 = vmatprep.mubr.f32.mxu0 0.0
  %3259 = vmatmul.mubr.f32.gmra.mrb[0].mxu0 %v3192
  %v3260 = vpop.f32.mrb[0].mxu0
  %v3261 = vadd.f32 0.0, %v3260
  %v3262 = vpop.f32.mrb[0].mxu0
  %3263 = vdwg.mxu0
  %v3265 = vrot.slane %v3261, 1
  %v3268 = vadd.f32 %v3186, %v3261
  %v3269 = vadd.f32 %v3187, %v3265
  %v3270 = vxor.u32 %v3268, 2147483648
  %v3271 = vxor.u32 %v3269, 2147483648
  %v3272 = vmul.f32 %v3270, 1.442695
  %v3273 = vpow.pop %v3272
  %v3274 = vmul.f32 %v3271, 1.442695
  %v3275 = vpow.pop %v3274
  %v3276 = vadd.f32 %v3273, 1.0
  %v3277 = vadd.f32 %v3275, 1.0
  %v3278 = vrcp.pop %v3276
  %v3279 = vmul.f32 1.0, %v3278
  %v3280 = vrcp.pop %v3277
  %v3281 = vmul.f32 1.0, %v3280
  %v3282 = vtanh.pop %v3268
  %v3283 = vtanh.pop %v3269
  %v3284 = vmul.f32 %v3279, %v3145
  %v3285 = vmul.f32 %v3281, %v3146
  %3288 = vrot.lane.b32.xlu0 %v3282, 64
  %v3289 = vpop.permute.xlu0 %3288
  %3290 = vrot.lane.b32.xlu0 %v3283, 64
  %v3291 = vpop.permute.xlu0 %3290
  %v3294 = vmul.f32 %v3279, %v3289
  %v3295 = vmul.f32 %v3281, %v3291
  %3298 = vrot.lane.b32.xlu0 %v3294, 32
  %v3299 = vpop.permute.xlu0 %3298
  %3300 = vrot.lane.b32.xlu0 %v3295, 32
  %v3301 = vpop.permute.xlu0 %3300
  %v3304 = vadd.f32 %v3284, %v3299
  %v3305 = vadd.f32 %v3285, %v3301
  %v3306 = vtanh.pop %v3304
  %v3307 = vtanh.pop %v3305
  %3310 = vrot.lane.b32.xlu0 %v3306, 64
  %v3311 = vpop.permute.xlu0 %3310
  %3312 = vrot.lane.b32.xlu0 %v3307, 64
  %v3313 = vpop.permute.xlu0 %3312
  %v3316 = vmul.f32 %v3279, %v3311
  %v3317 = vmul.f32 %v3281, %v3313
  %v3321 = vunpack.c.l.s4 1983009808
  %v3322 = vunpack.c.0.s8 %v3321
  %v3323 = vlaneseq
  %v3324 = vshrl.u32 %v3323, 7
  %v3325 = vsub.s32 %v3322, %v3324
  %v3326 = vrot.slane %v3316, %v3325
  %v3328 = vunpack.c.l.s4 1983009808
  %v3329 = vunpack.c.0.s8 %v3328
  %v3330 = vlaneseq
  %v3331 = vshrl.u32 %v3330, 7
  %v3332 = vsub.s32 %v3329, %v3331
  %v3333 = vrot.slane %v3317, %v3332
  %v3334 = vsel %vm311, %v3326, %v3326
  %v3335 = vsel %vm313, %v3326, %v3334
  %v3336 = vrot.slane %v3333, 7
  %v3337 = vsel %vm316, %v3336, %v3335
  %v3338 = vsel %vm318, %v3336, %v3337
  %v3339 = vsel %vm320, %v3336, %v3338
  %v3340 = vsel %vm322, %v3336, %v3339
  %3342 = vst.msk [vmem:[#allocation3 + $0x8] sm:$0x3] %vm805, %v3340
  %v3343 = vld [vmem:[#allocation2 + $0x14] sm:$0x1]
  %v3344 = vld [vmem:[#allocation2 + $0x2c] sm:$0x1]
  %v3345 = vrot.slane %v3317, 7
  %v3346 = vsel %vm316, %v3345, %v3316
  %3347 = vrot.lane.b32.xlu0 %v3346, 32
  %v3348 = vpop.permute.xlu0 %3347
  %v3349 = vsel %vm167, %v3348, 0
  %3351 = vmatprep.subr.mxu0 0.0
  %3352 = vmatpush1.msra.mxu0 %v161
  %3353 = vmatprep.subr.mxu0 0.0
  %3354 = vmatpush1.msra.mxu0 %v162
  %3355 = vmatprep.subr.mxu0 0.0
  %3356 = vmatpush1.msra.mxu0 %v163
  %3357 = vmatprep.subr.mxu0 0.0
  %3358 = vmatpush1.msra.mxu0 %v164
  %3359 = vmatprep.subr.mxu0 0.0
  %3360 = vmatpush1.msra.mxu0 0.0
  %3361 = vmatprep.subr.mxu0 0.0
  %3362 = vmatpush1.msra.mxu0 0.0
  %3363 = vmatprep.subr.mxu0 0.0
  %3364 = vmatpush1.msra.mxu0 0.0
  %3365 = vmatprep.subr.mxu0 0.0
  %3366 = vmatpush1.msra.mxu0 0.0
  %3367 = vmatprep.subr.mxu0 0.0
  %3368 = vmatpush1.msra.mxu0 0.0
  %3369 = vmatprep.subr.mxu0 0.0
  %3370 = vmatpush1.msra.mxu0 0.0
  %3371 = vmatprep.subr.mxu0 0.0
  %3372 = vmatpush1.msra.mxu0 0.0
  %3373 = vmatprep.subr.mxu0 0.0
  %3374 = vmatpush1.msra.mxu0 0.0
  %3375 = vmatprep.subr.mxu0 0.0
  %3376 = vmatpush1.msra.mxu0 0.0
  %3377 = vmatprep.subr.mxu0 0.0
  %3378 = vmatpush1.msra.mxu0 0.0
  %3379 = vmatprep.subr.mxu0 0.0
  %3380 = vmatpush1.msra.mxu0 0.0
  %3381 = vmatprep.subr.mxu0 0.0
  %3382 = vmatpush1.msra.mxu0 0.0
  %3383 = vmatprep.subr.mxu0 0.0
  %3384 = vmatpush1.msra.mxu0 0.0
  %3385 = vmatprep.subr.mxu0 0.0
  %3386 = vmatpush1.msra.mxu0 0.0
  %3387 = vmatprep.subr.mxu0 0.0
  %3388 = vmatpush1.msra.mxu0 0.0
  %3389 = vmatprep.subr.mxu0 0.0
  %3390 = vmatpush1.msra.mxu0 0.0
  %3391 = vmatprep.subr.mxu0 0.0
  %3392 = vmatpush1.msra.mxu0 0.0
  %3393 = vmatprep.subr.mxu0 0.0
  %3394 = vmatpush1.msra.mxu0 0.0
  %3395 = vmatprep.subr.mxu0 0.0
  %3396 = vmatpush1.msra.mxu0 0.0
  %3397 = vmatprep.subr.mxu0 0.0
  %3398 = vmatpush1.msra.mxu0 0.0
  %3399 = vmatprep.subr.mxu0 0.0
  %3400 = vmatpush1.msra.mxu0 0.0
  %3401 = vmatprep.subr.mxu0 0.0
  %3402 = vmatpush1.msra.mxu0 0.0
  %3403 = vmatprep.subr.mxu0 0.0
  %3404 = vmatpush1.msra.mxu0 0.0
  %3405 = vmatprep.subr.mxu0 0.0
  %3406 = vmatpush1.msra.mxu0 0.0
  %3407 = vmatprep.subr.mxu0 0.0
  %3408 = vmatpush1.msra.mxu0 0.0
  %3409 = vmatprep.subr.mxu0 0.0
  %3410 = vmatpush1.msra.mxu0 0.0
  %3411 = vmatprep.subr.mxu0 0.0
  %3412 = vmatpush1.msra.mxu0 0.0
  %3413 = vmatprep.subr.mxu0 0.0
  %3414 = vmatpush1.msra.mxu0 0.0
  %3415 = vmatprep.mubr.f32.mxu0 0.0
  %3416 = vmatmul.mubr.f32.gmra.mrb[0].mxu0 %v3349
  %v3417 = vpop.f32.mrb[0].mxu0
  %v3418 = vadd.f32 0.0, %v3417
  %v3419 = vpop.f32.mrb[0].mxu0
  %3420 = vdwg.mxu0
  %v3422 = vrot.slane %v3418, 1
  %v3425 = vadd.f32 %v3343, %v3418
  %v3426 = vadd.f32 %v3344, %v3422
  %v3427 = vxor.u32 %v3425, 2147483648
  %v3428 = vxor.u32 %v3426, 2147483648
  %v3429 = vmul.f32 %v3427, 1.442695
  %v3430 = vpow.pop %v3429
  %v3431 = vmul.f32 %v3428, 1.442695
  %v3432 = vpow.pop %v3431
  %v3433 = vadd.f32 %v3430, 1.0
  %v3434 = vadd.f32 %v3432, 1.0
  %v3435 = vrcp.pop %v3433
  %v3436 = vmul.f32 1.0, %v3435
  %v3437 = vrcp.pop %v3434
  %v3438 = vmul.f32 1.0, %v3437
  %v3439 = vtanh.pop %v3425
  %v3440 = vtanh.pop %v3426
  %v3441 = vmul.f32 %v3436, %v3304
  %v3442 = vmul.f32 %v3438, %v3305
  %3445 = vrot.lane.b32.xlu0 %v3439, 64
  %v3446 = vpop.permute.xlu0 %3445
  %3447 = vrot.lane.b32.xlu0 %v3440, 64
  %v3448 = vpop.permute.xlu0 %3447
  %v3451 = vmul.f32 %v3436, %v3446
  %v3452 = vmul.f32 %v3438, %v3448
  %3455 = vrot.lane.b32.xlu0 %v3451, 32
  %v3456 = vpop.permute.xlu0 %3455
  %3457 = vrot.lane.b32.xlu0 %v3452, 32
  %v3458 = vpop.permute.xlu0 %3457
  %v3461 = vadd.f32 %v3441, %v3456
  %v3462 = vadd.f32 %v3442, %v3458
  %v3463 = vtanh.pop %v3461
  %v3464 = vtanh.pop %v3462
  %3467 = vrot.lane.b32.xlu0 %v3463, 64
  %v3468 = vpop.permute.xlu0 %3467
  %3469 = vrot.lane.b32.xlu0 %v3464, 64
  %v3470 = vpop.permute.xlu0 %3469
  %v3473 = vmul.f32 %v3436, %v3468
  %v3474 = vmul.f32 %v3438, %v3470
  %v3478 = vunpack.c.l.s4 1983009808
  %v3479 = vunpack.c.0.s8 %v3478
  %v3480 = vlaneseq
  %v3481 = vshrl.u32 %v3480, 7
  %v3482 = vsub.s32 %v3479, %v3481
  %v3483 = vrot.slane %v3473, %v3482
  %v3485 = vunpack.c.l.s4 1983009808
  %v3486 = vunpack.c.0.s8 %v3485
  %v3487 = vlaneseq
  %v3488 = vshrl.u32 %v3487, 7
  %v3489 = vsub.s32 %v3486, %v3488
  %v3490 = vrot.slane %v3474, %v3489
  %v3491 = vsel %vm311, %v3483, %v3483
  %v3492 = vsel %vm313, %v3483, %v3491
  %v3493 = vrot.slane %v3490, 7
  %v3494 = vsel %vm316, %v3493, %v3492
  %v3495 = vsel %vm318, %v3493, %v3494
  %v3496 = vsel %vm320, %v3493, %v3495
  %v3497 = vsel %vm322, %v3493, %v3496
  %3498 = vrot.lane.b32.xlu0 %v3497, 32
  %v3499 = vpop.permute.xlu0 %3498
  %3501 = vst.msk [vmem:[#allocation3 + $0xa] sm:$0x3] %vm327, %v3499
  %v3502 = vld [vmem:[#allocation2 + $0x15] sm:$0x1]
  %v3503 = vld [vmem:[#allocation2 + $0x2d] sm:$0x1]
  %v3504 = vrot.slane %v3474, 7
  %v3505 = vsel %vm316, %v3504, %v3473
  %3506 = vrot.lane.b32.xlu0 %v3505, 32
  %v3507 = vpop.permute.xlu0 %3506
  %v3508 = vsel %vm167, %v3507, 0
  %3510 = vmatprep.subr.mxu0 0.0
  %3511 = vmatpush1.msra.mxu0 %v161
  %3512 = vmatprep.subr.mxu0 0.0
  %3513 = vmatpush1.msra.mxu0 %v162
  %3514 = vmatprep.subr.mxu0 0.0
  %3515 = vmatpush1.msra.mxu0 %v163
  %3516 = vmatprep.subr.mxu0 0.0
  %3517 = vmatpush1.msra.mxu0 %v164
  %3518 = vmatprep.subr.mxu0 0.0
  %3519 = vmatpush1.msra.mxu0 0.0
  %3520 = vmatprep.subr.mxu0 0.0
  %3521 = vmatpush1.msra.mxu0 0.0
  %3522 = vmatprep.subr.mxu0 0.0
  %3523 = vmatpush1.msra.mxu0 0.0
  %3524 = vmatprep.subr.mxu0 0.0
  %3525 = vmatpush1.msra.mxu0 0.0
  %3526 = vmatprep.subr.mxu0 0.0
  %3527 = vmatpush1.msra.mxu0 0.0
  %3528 = vmatprep.subr.mxu0 0.0
  %3529 = vmatpush1.msra.mxu0 0.0
  %3530 = vmatprep.subr.mxu0 0.0
  %3531 = vmatpush1.msra.mxu0 0.0
  %3532 = vmatprep.subr.mxu0 0.0
  %3533 = vmatpush1.msra.mxu0 0.0
  %3534 = vmatprep.subr.mxu0 0.0
  %3535 = vmatpush1.msra.mxu0 0.0
  %3536 = vmatprep.subr.mxu0 0.0
  %3537 = vmatpush1.msra.mxu0 0.0
  %3538 = vmatprep.subr.mxu0 0.0
  %3539 = vmatpush1.msra.mxu0 0.0
  %3540 = vmatprep.subr.mxu0 0.0
  %3541 = vmatpush1.msra.mxu0 0.0
  %3542 = vmatprep.subr.mxu0 0.0
  %3543 = vmatpush1.msra.mxu0 0.0
  %3544 = vmatprep.subr.mxu0 0.0
  %3545 = vmatpush1.msra.mxu0 0.0
  %3546 = vmatprep.subr.mxu0 0.0
  %3547 = vmatpush1.msra.mxu0 0.0
  %3548 = vmatprep.subr.mxu0 0.0
  %3549 = vmatpush1.msra.mxu0 0.0
  %3550 = vmatprep.subr.mxu0 0.0
  %3551 = vmatpush1.msra.mxu0 0.0
  %3552 = vmatprep.subr.mxu0 0.0
  %3553 = vmatpush1.msra.mxu0 0.0
  %3554 = vmatprep.subr.mxu0 0.0
  %3555 = vmatpush1.msra.mxu0 0.0
  %3556 = vmatprep.subr.mxu0 0.0
  %3557 = vmatpush1.msra.mxu0 0.0
  %3558 = vmatprep.subr.mxu0 0.0
  %3559 = vmatpush1.msra.mxu0 0.0
  %3560 = vmatprep.subr.mxu0 0.0
  %3561 = vmatpush1.msra.mxu0 0.0
  %3562 = vmatprep.subr.mxu0 0.0
  %3563 = vmatpush1.msra.mxu0 0.0
  %3564 = vmatprep.subr.mxu0 0.0
  %3565 = vmatpush1.msra.mxu0 0.0
  %3566 = vmatprep.subr.mxu0 0.0
  %3567 = vmatpush1.msra.mxu0 0.0
  %3568 = vmatprep.subr.mxu0 0.0
  %3569 = vmatpush1.msra.mxu0 0.0
  %3570 = vmatprep.subr.mxu0 0.0
  %3571 = vmatpush1.msra.mxu0 0.0
  %3572 = vmatprep.subr.mxu0 0.0
  %3573 = vmatpush1.msra.mxu0 0.0
  %3574 = vmatprep.mubr.f32.mxu0 0.0
  %3575 = vmatmul.mubr.f32.gmra.mrb[0].mxu0 %v3508
  %v3576 = vpop.f32.mrb[0].mxu0
  %v3577 = vadd.f32 0.0, %v3576
  %v3578 = vpop.f32.mrb[0].mxu0
  %3579 = vdwg.mxu0
  %v3581 = vrot.slane %v3577, 1
  %v3584 = vadd.f32 %v3502, %v3577
  %v3585 = vadd.f32 %v3503, %v3581
  %v3586 = vxor.u32 %v3584, 2147483648
  %v3587 = vxor.u32 %v3585, 2147483648
  %v3588 = vmul.f32 %v3586, 1.442695
  %v3589 = vpow.pop %v3588
  %v3590 = vmul.f32 %v3587, 1.442695
  %v3591 = vpow.pop %v3590
  %v3592 = vadd.f32 %v3589, 1.0
  %v3593 = vadd.f32 %v3591, 1.0
  %v3594 = vrcp.pop %v3592
  %v3595 = vmul.f32 1.0, %v3594
  %v3596 = vrcp.pop %v3593
  %v3597 = vmul.f32 1.0, %v3596
  %v3598 = vtanh.pop %v3584
  %v3599 = vtanh.pop %v3585
  %v3600 = vmul.f32 %v3595, %v3461
  %v3601 = vmul.f32 %v3597, %v3462
  %3604 = vrot.lane.b32.xlu0 %v3598, 64
  %v3605 = vpop.permute.xlu0 %3604
  %3606 = vrot.lane.b32.xlu0 %v3599, 64
  %v3607 = vpop.permute.xlu0 %3606
  %v3610 = vmul.f32 %v3595, %v3605
  %v3611 = vmul.f32 %v3597, %v3607
  %3614 = vrot.lane.b32.xlu0 %v3610, 32
  %v3615 = vpop.permute.xlu0 %3614
  %3616 = vrot.lane.b32.xlu0 %v3611, 32
  %v3617 = vpop.permute.xlu0 %3616
  %v3620 = vadd.f32 %v3600, %v3615
  %v3621 = vadd.f32 %v3601, %v3617
  %v3622 = vtanh.pop %v3620
  %v3623 = vtanh.pop %v3621
  %3626 = vrot.lane.b32.xlu0 %v3622, 64
  %v3627 = vpop.permute.xlu0 %3626
  %3628 = vrot.lane.b32.xlu0 %v3623, 64
  %v3629 = vpop.permute.xlu0 %3628
  %v3632 = vmul.f32 %v3595, %v3627
  %v3633 = vmul.f32 %v3597, %v3629
  %v3637 = vunpack.c.l.s4 1983009808
  %v3638 = vunpack.c.0.s8 %v3637
  %v3639 = vlaneseq
  %v3640 = vshrl.u32 %v3639, 7
  %v3641 = vsub.s32 %v3638, %v3640
  %v3642 = vrot.slane %v3632, %v3641
  %v3644 = vunpack.c.l.s4 1983009808
  %v3645 = vunpack.c.0.s8 %v3644
  %v3646 = vlaneseq
  %v3647 = vshrl.u32 %v3646, 7
  %v3648 = vsub.s32 %v3645, %v3647
  %v3649 = vrot.slane %v3633, %v3648
  %v3650 = vsel %vm311, %v3642, %v3642
  %v3651 = vsel %vm313, %v3642, %v3650
  %v3652 = vrot.slane %v3649, 7
  %v3653 = vsel %vm316, %v3652, %v3651
  %v3654 = vsel %vm318, %v3652, %v3653
  %v3655 = vsel %vm320, %v3652, %v3654
  %v3656 = vsel %vm322, %v3652, %v3655
  %3657 = vrot.lane.b32.xlu0 %v3656, 64
  %v3658 = vpop.permute.xlu0 %3657
  %3660 = vst.msk [vmem:[#allocation3 + $0xa] sm:$0x3] %vm487, %v3658
  %v3661 = vld [vmem:[#allocation2 + $0x16] sm:$0x1]
  %v3662 = vld [vmem:[#allocation2 + $0x2e] sm:$0x1]
  %v3663 = vrot.slane %v3633, 7
  %v3664 = vsel %vm316, %v3663, %v3632
  %3665 = vrot.lane.b32.xlu0 %v3664, 32
  %v3666 = vpop.permute.xlu0 %3665
  %v3667 = vsel %vm167, %v3666, 0
  %3669 = vmatprep.subr.mxu0 0.0
  %3670 = vmatpush1.msra.mxu0 %v161
  %3671 = vmatprep.subr.mxu0 0.0
  %3672 = vmatpush1.msra.mxu0 %v162
  %3673 = vmatprep.subr.mxu0 0.0
  %3674 = vmatpush1.msra.mxu0 %v163
  %3675 = vmatprep.subr.mxu0 0.0
  %3676 = vmatpush1.msra.mxu0 %v164
  %3677 = vmatprep.subr.mxu0 0.0
  %3678 = vmatpush1.msra.mxu0 0.0
  %3679 = vmatprep.subr.mxu0 0.0
  %3680 = vmatpush1.msra.mxu0 0.0
  %3681 = vmatprep.subr.mxu0 0.0
  %3682 = vmatpush1.msra.mxu0 0.0
  %3683 = vmatprep.subr.mxu0 0.0
  %3684 = vmatpush1.msra.mxu0 0.0
  %3685 = vmatprep.subr.mxu0 0.0
  %3686 = vmatpush1.msra.mxu0 0.0
  %3687 = vmatprep.subr.mxu0 0.0
  %3688 = vmatpush1.msra.mxu0 0.0
  %3689 = vmatprep.subr.mxu0 0.0
  %3690 = vmatpush1.msra.mxu0 0.0
  %3691 = vmatprep.subr.mxu0 0.0
  %3692 = vmatpush1.msra.mxu0 0.0
  %3693 = vmatprep.subr.mxu0 0.0
  %3694 = vmatpush1.msra.mxu0 0.0
  %3695 = vmatprep.subr.mxu0 0.0
  %3696 = vmatpush1.msra.mxu0 0.0
  %3697 = vmatprep.subr.mxu0 0.0
  %3698 = vmatpush1.msra.mxu0 0.0
  %3699 = vmatprep.subr.mxu0 0.0
  %3700 = vmatpush1.msra.mxu0 0.0
  %3701 = vmatprep.subr.mxu0 0.0
  %3702 = vmatpush1.msra.mxu0 0.0
  %3703 = vmatprep.subr.mxu0 0.0
  %3704 = vmatpush1.msra.mxu0 0.0
  %3705 = vmatprep.subr.mxu0 0.0
  %3706 = vmatpush1.msra.mxu0 0.0
  %3707 = vmatprep.subr.mxu0 0.0
  %3708 = vmatpush1.msra.mxu0 0.0
  %3709 = vmatprep.subr.mxu0 0.0
  %3710 = vmatpush1.msra.mxu0 0.0
  %3711 = vmatprep.subr.mxu0 0.0
  %3712 = vmatpush1.msra.mxu0 0.0
  %3713 = vmatprep.subr.mxu0 0.0
  %3714 = vmatpush1.msra.mxu0 0.0
  %3715 = vmatprep.subr.mxu0 0.0
  %3716 = vmatpush1.msra.mxu0 0.0
  %3717 = vmatprep.subr.mxu0 0.0
  %3718 = vmatpush1.msra.mxu0 0.0
  %3719 = vmatprep.subr.mxu0 0.0
  %3720 = vmatpush1.msra.mxu0 0.0
  %3721 = vmatprep.subr.mxu0 0.0
  %3722 = vmatpush1.msra.mxu0 0.0
  %3723 = vmatprep.subr.mxu0 0.0
  %3724 = vmatpush1.msra.mxu0 0.0
  %3725 = vmatprep.subr.mxu0 0.0
  %3726 = vmatpush1.msra.mxu0 0.0
  %3727 = vmatprep.subr.mxu0 0.0
  %3728 = vmatpush1.msra.mxu0 0.0
  %3729 = vmatprep.subr.mxu0 0.0
  %3730 = vmatpush1.msra.mxu0 0.0
  %3731 = vmatprep.subr.mxu0 0.0
  %3732 = vmatpush1.msra.mxu0 0.0
  %3733 = vmatprep.mubr.f32.mxu0 0.0
  %3734 = vmatmul.mubr.f32.gmra.mrb[0].mxu0 %v3667
  %v3735 = vpop.f32.mrb[0].mxu0
  %v3736 = vadd.f32 0.0, %v3735
  %v3737 = vpop.f32.mrb[0].mxu0
  %3738 = vdwg.mxu0
  %v3740 = vrot.slane %v3736, 1
  %v3743 = vadd.f32 %v3661, %v3736
  %v3744 = vadd.f32 %v3662, %v3740
  %v3745 = vxor.u32 %v3743, 2147483648
  %v3746 = vxor.u32 %v3744, 2147483648
  %v3747 = vmul.f32 %v3745, 1.442695
  %v3748 = vpow.pop %v3747
  %v3749 = vmul.f32 %v3746, 1.442695
  %v3750 = vpow.pop %v3749
  %v3751 = vadd.f32 %v3748, 1.0
  %v3752 = vadd.f32 %v3750, 1.0
  %v3753 = vrcp.pop %v3751
  %v3754 = vmul.f32 1.0, %v3753
  %v3755 = vrcp.pop %v3752
  %v3756 = vmul.f32 1.0, %v3755
  %v3757 = vtanh.pop %v3743
  %v3758 = vtanh.pop %v3744
  %v3759 = vmul.f32 %v3754, %v3620
  %v3760 = vmul.f32 %v3756, %v3621
  %3763 = vrot.lane.b32.xlu0 %v3757, 64
  %v3764 = vpop.permute.xlu0 %3763
  %3765 = vrot.lane.b32.xlu0 %v3758, 64
  %v3766 = vpop.permute.xlu0 %3765
  %v3769 = vmul.f32 %v3754, %v3764
  %v3770 = vmul.f32 %v3756, %v3766
  %3773 = vrot.lane.b32.xlu0 %v3769, 32
  %v3774 = vpop.permute.xlu0 %3773
  %3775 = vrot.lane.b32.xlu0 %v3770, 32
  %v3776 = vpop.permute.xlu0 %3775
  %v3779 = vadd.f32 %v3759, %v3774
  %v3780 = vadd.f32 %v3760, %v3776
  %v3781 = vtanh.pop %v3779
  %v3782 = vtanh.pop %v3780
  %3785 = vrot.lane.b32.xlu0 %v3781, 64
  %v3786 = vpop.permute.xlu0 %3785
  %3787 = vrot.lane.b32.xlu0 %v3782, 64
  %v3788 = vpop.permute.xlu0 %3787
  %v3791 = vmul.f32 %v3754, %v3786
  %v3792 = vmul.f32 %v3756, %v3788
  %v3796 = vunpack.c.l.s4 1983009808
  %v3797 = vunpack.c.0.s8 %v3796
  %v3798 = vlaneseq
  %v3799 = vshrl.u32 %v3798, 7
  %v3800 = vsub.s32 %v3797, %v3799
  %v3801 = vrot.slane %v3791, %v3800
  %v3803 = vunpack.c.l.s4 1983009808
  %v3804 = vunpack.c.0.s8 %v3803
  %v3805 = vlaneseq
  %v3806 = vshrl.u32 %v3805, 7
  %v3807 = vsub.s32 %v3804, %v3806
  %v3808 = vrot.slane %v3792, %v3807
  %v3809 = vsel %vm311, %v3801, %v3801
  %v3810 = vsel %vm313, %v3801, %v3809
  %v3811 = vrot.slane %v3808, 7
  %v3812 = vsel %vm316, %v3811, %v3810
  %v3813 = vsel %vm318, %v3811, %v3812
  %v3814 = vsel %vm320, %v3811, %v3813
  %v3815 = vsel %vm322, %v3811, %v3814
  %3816 = vrot.lane.b32.xlu0 %v3815, 96
  %v3817 = vpop.permute.xlu0 %3816
  %3819 = vst.msk [vmem:[#allocation3 + $0xa] sm:$0x3] %vm647, %v3817
  %v3820 = vld [vmem:[#allocation2 + $0x17] sm:$0x1]
  %v3821 = vld [vmem:[#allocation2 + $0x2f] sm:$0x1]
  %v3822 = vrot.slane %v3792, 7
  %v3823 = vsel %vm316, %v3822, %v3791
  %3824 = vrot.lane.b32.xlu0 %v3823, 32
  %v3825 = vpop.permute.xlu0 %3824
  %v3826 = vsel %vm167, %v3825, 0
  %3828 = vmatprep.subr.mxu0 0.0
  %3829 = vmatpush1.msra.mxu0 %v161
  %3830 = vmatprep.subr.mxu0 0.0
  %3831 = vmatpush1.msra.mxu0 %v162
  %3832 = vmatprep.subr.mxu0 0.0
  %3833 = vmatpush1.msra.mxu0 %v163
  %3834 = vmatprep.subr.mxu0 0.0
  %3835 = vmatpush1.msra.mxu0 %v164
  %3836 = vmatprep.subr.mxu0 0.0
  %3837 = vmatpush1.msra.mxu0 0.0
  %3838 = vmatprep.subr.mxu0 0.0
  %3839 = vmatpush1.msra.mxu0 0.0
  %3840 = vmatprep.subr.mxu0 0.0
  %3841 = vmatpush1.msra.mxu0 0.0
  %3842 = vmatprep.subr.mxu0 0.0
  %3843 = vmatpush1.msra.mxu0 0.0
  %3844 = vmatprep.subr.mxu0 0.0
  %3845 = vmatpush1.msra.mxu0 0.0
  %3846 = vmatprep.subr.mxu0 0.0
  %3847 = vmatpush1.msra.mxu0 0.0
  %3848 = vmatprep.subr.mxu0 0.0
  %3849 = vmatpush1.msra.mxu0 0.0
  %3850 = vmatprep.subr.mxu0 0.0
  %3851 = vmatpush1.msra.mxu0 0.0
  %3852 = vmatprep.subr.mxu0 0.0
  %3853 = vmatpush1.msra.mxu0 0.0
  %3854 = vmatprep.subr.mxu0 0.0
  %3855 = vmatpush1.msra.mxu0 0.0
  %3856 = vmatprep.subr.mxu0 0.0
  %3857 = vmatpush1.msra.mxu0 0.0
  %3858 = vmatprep.subr.mxu0 0.0
  %3859 = vmatpush1.msra.mxu0 0.0
  %3860 = vmatprep.subr.mxu0 0.0
  %3861 = vmatpush1.msra.mxu0 0.0
  %3862 = vmatprep.subr.mxu0 0.0
  %3863 = vmatpush1.msra.mxu0 0.0
  %3864 = vmatprep.subr.mxu0 0.0
  %3865 = vmatpush1.msra.mxu0 0.0
  %3866 = vmatprep.subr.mxu0 0.0
  %3867 = vmatpush1.msra.mxu0 0.0
  %3868 = vmatprep.subr.mxu0 0.0
  %3869 = vmatpush1.msra.mxu0 0.0
  %3870 = vmatprep.subr.mxu0 0.0
  %3871 = vmatpush1.msra.mxu0 0.0
  %3872 = vmatprep.subr.mxu0 0.0
  %3873 = vmatpush1.msra.mxu0 0.0
  %3874 = vmatprep.subr.mxu0 0.0
  %3875 = vmatpush1.msra.mxu0 0.0
  %3876 = vmatprep.subr.mxu0 0.0
  %3877 = vmatpush1.msra.mxu0 0.0
  %3878 = vmatprep.subr.mxu0 0.0
  %3879 = vmatpush1.msra.mxu0 0.0
  %3880 = vmatprep.subr.mxu0 0.0
  %3881 = vmatpush1.msra.mxu0 0.0
  %3882 = vmatprep.subr.mxu0 0.0
  %3883 = vmatpush1.msra.mxu0 0.0
  %3884 = vmatprep.subr.mxu0 0.0
  %3885 = vmatpush1.msra.mxu0 0.0
  %3886 = vmatprep.subr.mxu0 0.0
  %3887 = vmatpush1.msra.mxu0 0.0
  %3888 = vmatprep.subr.mxu0 0.0
  %3889 = vmatpush1.msra.mxu0 0.0
  %3890 = vmatprep.subr.mxu0 0.0
  %3891 = vmatpush1.msra.mxu0 0.0
  %3892 = vmatprep.mubr.f32.mxu0 0.0
  %3893 = vmatmul.mubr.f32.gmra.mrb[0].mxu0 %v3826
  %v3894 = vpop.f32.mrb[0].mxu0
  %v3895 = vadd.f32 0.0, %v3894
  %v3896 = vpop.f32.mrb[0].mxu0
  %3897 = vdwg.mxu0
  %v3899 = vrot.slane %v3895, 1
  %v3902 = vadd.f32 %v3820, %v3895
  %v3903 = vadd.f32 %v3821, %v3899
  %v3904 = vxor.u32 %v3902, 2147483648
  %v3905 = vxor.u32 %v3903, 2147483648
  %v3906 = vmul.f32 %v3904, 1.442695
  %v3907 = vpow.pop %v3906
  %v3908 = vmul.f32 %v3905, 1.442695
  %v3909 = vpow.pop %v3908
  %v3910 = vadd.f32 %v3907, 1.0
  %v3911 = vadd.f32 %v3909, 1.0
  %v3912 = vrcp.pop %v3910
  %v3913 = vmul.f32 1.0, %v3912
  %v3914 = vrcp.pop %v3911
  %v3915 = vmul.f32 1.0, %v3914
  %v3916 = vtanh.pop %v3902
  %v3917 = vtanh.pop %v3903
  %v3918 = vmul.f32 %v3913, %v3779
  %v3919 = vmul.f32 %v3915, %v3780
  %3922 = vrot.lane.b32.xlu0 %v3916, 64
  %v3923 = vpop.permute.xlu0 %3922
  %3924 = vrot.lane.b32.xlu0 %v3917, 64
  %v3925 = vpop.permute.xlu0 %3924
  %v3928 = vmul.f32 %v3913, %v3923
  %v3929 = vmul.f32 %v3915, %v3925
  %3932 = vrot.lane.b32.xlu0 %v3928, 32
  %v3933 = vpop.permute.xlu0 %3932
  %3934 = vrot.lane.b32.xlu0 %v3929, 32
  %v3935 = vpop.permute.xlu0 %3934
  %v3938 = vadd.f32 %v3918, %v3933
  %v3939 = vadd.f32 %v3919, %v3935
  %v3940 = vtanh.pop %v3938
  %v3941 = vtanh.pop %v3939
  %3944 = vrot.lane.b32.xlu0 %v3940, 64
  %v3945 = vpop.permute.xlu0 %3944
  %3946 = vrot.lane.b32.xlu0 %v3941, 64
  %v3947 = vpop.permute.xlu0 %3946
  %v3950 = vmul.f32 %v3913, %v3945
  %v3951 = vmul.f32 %v3915, %v3947
  %v3955 = vunpack.c.l.s4 1983009808
  %v3956 = vunpack.c.0.s8 %v3955
  %v3957 = vlaneseq
  %v3958 = vshrl.u32 %v3957, 7
  %v3959 = vsub.s32 %v3956, %v3958
  %v3960 = vrot.slane %v3950, %v3959
  %v3962 = vunpack.c.l.s4 1983009808
  %v3963 = vunpack.c.0.s8 %v3962
  %v3964 = vlaneseq
  %v3965 = vshrl.u32 %v3964, 7
  %v3966 = vsub.s32 %v3963, %v3965
  %v3967 = vrot.slane %v3951, %v3966
  %v3968 = vsel %vm311, %v3960, %v3960
  %v3969 = vsel %vm313, %v3960, %v3968
  %v3970 = vrot.slane %v3967, 7
  %v3971 = vsel %vm316, %v3970, %v3969
  %v3972 = vsel %vm318, %v3970, %v3971
  %v3973 = vsel %vm320, %v3970, %v3972
  %v3974 = vsel %vm322, %v3970, %v3973
  %3976 = vst.msk [vmem:[#allocation3 + $0xa] sm:$0x3] %vm805, %v3974
  %v3977 = vld [vmem:[#allocation3] sm:$0xff]
  %v3978 = vld [vmem:[#allocation3 + $0x8] sm:$0xf]
  %v3979 = vld [vmem:[%s4] sm:$0xff]
  %v3980 = vld [vmem:[%s4 + $0x8] sm:$0xff]
  %v3981 = vld [vmem:[%s4 + $0x10] sm:$0xff]
  %v3982 = vld [vmem:[%s4 + $0x18] sm:$0xff]
  %v3983 = vld [vmem:[%s4 + $0x20] sm:$0xff]
  %v3984 = vld [vmem:[%s4 + $0x28] sm:$0xff]
  %v3985 = vld [vmem:[%s4 + $0x30] sm:$0xff]
  %v3986 = vld [vmem:[%s4 + $0x38] sm:$0xff]
  %v3987 = vld [vmem:[%s4 + $0x40] sm:$0xff]
  %v3988 = vld [vmem:[%s4 + $0x48] sm:$0xff]
  %v3989 = vld [vmem:[%s4 + $0x50] sm:$0xff]
  %v3990 = vld [vmem:[%s4 + $0x58] sm:$0xff]
  %v3991 = vld [vmem:[%s4 + $0x60] sm:$0xff]
  %v3992 = vld [vmem:[%s4 + $0x68] sm:$0xff]
  %v3993 = vld [vmem:[%s4 + $0x70] sm:$0xff]
  %v3994 = vld [vmem:[%s4 + $0x78] sm:$0xff]
  %v3995 = vld [vmem:[%s4 + $0x80] sm:$0xff]
  %v3996 = vld [vmem:[%s4 + $0x88] sm:$0xff]
  %v3997 = vld [vmem:[%s4 + $0x90] sm:$0xff]
  %v3998 = vld [vmem:[%s4 + $0x98] sm:$0xff]
  %v3999 = vld [vmem:[%s4 + $0xa0] sm:$0xff]
  %v4000 = vld [vmem:[%s4 + $0xa8] sm:$0xff]
  %v4001 = vld [vmem:[%s4 + $0xb0] sm:$0xff]
  %v4002 = vld [vmem:[%s4 + $0xb8] sm:$0xff]
  %v4003 = vld [vmem:[%s4 + $0xc0] sm:$0xff]
  %v4004 = vld [vmem:[%s4 + $0xc8] sm:$0xff]
  %v4005 = vld [vmem:[%s4 + $0xd0] sm:$0xff]
  %v4006 = vld [vmem:[%s4 + $0xd8] sm:$0xff]
  %v4007 = vld [vmem:[%s4 + $0xe0] sm:$0xff]
  %v4008 = vld [vmem:[%s4 + $0xe8] sm:$0xff]
  %v4009 = vld [vmem:[%s4 + $0xf0] sm:$0xff]
  %v4010 = vld [vmem:[%s4 + $0xf8] sm:$0xff]
  %v4011 = vld [vmem:[%s4 + $0x100] sm:$0xff]
  %v4012 = vld [vmem:[%s4 + $0x108] sm:$0xff]
  %v4013 = vld [vmem:[%s4 + $0x110] sm:$0xff]
  %v4014 = vld [vmem:[%s4 + $0x118] sm:$0xff]
  %v4015 = vld [vmem:[%s4 + $0x120] sm:$0xff]
  %v4016 = vld [vmem:[%s4 + $0x128] sm:$0xff]
  %v4017 = vld [vmem:[%s4 + $0x130] sm:$0xff]
  %v4018 = vld [vmem:[%s4 + $0x138] sm:$0xff]
  %v4019 = vld [vmem:[%s4 + $0x140] sm:$0xff]
  %v4020 = vld [vmem:[%s4 + $0x148] sm:$0xff]
  %v4021 = vld [vmem:[%s4 + $0x150] sm:$0xff]
  %v4022 = vld [vmem:[%s4 + $0x158] sm:$0xff]
  %v4023 = vld [vmem:[%s4 + $0x160] sm:$0xff]
  %v4024 = vld [vmem:[%s4 + $0x168] sm:$0xff]
  %v4025 = vld [vmem:[%s4 + $0x170] sm:$0xff]
  %v4026 = vld [vmem:[%s4 + $0x178] sm:$0xff]
  %v4027 = vld [vmem:[%s4 + $0x180] sm:$0xff]
  %v4028 = vld [vmem:[%s4 + $0x188] sm:$0xff]
  %v4029 = vld [vmem:[%s4 + $0x190] sm:$0xff]
  %v4030 = vld [vmem:[%s4 + $0x198] sm:$0xff]
  %v4031 = vld [vmem:[%s4 + $0x1a0] sm:$0xff]
  %v4032 = vld [vmem:[%s4 + $0x1a8] sm:$0xff]
  %v4033 = vld [vmem:[%s4 + $0x1b0] sm:$0xff]
  %v4034 = vld [vmem:[%s4 + $0x1b8] sm:$0xff]
  %v4035 = vld [vmem:[%s4 + $0x1c0] sm:$0xff]
  %v4036 = vld [vmem:[%s4 + $0x1c8] sm:$0xff]
  %v4037 = vld [vmem:[%s4 + $0x1d0] sm:$0xff]
  %v4038 = vld [vmem:[%s4 + $0x1d8] sm:$0xff]
  %v4039 = vld [vmem:[%s4 + $0x1e0] sm:$0xff]
  %v4040 = vld [vmem:[%s4 + $0x1e8] sm:$0xff]
  %v4041 = vld [vmem:[%s4 + $0x1f0] sm:$0xff]
  %v4042 = vld [vmem:[%s4 + $0x1f8] sm:$0xff]
  %v4043 = vld [vmem:[%s4 + $0x200] sm:$0xff]
  %v4044 = vld [vmem:[%s4 + $0x208] sm:$0xff]
  %v4045 = vld [vmem:[%s4 + $0x210] sm:$0xff]
  %v4046 = vld [vmem:[%s4 + $0x218] sm:$0xff]
  %v4047 = vld [vmem:[%s4 + $0x220] sm:$0xff]
  %v4048 = vld [vmem:[%s4 + $0x228] sm:$0xff]
  %v4049 = vld [vmem:[%s4 + $0x230] sm:$0xff]
  %v4050 = vld [vmem:[%s4 + $0x238] sm:$0xff]
  %v4051 = vld [vmem:[%s4 + $0x240] sm:$0xff]
  %v4052 = vld [vmem:[%s4 + $0x248] sm:$0xff]
  %v4053 = vld [vmem:[%s4 + $0x250] sm:$0xff]
  %v4054 = vld [vmem:[%s4 + $0x258] sm:$0xff]
  %v4055 = vld [vmem:[%s4 + $0x260] sm:$0xff]
  %v4056 = vld [vmem:[%s4 + $0x268] sm:$0xff]
  %v4057 = vld [vmem:[%s4 + $0x270] sm:$0xff]
  %v4058 = vld [vmem:[%s4 + $0x278] sm:$0xff]
  %v4059 = vld [vmem:[%s4 + $0x280] sm:$0xff]
  %v4060 = vld [vmem:[%s4 + $0x288] sm:$0xff]
  %v4061 = vld [vmem:[%s4 + $0x290] sm:$0xff]
  %v4062 = vld [vmem:[%s4 + $0x298] sm:$0xff]
  %v4063 = vld [vmem:[%s4 + $0x2a0] sm:$0xff]
  %v4064 = vld [vmem:[%s4 + $0x2a8] sm:$0xff]
  %v4065 = vld [vmem:[%s4 + $0x2b0] sm:$0xff]
  %v4066 = vld [vmem:[%s4 + $0x2b8] sm:$0xff]
  %v4067 = vld [vmem:[%s4 + $0x2c0] sm:$0xff]
  %v4068 = vld [vmem:[%s4 + $0x2c8] sm:$0xff]
  %v4069 = vld [vmem:[%s4 + $0x2d0] sm:$0xff]
  %v4070 = vld [vmem:[%s4 + $0x2d8] sm:$0xff]
  %v4071 = vld [vmem:[%s4 + $0x2e0] sm:$0xff]
  %v4072 = vld [vmem:[%s4 + $0x2e8] sm:$0xff]
  %v4073 = vld [vmem:[%s4 + $0x2f0] sm:$0xff]
  %v4074 = vld [vmem:[%s4 + $0x2f8] sm:$0xff]
  %v4075 = vld [vmem:[%s5] sm:$0x1]
  %v4077 = vlaneseq
  %v4078 = vshrl.u32 %v4077, 7
  %v4079 = vsub.s32 0, %v4078
  %v4080 = vrot.slane %v4075, %v4079
  %v4084 = vcombine.high %v3977, %v3977
  %v4086 = vunpack.c.l.s4 1983009808
  %v4087 = vunpack.c.0.s8 %v4086
  %v4088 = vlaneseq
  %v4089 = vshrl.u32 %v4088, 7
  %v4090 = vsub.s32 %v4087, %v4089
  %v4091 = vrot.slane %v3977, %v4090
  %v4093 = vunpack.c.l.s4 1983009808
  %v4094 = vunpack.c.0.s8 %v4093
  %v4095 = vlaneseq
  %v4096 = vshrl.u32 %v4095, 7
  %v4097 = vsub.s32 %v4094, %v4096
  %v4098 = vrot.slane %v4084, %v4097
  %v4099 = vcombine.high %v4091, %v4091
  %v4100 = vcombine.high %v4098, %v4098
  %v4102 = vunpack.c.l.s4 1983009808
  %v4103 = vunpack.c.0.s8 %v4102
  %v4104 = vlaneseq
  %v4105 = vshrl.u32 %v4104, 7
  %v4106 = vsub.s32 %v4103, %v4105
  %v4107 = vrot.slane %v3978, %v4106
  %v4108 = vcombine.high %v4107, %v4107
  %4115 = vmatprep.subr.mxu0 0.0
  %4116 = vmatpush1.msra.mxu0 %v3979
  %4117 = vmatprep.subr.mxu0 0.0
  %4118 = vmatpush1.msra.mxu0 %v3980
  %4119 = vmatprep.subr.mxu0 0.0
  %4120 = vmatpush1.msra.mxu0 %v3981
  %4121 = vmatprep.subr.mxu0 0.0
  %4122 = vmatpush1.msra.mxu0 %v3982
  %4123 = vmatprep.subr.mxu0 0.0
  %4124 = vmatpush1.msra.mxu0 %v3983
  %4125 = vmatprep.subr.mxu0 0.0
  %4126 = vmatpush1.msra.mxu0 %v3984
  %4127 = vmatprep.subr.mxu0 0.0
  %4128 = vmatpush1.msra.mxu0 %v3985
  %4129 = vmatprep.subr.mxu0 0.0
  %4130 = vmatpush1.msra.mxu0 %v3986
  %4131 = vmatprep.subr.mxu0 0.0
  %4132 = vmatpush1.msra.mxu0 %v3987
  %4133 = vmatprep.subr.mxu0 0.0
  %4134 = vmatpush1.msra.mxu0 %v3988
  %4135 = vmatprep.subr.mxu0 0.0
  %4136 = vmatpush1.msra.mxu0 %v3989
  %4137 = vmatprep.subr.mxu0 0.0
  %4138 = vmatpush1.msra.mxu0 %v3990
  %4139 = vmatprep.subr.mxu0 0.0
  %4140 = vmatpush1.msra.mxu0 %v3991
  %4141 = vmatprep.subr.mxu0 0.0
  %4142 = vmatpush1.msra.mxu0 %v3992
  %4143 = vmatprep.subr.mxu0 0.0
  %4144 = vmatpush1.msra.mxu0 %v3993
  %4145 = vmatprep.subr.mxu0 0.0
  %4146 = vmatpush1.msra.mxu0 %v3994
  %4147 = vmatprep.subr.mxu0 0.0
  %4148 = vmatpush1.msra.mxu0 %v3995
  %4149 = vmatprep.subr.mxu0 0.0
  %4150 = vmatpush1.msra.mxu0 %v3996
  %4151 = vmatprep.subr.mxu0 0.0
  %4152 = vmatpush1.msra.mxu0 %v3997
  %4153 = vmatprep.subr.mxu0 0.0
  %4154 = vmatpush1.msra.mxu0 %v3998
  %4155 = vmatprep.subr.mxu0 0.0
  %4156 = vmatpush1.msra.mxu0 %v3999
  %4157 = vmatprep.subr.mxu0 0.0
  %4158 = vmatpush1.msra.mxu0 %v4000
  %4159 = vmatprep.subr.mxu0 0.0
  %4160 = vmatpush1.msra.mxu0 %v4001
  %4161 = vmatprep.subr.mxu0 0.0
  %4162 = vmatpush1.msra.mxu0 %v4002
  %4163 = vmatprep.subr.mxu0 0.0
  %4164 = vmatpush1.msra.mxu0 %v4003
  %4165 = vmatprep.subr.mxu0 0.0
  %4166 = vmatpush1.msra.mxu0 %v4004
  %4167 = vmatprep.subr.mxu0 0.0
  %4168 = vmatpush1.msra.mxu0 %v4005
  %4169 = vmatprep.subr.mxu0 0.0
  %4170 = vmatpush1.msra.mxu0 %v4006
  %4171 = vmatprep.subr.mxu0 0.0
  %4172 = vmatpush1.msra.mxu0 %v4007
  %4173 = vmatprep.subr.mxu0 0.0
  %4174 = vmatpush1.msra.mxu0 %v4008
  %4175 = vmatprep.subr.mxu0 0.0
  %4176 = vmatpush1.msra.mxu0 %v4009
  %4177 = vmatprep.subr.mxu0 0.0
  %4178 = vmatpush1.msra.mxu0 %v4010
  %4179 = vmatprep.mubr.f32.mxu0 %v4099
  %4180 = vmatmul.mubr.f32.gmra.mrb[0].mxu0 %v4091
  %v4181 = vpop.f32.mrb[0].mxu0
  %v4182 = vadd.f32 %v4080, %v4181
  %v4183 = vpop.f32.mrb[0].mxu0
  %4184 = vdwg.mxu0
  %4185 = vmatprep.subr.mxu0 0.0
  %4186 = vmatpush1.msra.mxu0 %v4011
  %4187 = vmatprep.subr.mxu0 0.0
  %4188 = vmatpush1.msra.mxu0 %v4012
  %4189 = vmatprep.subr.mxu0 0.0
  %4190 = vmatpush1.msra.mxu0 %v4013
  %4191 = vmatprep.subr.mxu0 0.0
  %4192 = vmatpush1.msra.mxu0 %v4014
  %4193 = vmatprep.subr.mxu0 0.0
  %4194 = vmatpush1.msra.mxu0 %v4015
  %4195 = vmatprep.subr.mxu0 0.0
  %4196 = vmatpush1.msra.mxu0 %v4016
  %4197 = vmatprep.subr.mxu0 0.0
  %4198 = vmatpush1.msra.mxu0 %v4017
  %4199 = vmatprep.subr.mxu0 0.0
  %4200 = vmatpush1.msra.mxu0 %v4018
  %4201 = vmatprep.subr.mxu0 0.0
  %4202 = vmatpush1.msra.mxu0 %v4019
  %4203 = vmatprep.subr.mxu0 0.0
  %4204 = vmatpush1.msra.mxu0 %v4020
  %4205 = vmatprep.subr.mxu0 0.0
  %4206 = vmatpush1.msra.mxu0 %v4021
  %4207 = vmatprep.subr.mxu0 0.0
  %4208 = vmatpush1.msra.mxu0 %v4022
  %4209 = vmatprep.subr.mxu0 0.0
  %4210 = vmatpush1.msra.mxu0 %v4023
  %4211 = vmatprep.subr.mxu0 0.0
  %4212 = vmatpush1.msra.mxu0 %v4024
  %4213 = vmatprep.subr.mxu0 0.0
  %4214 = vmatpush1.msra.mxu0 %v4025
  %4215 = vmatprep.subr.mxu0 0.0
  %4216 = vmatpush1.msra.mxu0 %v4026
  %4217 = vmatprep.subr.mxu0 0.0
  %4218 = vmatpush1.msra.mxu0 %v4027
  %4219 = vmatprep.subr.mxu0 0.0
  %4220 = vmatpush1.msra.mxu0 %v4028
  %4221 = vmatprep.subr.mxu0 0.0
  %4222 = vmatpush1.msra.mxu0 %v4029
  %4223 = vmatprep.subr.mxu0 0.0
  %4224 = vmatpush1.msra.mxu0 %v4030
  %4225 = vmatprep.subr.mxu0 0.0
  %4226 = vmatpush1.msra.mxu0 %v4031
  %4227 = vmatprep.subr.mxu0 0.0
  %4228 = vmatpush1.msra.mxu0 %v4032
  %4229 = vmatprep.subr.mxu0 0.0
  %4230 = vmatpush1.msra.mxu0 %v4033
  %4231 = vmatprep.subr.mxu0 0.0
  %4232 = vmatpush1.msra.mxu0 %v4034
  %4233 = vmatprep.subr.mxu0 0.0
  %4234 = vmatpush1.msra.mxu0 %v4035
  %4235 = vmatprep.subr.mxu0 0.0
  %4236 = vmatpush1.msra.mxu0 %v4036
  %4237 = vmatprep.subr.mxu0 0.0
  %4238 = vmatpush1.msra.mxu0 %v4037
  %4239 = vmatprep.subr.mxu0 0.0
  %4240 = vmatpush1.msra.mxu0 %v4038
  %4241 = vmatprep.subr.mxu0 0.0
  %4242 = vmatpush1.msra.mxu0 %v4039
  %4243 = vmatprep.subr.mxu0 0.0
  %4244 = vmatpush1.msra.mxu0 %v4040
  %4245 = vmatprep.subr.mxu0 0.0
  %4246 = vmatpush1.msra.mxu0 %v4041
  %4247 = vmatprep.subr.mxu0 0.0
  %4248 = vmatpush1.msra.mxu0 %v4042
  %4249 = vmatprep.mubr.f32.mxu0 %v4100
  %4250 = vmatmul.mubr.f32.gmra.mrb[0].mxu0 %v4098
  %v4251 = vpop.f32.mrb[0].mxu0
  %v4252 = vadd.f32 %v4182, %v4251
  %v4253 = vpop.f32.mrb[0].mxu0
  %4254 = vdwg.mxu0
  %4255 = vmatprep.subr.mxu0 0.0
  %4256 = vmatpush1.msra.mxu0 %v4043
  %4257 = vmatprep.subr.mxu0 0.0
  %4258 = vmatpush1.msra.mxu0 %v4044
  %4259 = vmatprep.subr.mxu0 0.0
  %4260 = vmatpush1.msra.mxu0 %v4045
  %4261 = vmatprep.subr.mxu0 0.0
  %4262 = vmatpush1.msra.mxu0 %v4046
  %4263 = vmatprep.subr.mxu0 0.0
  %4264 = vmatpush1.msra.mxu0 %v4047
  %4265 = vmatprep.subr.mxu0 0.0
  %4266 = vmatpush1.msra.mxu0 %v4048
  %4267 = vmatprep.subr.mxu0 0.0
  %4268 = vmatpush1.msra.mxu0 %v4049
  %4269 = vmatprep.subr.mxu0 0.0
  %4270 = vmatpush1.msra.mxu0 %v4050
  %4271 = vmatprep.subr.mxu0 0.0
  %4272 = vmatpush1.msra.mxu0 %v4051
  %4273 = vmatprep.subr.mxu0 0.0
  %4274 = vmatpush1.msra.mxu0 %v4052
  %4275 = vmatprep.subr.mxu0 0.0
  %4276 = vmatpush1.msra.mxu0 %v4053
  %4277 = vmatprep.subr.mxu0 0.0
  %4278 = vmatpush1.msra.mxu0 %v4054
  %4279 = vmatprep.subr.mxu0 0.0
  %4280 = vmatpush1.msra.mxu0 %v4055
  %4281 = vmatprep.subr.mxu0 0.0
  %4282 = vmatpush1.msra.mxu0 %v4056
  %4283 = vmatprep.subr.mxu0 0.0
  %4284 = vmatpush1.msra.mxu0 %v4057
  %4285 = vmatprep.subr.mxu0 0.0
  %4286 = vmatpush1.msra.mxu0 %v4058
  %4287 = vmatprep.subr.mxu0 0.0
  %4288 = vmatpush1.msra.mxu0 %v4059
  %4289 = vmatprep.subr.mxu0 0.0
  %4290 = vmatpush1.msra.mxu0 %v4060
  %4291 = vmatprep.subr.mxu0 0.0
  %4292 = vmatpush1.msra.mxu0 %v4061
  %4293 = vmatprep.subr.mxu0 0.0
  %4294 = vmatpush1.msra.mxu0 %v4062
  %4295 = vmatprep.subr.mxu0 0.0
  %4296 = vmatpush1.msra.mxu0 %v4063
  %4297 = vmatprep.subr.mxu0 0.0
  %4298 = vmatpush1.msra.mxu0 %v4064
  %4299 = vmatprep.subr.mxu0 0.0
  %4300 = vmatpush1.msra.mxu0 %v4065
  %4301 = vmatprep.subr.mxu0 0.0
  %4302 = vmatpush1.msra.mxu0 %v4066
  %4303 = vmatprep.subr.mxu0 0.0
  %4304 = vmatpush1.msra.mxu0 %v4067
  %4305 = vmatprep.subr.mxu0 0.0
  %4306 = vmatpush1.msra.mxu0 %v4068
  %4307 = vmatprep.subr.mxu0 0.0
  %4308 = vmatpush1.msra.mxu0 %v4069
  %4309 = vmatprep.subr.mxu0 0.0
  %4310 = vmatpush1.msra.mxu0 %v4070
  %4311 = vmatprep.subr.mxu0 0.0
  %4312 = vmatpush1.msra.mxu0 %v4071
  %4313 = vmatprep.subr.mxu0 0.0
  %4314 = vmatpush1.msra.mxu0 %v4072
  %4315 = vmatprep.subr.mxu0 0.0
  %4316 = vmatpush1.msra.mxu0 %v4073
  %4317 = vmatprep.subr.mxu0 0.0
  %4318 = vmatpush1.msra.mxu0 %v4074
  %4319 = vmatprep.mubr.f32.mxu0 %v4108
  %4320 = vmatmul.mubr.f32.gmra.mrb[0].mxu0 %v4107
  %v4321 = vpop.f32.mrb[0].mxu0
  %v4322 = vadd.f32 %v4252, %v4321
  %v4323 = vpop.f32.mrb[0].mxu0
  %4324 = vdwg.mxu0
  %vm4325 = vcmask 140288
  %4326 = vst.msk [vmem:[%s6] sm:$0x3] %vm4325, %v4322
  // Predicated region
  $region26: #{lstm_model_forward.1} parent=0 // pred_check
    _
  $region27: #{lstm_model_forward.1} parent=0 // pred_check_branch
    %4328 = sbr.rel (0) target = $region29
  $region28: #{lstm_model_forward.1} parent=0 // pred_region
    _
  $region29: #{lstm_model_forward.1} parent=0 // pred_fallthru
    _
  // Predicated region
  $region30: #{lstm_model_forward.1} parent=0 // pred_check
    _
  $region31: #{lstm_model_forward.1} parent=0 // pred_check_branch
    %4330 = sbr.rel (0) target = $region33
  $region32: #{lstm_model_forward.1} parent=0 // pred_region
    _
  $region33: #{lstm_model_forward.1} parent=0 // pred_fallthru
    _

</llo_original>
